<compile_context>
chip_gen: v6e
topology: v6e:2x2x1
jax: 0.10.0
libtpu: 0.0.40
codegen_flags: <defaults>
</compile_context>

<pallas_src>
import jax
import jax.numpy as jnp
from jax.experimental import pallas as pl
from jax.experimental.pallas import tpu as pltpu


# ---------------------------------------------------------------------------
# Pallas kernel
# ---------------------------------------------------------------------------
def _gru_model1_kernel(x_ref, p_ref, mask0_ref, maskL_ref, out_ref):
    """Fused 2-layer GRU + MC dropout + Linear head in one kernel invocation.

    x_ref    : (T*B, Dp)  time-major flattened input, D zero-padded to Dp=8
    p_ref    : (48, 3H)   packed parameter slab (see gru_model1_forward)
    mask0_ref: (T*B, H)   inverted-dropout mask on layer-0 outputs (all t)
    maskL_ref: (B, H)     product of the two last-timestep dropout masks
    out_ref  : (B, O)
    """
    TB = x_ref.shape[0]
    B, O = out_ref.shape
    G = p_ref.shape[1]                 # 3H
    H = G // 3
    T = TB // B

    def dot(a, b):
        return jnp.dot(a, b, preferred_element_type=jnp.float32)

    # --- static, 8-row-aligned views of the packed parameter slab -----------
    wih0  = p_ref[0:8,   :]            # (Dp, 3H)  rows >= D are zero
    whh0  = p_ref[8:16,  :]            # (H, 3H)
    wih1  = p_ref[16:24, :]            # (H, 3H)
    whh1  = p_ref[24:32, :]            # (H, 3H)
    wpred = p_ref[32:40, :]            # (H, 3H)   cols >= O are zero
    bias  = p_ref[40:48, :]            # rows: bih0, bih1, bhh0, bhh1, bpred, 0s

    # Hoist every bias broadcast out of the unrolled loops (no CSE in JAX).
    bih0_b  = jnp.broadcast_to(bias[0:1, :], (TB, G))
    bih1_b  = jnp.broadcast_to(bias[1:2, :], (B, G))
    bhh0_b  = jnp.broadcast_to(bias[2:3, :], (B, G))
    bhh1_b  = jnp.broadcast_to(bias[3:4, :], (B, G))
    bpred_b = jnp.broadcast_to(bias[4:5, :], (B, G))

    # --- layer-0 input projections: ONE matmul for every (t, gate) ----------
    gi0_all = dot(x_ref[...], wih0) + bih0_b            # (T*B, 3H)
    gi0 = [gi0_all[t * B:(t + 1) * B, :] for t in range(T)]
    mask0 = mask0_ref[...]
    m0 = [mask0[t * B:(t + 1) * B, :] for t in range(T)]

    def cell(h, gi, whh, bhh_b):
        # PyTorch nn.GRU cell.  gi = x_t @ W_ih + b_ih is precomputed; the
        # latency-critical, h-dependent work is ONE fused (B,H)@(H,3H) dot.
        gh = dot(h, whh) + bhh_b
        r = jax.nn.sigmoid(gi[:, 0:H]     + gh[:, 0:H])
        z = jax.nn.sigmoid(gi[:, H:2 * H] + gh[:, H:2 * H])
        n = jnp.tanh(gi[:, 2 * H:G] + r * gh[:, 2 * H:G])
        return n + z * (h - n)             # == (1 - z) * n + z * h

    # --- layer-0 recurrence (fully unrolled, h_0 = 0).  Layer-1 input
    #     projections depend only on their own timestep, so they are issued
    #     here and hide under the serial h-chain. -----------------------------
    h = jnp.zeros((B, H), jnp.float32)
    gi1 = []
    for t in range(T):
        h = cell(h, gi0[t], whh0, bhh0_b)
        s = h * m0[t]                                   # MC dropout (layer-0 out)
        gi1.append(dot(s, wih1) + bih1_b)               # fused, off the h-chain
    h0_final = h

    # --- layer-1 recurrence; initial hidden = final hidden of layer 0 -------
    h = h0_final
    for t in range(T):
        h = cell(h, gi1[t], whh1, bhh1_b)

    # --- remaining MC dropouts (pre-multiplied mask) + Linear head ----------
    dropped = h * maskL_ref[...]
    out_ref[...] = (dot(dropped, wpred) + bpred_b)[:, :O]


# ---------------------------------------------------------------------------
# Wrapper
# ---------------------------------------------------------------------------
def _pack_params(params, H, O):
    """Pack the 10 small parameter tensors into a single (48, 3H) f32 slab."""
    G = 3 * H

    def pad_rows(w, rows):
        return jnp.pad(w, ((0, rows - w.shape[0]), (0, 0)))

    def pad_cols(w, cols):
        return jnp.pad(w, ((0, 0), (0, cols - w.shape[1])))

    wih0 = pad_rows(params["wih0"].astype(jnp.float32), 8)     # (8, 3H)
    whh0 = params["whh0"].astype(jnp.float32)                  # (8, 3H)
    wih1 = params["wih1"].astype(jnp.float32)                  # (8, 3H)
    whh1 = params["whh1"].astype(jnp.float32)                  # (8, 3H)
    wpred = pad_cols(params["wpred"].astype(jnp.float32), G)   # (8, 3H)
    bias = jnp.concatenate(
        [params["bih0"], params["bih1"], params["bhh0"], params["bhh1"],
         pad_cols(params["bpred"], G), jnp.zeros((3, G), jnp.float32)],
        axis=0).astype(jnp.float32)                            # (8, 3H)
    return jnp.concatenate([wih0, whh0, wih1, whh1, wpred, bias], axis=0)


def gru_model1_forward(x_btd, params, masks):
    """GRUModel1 forward (hidden_layers=2) for S MC-dropout samples.

    x_btd : (B, T, D) float32, batch_first (as in the PyTorch module)
    masks : inverted-dropout masks with a leading MC-sample axis S:
        mask0      (S, B, T, H), mask1_last (S, B, H), maskf_last (S, B, H)
    Returns (S, B, O).  The S independent samples are folded into the batch so
    one kernel call amortizes the serial 2*T-cell recurrence over S*B rows.
    """
    B, T, D = x_btd.shape
    H = params["whh0"].shape[0]
    O = params["wpred"].shape[1]
    S = masks["mask0"].shape[0]
    assert H == 8 and D <= 8, "packed layout assumes mid_dim == 8, input_dim <= 8"

    Beff = S * B
    Dp = 8

    x = x_btd.astype(jnp.float32)
    x = jnp.pad(x, ((0, 0), (0, 0), (0, Dp - D)))                   # (B, T, Dp)
    x = jnp.broadcast_to(x[None], (S, B, T, Dp)).reshape(Beff, T, Dp)
    x_tm = jnp.transpose(x, (1, 0, 2)).reshape(T * Beff, Dp)        # time-major

    mask0 = masks["mask0"].astype(jnp.float32).reshape(Beff, T, H)
    mask0_tm = jnp.transpose(mask0, (1, 0, 2)).reshape(T * Beff, H)
    maskL = (masks["mask1_last"] * masks["maskf_last"]).astype(
        jnp.float32).reshape(Beff, H)

    p_slab = _pack_params(params, H, O)                             # (48, 3H)

    vmem = pl.BlockSpec(memory_space=pltpu.MemorySpace.VMEM)
    out = pl.pallas_call(
        _gru_model1_kernel,
        out_shape=jax.ShapeDtypeStruct((Beff, O), jnp.float32),
        in_specs=[vmem, vmem, vmem, vmem],
        out_specs=vmem,
    )(x_tm, p_slab, mask0_tm, maskL)
    return out.reshape(S, B, O)


# ---------------------------------------------------------------------------
# Pure-JAX reference (single MC sample) for correctness checking
# ---------------------------------------------------------------------------
def _reference_forward(x_btd, params, masks_s):
    B, T, _ = x_btd.shape
    H = params["whh0"].shape[0]

    def cell(x_t, h, wih, whh, bih, bhh):
        gi = x_t @ wih + bih
        gh = h @ whh + bhh
        r = jax.nn.sigmoid(gi[:, :H] + gh[:, :H])
        z = jax.nn.sigmoid(gi[:, H:2 * H] + gh[:, H:2 * H])
        n = jnp.tanh(gi[:, 2 * H:] + r * gh[:, 2 * H:])
        return (1.0 - z) * n + z * h

    h0 = jnp.zeros((B, H), jnp.float32)
    outs0 = []
    for t in range(T):
        h0 = cell(x_btd[:, t, :], h0, params["wih0"], params["whh0"],
                  params["bih0"], params["bhh0"])
        outs0.append(h0 * masks_s["mask0"][:, t, :])
    h1 = h0
    for t in range(T):
        h1 = cell(outs0[t], h1, params["wih1"], params["whh1"],
                  params["bih1"], params["bhh1"])
    dropped = h1 * masks_s["mask1_last"] * masks_s["maskf_last"]
    return dropped @ params["wpred"] + params["bpred"]


def _init_params_and_masks(key, S, B, T, D, H, O, mc_p):
    ks = jax.random.split(key, 13)
    k_gru = 1.0 / jnp.sqrt(H)

    def u(k, shape, bound):
        return jax.random.uniform(k, shape, jnp.float32, -bound, bound)

    # PyTorch shapes: weight_ih (3H, in), weight_hh (3H, H); stored transposed.
    params = {
        "wih0": u(ks[0], (3 * H, D), k_gru).T,
        "whh0": u(ks[1], (3 * H, H), k_gru).T,
        "bih0": u(ks[2], (3 * H,), k_gru).reshape(1, 3 * H),
        "bhh0": u(ks[3], (3 * H,), k_gru).reshape(1, 3 * H),
        "wih1": u(ks[4], (3 * H, H), k_gru).T,
        "whh1": u(ks[5], (3 * H, H), k_gru).T,
        "bih1": u(ks[6], (3 * H,), k_gru).reshape(1, 3 * H),
        "bhh1": u(ks[7], (3 * H,), k_gru).reshape(1, 3 * H),
        "wpred": u(ks[8], (O, H), k_gru).T,
        "bpred": u(ks[9], (O,), k_gru).reshape(1, O),
    }
    params = {k: jnp.asarray(v, jnp.float32) for k, v in params.items()}

    keep = 1.0 - mc_p
    bern = lambda k, shape: (jax.random.bernoulli(k, keep, shape)
                             .astype(jnp.float32) / keep)
    masks = {
        "mask0": bern(ks[10], (S, B, T, H)),        # dropout after GRU layer 0
        "mask1_last": bern(ks[11], (S, B, H)),      # dropout after layer 1, last t
        "maskf_last": bern(ks[12], (S, B, H)),      # final MC dropout, last t
    }
    return params, masks


if __name__ == "__main__":
    # GRUModel1(input_dim=4, output_dim=2, sequence_dim=8, mid_dim=8,
    #           hidden_layers=2, bidirectional=False, MCDropout=0.5)
    # 4 MC-dropout samples folded into the batch (Beff = 8).
    S, B, T, D, H, O = 4, 2, 8, 4, 8, 2
    MC_P = 0.5

    root = jax.random.PRNGKey(0)
    k_x, k_p = jax.random.split(root)
    x = jax.random.normal(k_x, (B, T, D), jnp.float32)
    params, masks = _init_params_and_masks(k_p, S, B, T, D, H, O, MC_P)

    out = gru_model1_forward(x, params, masks)          # (S, B, O)
    out = jax.block_until_ready(out)

    for s in range(S):
        masks_s = {k: v[s] for k, v in masks.items()}
        ref = _reference_forward(x, params, masks_s)
        if not jnp.allclose(out[s], ref, atol=1e-3, rtol=1e-3):
            raise AssertionError(
                f"Pallas kernel mismatch at sample {s}:\n{out[s]}\nvs ref\n{ref}")

    print("KERNEL_OK")
</pallas_src>

<mosaic_0001>
module attributes {stable_mosaic.version = 11 : i64} {
  func.func @_gru_model1_kernel(%arg0: memref<64x8xf32, #tpu.memory_space<vmem>>, %arg1: memref<48x24xf32, #tpu.memory_space<vmem>>, %arg2: memref<64x8xf32, #tpu.memory_space<vmem>>, %arg3: memref<8x8xf32, #tpu.memory_space<vmem>>, %arg4: memref<8x2xf32, #tpu.memory_space<vmem>>) attributes {dimension_semantics = [], scalar_prefetch = 0 : i64, scratch_operands = 0 : i64, tpu.core_type = #tpu.core_type<tc>} {
    %c0 = arith.constant 0 : index
    %c0_0 = arith.constant 0 : index
    %0 = vector.load %arg1[%c0, %c0_0] : memref<48x24xf32, #tpu.memory_space<vmem>>, vector<8x24xf32>
    %c8 = arith.constant 8 : index
    %c0_1 = arith.constant 0 : index
    %1 = vector.load %arg1[%c8, %c0_1] : memref<48x24xf32, #tpu.memory_space<vmem>>, vector<8x24xf32>
    %c16 = arith.constant 16 : index
    %c0_2 = arith.constant 0 : index
    %2 = vector.load %arg1[%c16, %c0_2] : memref<48x24xf32, #tpu.memory_space<vmem>>, vector<8x24xf32>
    %c24 = arith.constant 24 : index
    %c0_3 = arith.constant 0 : index
    %3 = vector.load %arg1[%c24, %c0_3] : memref<48x24xf32, #tpu.memory_space<vmem>>, vector<8x24xf32>
    %c32 = arith.constant 32 : index
    %c0_4 = arith.constant 0 : index
    %4 = vector.load %arg1[%c32, %c0_4] : memref<48x24xf32, #tpu.memory_space<vmem>>, vector<8x24xf32>
    %c40 = arith.constant 40 : index
    %c0_5 = arith.constant 0 : index
    %5 = vector.load %arg1[%c40, %c0_5] : memref<48x24xf32, #tpu.memory_space<vmem>>, vector<8x24xf32>
    %6 = vector.extract_strided_slice %5 {offsets = [0, 0], sizes = [1, 24], strides = [1, 1]} : vector<8x24xf32> to vector<1x24xf32>
    %7 = vector.shape_cast %6 : vector<1x24xf32> to vector<1x24xf32>
    %8 = vector.broadcast %7 : vector<1x24xf32> to vector<64x24xf32>
    %9 = vector.extract_strided_slice %5 {offsets = [1, 0], sizes = [1, 24], strides = [1, 1]} : vector<8x24xf32> to vector<1x24xf32>
    %10 = vector.shape_cast %9 : vector<1x24xf32> to vector<1x24xf32>
    %11 = vector.broadcast %10 : vector<1x24xf32> to vector<8x24xf32>
    %12 = vector.extract_strided_slice %5 {offsets = [2, 0], sizes = [1, 24], strides = [1, 1]} : vector<8x24xf32> to vector<1x24xf32>
    %13 = vector.shape_cast %12 : vector<1x24xf32> to vector<1x24xf32>
    %14 = vector.broadcast %13 : vector<1x24xf32> to vector<8x24xf32>
    %15 = vector.extract_strided_slice %5 {offsets = [3, 0], sizes = [1, 24], strides = [1, 1]} : vector<8x24xf32> to vector<1x24xf32>
    %16 = vector.shape_cast %15 : vector<1x24xf32> to vector<1x24xf32>
    %17 = vector.broadcast %16 : vector<1x24xf32> to vector<8x24xf32>
    %18 = vector.extract_strided_slice %5 {offsets = [4, 0], sizes = [1, 24], strides = [1, 1]} : vector<8x24xf32> to vector<1x24xf32>
    %19 = vector.shape_cast %18 : vector<1x24xf32> to vector<1x24xf32>
    %20 = vector.broadcast %19 : vector<1x24xf32> to vector<8x24xf32>
    %c0_6 = arith.constant 0 : index
    %c0_7 = arith.constant 0 : index
    %21 = vector.load %arg0[%c0_6, %c0_7] : memref<64x8xf32, #tpu.memory_space<vmem>>, vector<64x8xf32>
    %cst = arith.constant dense<0.000000e+00> : vector<64x24xf32>
    %22 = tpu.matmul %21, %0, %cst {dimension_numbers = #tpu.dot_dimension_numbers<[1], [0], [0], [1], [0, 0, 1, 1], [], []>} : vector<64x8xf32>, vector<8x24xf32>, vector<64x24xf32> -> vector<64x24xf32>
    %23 = arith.addf %22, %8 : vector<64x24xf32>
    %24 = vector.extract_strided_slice %23 {offsets = [0, 0], sizes = [8, 24], strides = [1, 1]} : vector<64x24xf32> to vector<8x24xf32>
    %25 = vector.extract_strided_slice %23 {offsets = [8, 0], sizes = [8, 24], strides = [1, 1]} : vector<64x24xf32> to vector<8x24xf32>
    %26 = vector.extract_strided_slice %23 {offsets = [16, 0], sizes = [8, 24], strides = [1, 1]} : vector<64x24xf32> to vector<8x24xf32>
    %27 = vector.extract_strided_slice %23 {offsets = [24, 0], sizes = [8, 24], strides = [1, 1]} : vector<64x24xf32> to vector<8x24xf32>
    %28 = vector.extract_strided_slice %23 {offsets = [32, 0], sizes = [8, 24], strides = [1, 1]} : vector<64x24xf32> to vector<8x24xf32>
    %29 = vector.extract_strided_slice %23 {offsets = [40, 0], sizes = [8, 24], strides = [1, 1]} : vector<64x24xf32> to vector<8x24xf32>
    %30 = vector.extract_strided_slice %23 {offsets = [48, 0], sizes = [8, 24], strides = [1, 1]} : vector<64x24xf32> to vector<8x24xf32>
    %31 = vector.extract_strided_slice %23 {offsets = [56, 0], sizes = [8, 24], strides = [1, 1]} : vector<64x24xf32> to vector<8x24xf32>
    %c0_8 = arith.constant 0 : index
    %c0_9 = arith.constant 0 : index
    %32 = vector.load %arg2[%c0_8, %c0_9] : memref<64x8xf32, #tpu.memory_space<vmem>>, vector<64x8xf32>
    %33 = vector.extract_strided_slice %32 {offsets = [0, 0], sizes = [8, 8], strides = [1, 1]} : vector<64x8xf32> to vector<8x8xf32>
    %34 = vector.extract_strided_slice %32 {offsets = [8, 0], sizes = [8, 8], strides = [1, 1]} : vector<64x8xf32> to vector<8x8xf32>
    %35 = vector.extract_strided_slice %32 {offsets = [16, 0], sizes = [8, 8], strides = [1, 1]} : vector<64x8xf32> to vector<8x8xf32>
    %36 = vector.extract_strided_slice %32 {offsets = [24, 0], sizes = [8, 8], strides = [1, 1]} : vector<64x8xf32> to vector<8x8xf32>
    %37 = vector.extract_strided_slice %32 {offsets = [32, 0], sizes = [8, 8], strides = [1, 1]} : vector<64x8xf32> to vector<8x8xf32>
    %38 = vector.extract_strided_slice %32 {offsets = [40, 0], sizes = [8, 8], strides = [1, 1]} : vector<64x8xf32> to vector<8x8xf32>
    %39 = vector.extract_strided_slice %32 {offsets = [48, 0], sizes = [8, 8], strides = [1, 1]} : vector<64x8xf32> to vector<8x8xf32>
    %40 = vector.extract_strided_slice %32 {offsets = [56, 0], sizes = [8, 8], strides = [1, 1]} : vector<64x8xf32> to vector<8x8xf32>
    %cst_10 = arith.constant 0.000000e+00 : f32
    %41 = vector.broadcast %cst_10 : f32 to vector<8x8xf32>
    %cst_11 = arith.constant dense<0.000000e+00> : vector<8x24xf32>
    %42 = tpu.matmul %41, %1, %cst_11 {dimension_numbers = #tpu.dot_dimension_numbers<[1], [0], [0], [1], [0, 0, 1, 1], [], []>} : vector<8x8xf32>, vector<8x24xf32>, vector<8x24xf32> -> vector<8x24xf32>
    %43 = arith.addf %42, %14 : vector<8x24xf32>
    %44 = vector.extract_strided_slice %24 {offsets = [0, 0], sizes = [8, 8], strides = [1, 1]} : vector<8x24xf32> to vector<8x8xf32>
    %45 = vector.extract_strided_slice %43 {offsets = [0, 0], sizes = [8, 8], strides = [1, 1]} : vector<8x24xf32> to vector<8x8xf32>
    %46 = arith.addf %44, %45 : vector<8x8xf32>
    %47 = arith.negf %46 : vector<8x8xf32>
    %48 = math.exp %47 : vector<8x8xf32>
    %cst_12 = arith.constant 1.000000e+00 : f32
    %49 = vector.broadcast %cst_12 : f32 to vector<8x8xf32>
    %50 = arith.addf %49, %48 : vector<8x8xf32>
    %51 = arith.divf %49, %50 : vector<8x8xf32>
    %52 = vector.extract_strided_slice %24 {offsets = [0, 8], sizes = [8, 8], strides = [1, 1]} : vector<8x24xf32> to vector<8x8xf32>
    %53 = vector.extract_strided_slice %43 {offsets = [0, 8], sizes = [8, 8], strides = [1, 1]} : vector<8x24xf32> to vector<8x8xf32>
    %54 = arith.addf %52, %53 : vector<8x8xf32>
    %55 = arith.negf %54 : vector<8x8xf32>
    %56 = math.exp %55 : vector<8x8xf32>
    %cst_13 = arith.constant 1.000000e+00 : f32
    %57 = vector.broadcast %cst_13 : f32 to vector<8x8xf32>
    %58 = arith.addf %57, %56 : vector<8x8xf32>
    %59 = arith.divf %57, %58 : vector<8x8xf32>
    %60 = vector.extract_strided_slice %24 {offsets = [0, 16], sizes = [8, 8], strides = [1, 1]} : vector<8x24xf32> to vector<8x8xf32>
    %61 = vector.extract_strided_slice %43 {offsets = [0, 16], sizes = [8, 8], strides = [1, 1]} : vector<8x24xf32> to vector<8x8xf32>
    %62 = arith.mulf %51, %61 : vector<8x8xf32>
    %63 = arith.addf %60, %62 : vector<8x8xf32>
    %64 = math.tanh %63 : vector<8x8xf32>
    %65 = arith.subf %41, %64 : vector<8x8xf32>
    %66 = arith.mulf %59, %65 : vector<8x8xf32>
    %67 = arith.addf %64, %66 : vector<8x8xf32>
    %68 = arith.mulf %67, %33 : vector<8x8xf32>
    %cst_14 = arith.constant dense<0.000000e+00> : vector<8x24xf32>
    %69 = tpu.matmul %68, %2, %cst_14 {dimension_numbers = #tpu.dot_dimension_numbers<[1], [0], [0], [1], [0, 0, 1, 1], [], []>} : vector<8x8xf32>, vector<8x24xf32>, vector<8x24xf32> -> vector<8x24xf32>
    %70 = arith.addf %69, %11 : vector<8x24xf32>
    %cst_15 = arith.constant dense<0.000000e+00> : vector<8x24xf32>
    %71 = tpu.matmul %67, %1, %cst_15 {dimension_numbers = #tpu.dot_dimension_numbers<[1], [0], [0], [1], [0, 0, 1, 1], [], []>} : vector<8x8xf32>, vector<8x24xf32>, vector<8x24xf32> -> vector<8x24xf32>
    %72 = arith.addf %71, %14 : vector<8x24xf32>
    %73 = vector.extract_strided_slice %25 {offsets = [0, 0], sizes = [8, 8], strides = [1, 1]} : vector<8x24xf32> to vector<8x8xf32>
    %74 = vector.extract_strided_slice %72 {offsets = [0, 0], sizes = [8, 8], strides = [1, 1]} : vector<8x24xf32> to vector<8x8xf32>
    %75 = arith.addf %73, %74 : vector<8x8xf32>
    %76 = arith.negf %75 : vector<8x8xf32>
    %77 = math.exp %76 : vector<8x8xf32>
    %cst_16 = arith.constant 1.000000e+00 : f32
    %78 = vector.broadcast %cst_16 : f32 to vector<8x8xf32>
    %79 = arith.addf %78, %77 : vector<8x8xf32>
    %80 = arith.divf %78, %79 : vector<8x8xf32>
    %81 = vector.extract_strided_slice %25 {offsets = [0, 8], sizes = [8, 8], strides = [1, 1]} : vector<8x24xf32> to vector<8x8xf32>
    %82 = vector.extract_strided_slice %72 {offsets = [0, 8], sizes = [8, 8], strides = [1, 1]} : vector<8x24xf32> to vector<8x8xf32>
    %83 = arith.addf %81, %82 : vector<8x8xf32>
    %84 = arith.negf %83 : vector<8x8xf32>
    %85 = math.exp %84 : vector<8x8xf32>
    %cst_17 = arith.constant 1.000000e+00 : f32
    %86 = vector.broadcast %cst_17 : f32 to vector<8x8xf32>
    %87 = arith.addf %86, %85 : vector<8x8xf32>
    %88 = arith.divf %86, %87 : vector<8x8xf32>
    %89 = vector.extract_strided_slice %25 {offsets = [0, 16], sizes = [8, 8], strides = [1, 1]} : vector<8x24xf32> to vector<8x8xf32>
    %90 = vector.extract_strided_slice %72 {offsets = [0, 16], sizes = [8, 8], strides = [1, 1]} : vector<8x24xf32> to vector<8x8xf32>
    %91 = arith.mulf %80, %90 : vector<8x8xf32>
    %92 = arith.addf %89, %91 : vector<8x8xf32>
    %93 = math.tanh %92 : vector<8x8xf32>
    %94 = arith.subf %67, %93 : vector<8x8xf32>
    %95 = arith.mulf %88, %94 : vector<8x8xf32>
    %96 = arith.addf %93, %95 : vector<8x8xf32>
    %97 = arith.mulf %96, %34 : vector<8x8xf32>
    %cst_18 = arith.constant dense<0.000000e+00> : vector<8x24xf32>
    %98 = tpu.matmul %97, %2, %cst_18 {dimension_numbers = #tpu.dot_dimension_numbers<[1], [0], [0], [1], [0, 0, 1, 1], [], []>} : vector<8x8xf32>, vector<8x24xf32>, vector<8x24xf32> -> vector<8x24xf32>
    %99 = arith.addf %98, %11 : vector<8x24xf32>
    %cst_19 = arith.constant dense<0.000000e+00> : vector<8x24xf32>
    %100 = tpu.matmul %96, %1, %cst_19 {dimension_numbers = #tpu.dot_dimension_numbers<[1], [0], [0], [1], [0, 0, 1, 1], [], []>} : vector<8x8xf32>, vector<8x24xf32>, vector<8x24xf32> -> vector<8x24xf32>
    %101 = arith.addf %100, %14 : vector<8x24xf32>
    %102 = vector.extract_strided_slice %26 {offsets = [0, 0], sizes = [8, 8], strides = [1, 1]} : vector<8x24xf32> to vector<8x8xf32>
    %103 = vector.extract_strided_slice %101 {offsets = [0, 0], sizes = [8, 8], strides = [1, 1]} : vector<8x24xf32> to vector<8x8xf32>
    %104 = arith.addf %102, %103 : vector<8x8xf32>
    %105 = arith.negf %104 : vector<8x8xf32>
    %106 = math.exp %105 : vector<8x8xf32>
    %cst_20 = arith.constant 1.000000e+00 : f32
    %107 = vector.broadcast %cst_20 : f32 to vector<8x8xf32>
    %108 = arith.addf %107, %106 : vector<8x8xf32>
    %109 = arith.divf %107, %108 : vector<8x8xf32>
    %110 = vector.extract_strided_slice %26 {offsets = [0, 8], sizes = [8, 8], strides = [1, 1]} : vector<8x24xf32> to vector<8x8xf32>
    %111 = vector.extract_strided_slice %101 {offsets = [0, 8], sizes = [8, 8], strides = [1, 1]} : vector<8x24xf32> to vector<8x8xf32>
    %112 = arith.addf %110, %111 : vector<8x8xf32>
    %113 = arith.negf %112 : vector<8x8xf32>
    %114 = math.exp %113 : vector<8x8xf32>
    %cst_21 = arith.constant 1.000000e+00 : f32
    %115 = vector.broadcast %cst_21 : f32 to vector<8x8xf32>
    %116 = arith.addf %115, %114 : vector<8x8xf32>
    %117 = arith.divf %115, %116 : vector<8x8xf32>
    %118 = vector.extract_strided_slice %26 {offsets = [0, 16], sizes = [8, 8], strides = [1, 1]} : vector<8x24xf32> to vector<8x8xf32>
    %119 = vector.extract_strided_slice %101 {offsets = [0, 16], sizes = [8, 8], strides = [1, 1]} : vector<8x24xf32> to vector<8x8xf32>
    %120 = arith.mulf %109, %119 : vector<8x8xf32>
    %121 = arith.addf %118, %120 : vector<8x8xf32>
    %122 = math.tanh %121 : vector<8x8xf32>
    %123 = arith.subf %96, %122 : vector<8x8xf32>
    %124 = arith.mulf %117, %123 : vector<8x8xf32>
    %125 = arith.addf %122, %124 : vector<8x8xf32>
    %126 = arith.mulf %125, %35 : vector<8x8xf32>
    %cst_22 = arith.constant dense<0.000000e+00> : vector<8x24xf32>
    %127 = tpu.matmul %126, %2, %cst_22 {dimension_numbers = #tpu.dot_dimension_numbers<[1], [0], [0], [1], [0, 0, 1, 1], [], []>} : vector<8x8xf32>, vector<8x24xf32>, vector<8x24xf32> -> vector<8x24xf32>
    %128 = arith.addf %127, %11 : vector<8x24xf32>
    %cst_23 = arith.constant dense<0.000000e+00> : vector<8x24xf32>
    %129 = tpu.matmul %125, %1, %cst_23 {dimension_numbers = #tpu.dot_dimension_numbers<[1], [0], [0], [1], [0, 0, 1, 1], [], []>} : vector<8x8xf32>, vector<8x24xf32>, vector<8x24xf32> -> vector<8x24xf32>
    %130 = arith.addf %129, %14 : vector<8x24xf32>
    %131 = vector.extract_strided_slice %27 {offsets = [0, 0], sizes = [8, 8], strides = [1, 1]} : vector<8x24xf32> to vector<8x8xf32>
    %132 = vector.extract_strided_slice %130 {offsets = [0, 0], sizes = [8, 8], strides = [1, 1]} : vector<8x24xf32> to vector<8x8xf32>
    %133 = arith.addf %131, %132 : vector<8x8xf32>
    %134 = arith.negf %133 : vector<8x8xf32>
    %135 = math.exp %134 : vector<8x8xf32>
    %cst_24 = arith.constant 1.000000e+00 : f32
    %136 = vector.broadcast %cst_24 : f32 to vector<8x8xf32>
    %137 = arith.addf %136, %135 : vector<8x8xf32>
    %138 = arith.divf %136, %137 : vector<8x8xf32>
    %139 = vector.extract_strided_slice %27 {offsets = [0, 8], sizes = [8, 8], strides = [1, 1]} : vector<8x24xf32> to vector<8x8xf32>
    %140 = vector.extract_strided_slice %130 {offsets = [0, 8], sizes = [8, 8], strides = [1, 1]} : vector<8x24xf32> to vector<8x8xf32>
    %141 = arith.addf %139, %140 : vector<8x8xf32>
    %142 = arith.negf %141 : vector<8x8xf32>
    %143 = math.exp %142 : vector<8x8xf32>
    %cst_25 = arith.constant 1.000000e+00 : f32
    %144 = vector.broadcast %cst_25 : f32 to vector<8x8xf32>
    %145 = arith.addf %144, %143 : vector<8x8xf32>
    %146 = arith.divf %144, %145 : vector<8x8xf32>
    %147 = vector.extract_strided_slice %27 {offsets = [0, 16], sizes = [8, 8], strides = [1, 1]} : vector<8x24xf32> to vector<8x8xf32>
    %148 = vector.extract_strided_slice %130 {offsets = [0, 16], sizes = [8, 8], strides = [1, 1]} : vector<8x24xf32> to vector<8x8xf32>
    %149 = arith.mulf %138, %148 : vector<8x8xf32>
    %150 = arith.addf %147, %149 : vector<8x8xf32>
    %151 = math.tanh %150 : vector<8x8xf32>
    %152 = arith.subf %125, %151 : vector<8x8xf32>
    %153 = arith.mulf %146, %152 : vector<8x8xf32>
    %154 = arith.addf %151, %153 : vector<8x8xf32>
    %155 = arith.mulf %154, %36 : vector<8x8xf32>
    %cst_26 = arith.constant dense<0.000000e+00> : vector<8x24xf32>
    %156 = tpu.matmul %155, %2, %cst_26 {dimension_numbers = #tpu.dot_dimension_numbers<[1], [0], [0], [1], [0, 0, 1, 1], [], []>} : vector<8x8xf32>, vector<8x24xf32>, vector<8x24xf32> -> vector<8x24xf32>
    %157 = arith.addf %156, %11 : vector<8x24xf32>
    %cst_27 = arith.constant dense<0.000000e+00> : vector<8x24xf32>
    %158 = tpu.matmul %154, %1, %cst_27 {dimension_numbers = #tpu.dot_dimension_numbers<[1], [0], [0], [1], [0, 0, 1, 1], [], []>} : vector<8x8xf32>, vector<8x24xf32>, vector<8x24xf32> -> vector<8x24xf32>
    %159 = arith.addf %158, %14 : vector<8x24xf32>
    %160 = vector.extract_strided_slice %28 {offsets = [0, 0], sizes = [8, 8], strides = [1, 1]} : vector<8x24xf32> to vector<8x8xf32>
    %161 = vector.extract_strided_slice %159 {offsets = [0, 0], sizes = [8, 8], strides = [1, 1]} : vector<8x24xf32> to vector<8x8xf32>
    %162 = arith.addf %160, %161 : vector<8x8xf32>
    %163 = arith.negf %162 : vector<8x8xf32>
    %164 = math.exp %163 : vector<8x8xf32>
    %cst_28 = arith.constant 1.000000e+00 : f32
    %165 = vector.broadcast %cst_28 : f32 to vector<8x8xf32>
    %166 = arith.addf %165, %164 : vector<8x8xf32>
    %167 = arith.divf %165, %166 : vector<8x8xf32>
    %168 = vector.extract_strided_slice %28 {offsets = [0, 8], sizes = [8, 8], strides = [1, 1]} : vector<8x24xf32> to vector<8x8xf32>
    %169 = vector.extract_strided_slice %159 {offsets = [0, 8], sizes = [8, 8], strides = [1, 1]} : vector<8x24xf32> to vector<8x8xf32>
    %170 = arith.addf %168, %169 : vector<8x8xf32>
    %171 = arith.negf %170 : vector<8x8xf32>
    %172 = math.exp %171 : vector<8x8xf32>
    %cst_29 = arith.constant 1.000000e+00 : f32
    %173 = vector.broadcast %cst_29 : f32 to vector<8x8xf32>
    %174 = arith.addf %173, %172 : vector<8x8xf32>
    %175 = arith.divf %173, %174 : vector<8x8xf32>
    %176 = vector.extract_strided_slice %28 {offsets = [0, 16], sizes = [8, 8], strides = [1, 1]} : vector<8x24xf32> to vector<8x8xf32>
    %177 = vector.extract_strided_slice %159 {offsets = [0, 16], sizes = [8, 8], strides = [1, 1]} : vector<8x24xf32> to vector<8x8xf32>
    %178 = arith.mulf %167, %177 : vector<8x8xf32>
    %179 = arith.addf %176, %178 : vector<8x8xf32>
    %180 = math.tanh %179 : vector<8x8xf32>
    %181 = arith.subf %154, %180 : vector<8x8xf32>
    %182 = arith.mulf %175, %181 : vector<8x8xf32>
    %183 = arith.addf %180, %182 : vector<8x8xf32>
    %184 = arith.mulf %183, %37 : vector<8x8xf32>
    %cst_30 = arith.constant dense<0.000000e+00> : vector<8x24xf32>
    %185 = tpu.matmul %184, %2, %cst_30 {dimension_numbers = #tpu.dot_dimension_numbers<[1], [0], [0], [1], [0, 0, 1, 1], [], []>} : vector<8x8xf32>, vector<8x24xf32>, vector<8x24xf32> -> vector<8x24xf32>
    %186 = arith.addf %185, %11 : vector<8x24xf32>
    %cst_31 = arith.constant dense<0.000000e+00> : vector<8x24xf32>
    %187 = tpu.matmul %183, %1, %cst_31 {dimension_numbers = #tpu.dot_dimension_numbers<[1], [0], [0], [1], [0, 0, 1, 1], [], []>} : vector<8x8xf32>, vector<8x24xf32>, vector<8x24xf32> -> vector<8x24xf32>
    %188 = arith.addf %187, %14 : vector<8x24xf32>
    %189 = vector.extract_strided_slice %29 {offsets = [0, 0], sizes = [8, 8], strides = [1, 1]} : vector<8x24xf32> to vector<8x8xf32>
    %190 = vector.extract_strided_slice %188 {offsets = [0, 0], sizes = [8, 8], strides = [1, 1]} : vector<8x24xf32> to vector<8x8xf32>
    %191 = arith.addf %189, %190 : vector<8x8xf32>
    %192 = arith.negf %191 : vector<8x8xf32>
    %193 = math.exp %192 : vector<8x8xf32>
    %cst_32 = arith.constant 1.000000e+00 : f32
    %194 = vector.broadcast %cst_32 : f32 to vector<8x8xf32>
    %195 = arith.addf %194, %193 : vector<8x8xf32>
    %196 = arith.divf %194, %195 : vector<8x8xf32>
    %197 = vector.extract_strided_slice %29 {offsets = [0, 8], sizes = [8, 8], strides = [1, 1]} : vector<8x24xf32> to vector<8x8xf32>
    %198 = vector.extract_strided_slice %188 {offsets = [0, 8], sizes = [8, 8], strides = [1, 1]} : vector<8x24xf32> to vector<8x8xf32>
    %199 = arith.addf %197, %198 : vector<8x8xf32>
    %200 = arith.negf %199 : vector<8x8xf32>
    %201 = math.exp %200 : vector<8x8xf32>
    %cst_33 = arith.constant 1.000000e+00 : f32
    %202 = vector.broadcast %cst_33 : f32 to vector<8x8xf32>
    %203 = arith.addf %202, %201 : vector<8x8xf32>
    %204 = arith.divf %202, %203 : vector<8x8xf32>
    %205 = vector.extract_strided_slice %29 {offsets = [0, 16], sizes = [8, 8], strides = [1, 1]} : vector<8x24xf32> to vector<8x8xf32>
    %206 = vector.extract_strided_slice %188 {offsets = [0, 16], sizes = [8, 8], strides = [1, 1]} : vector<8x24xf32> to vector<8x8xf32>
    %207 = arith.mulf %196, %206 : vector<8x8xf32>
    %208 = arith.addf %205, %207 : vector<8x8xf32>
    %209 = math.tanh %208 : vector<8x8xf32>
    %210 = arith.subf %183, %209 : vector<8x8xf32>
    %211 = arith.mulf %204, %210 : vector<8x8xf32>
    %212 = arith.addf %209, %211 : vector<8x8xf32>
    %213 = arith.mulf %212, %38 : vector<8x8xf32>
    %cst_34 = arith.constant dense<0.000000e+00> : vector<8x24xf32>
    %214 = tpu.matmul %213, %2, %cst_34 {dimension_numbers = #tpu.dot_dimension_numbers<[1], [0], [0], [1], [0, 0, 1, 1], [], []>} : vector<8x8xf32>, vector<8x24xf32>, vector<8x24xf32> -> vector<8x24xf32>
    %215 = arith.addf %214, %11 : vector<8x24xf32>
    %cst_35 = arith.constant dense<0.000000e+00> : vector<8x24xf32>
    %216 = tpu.matmul %212, %1, %cst_35 {dimension_numbers = #tpu.dot_dimension_numbers<[1], [0], [0], [1], [0, 0, 1, 1], [], []>} : vector<8x8xf32>, vector<8x24xf32>, vector<8x24xf32> -> vector<8x24xf32>
    %217 = arith.addf %216, %14 : vector<8x24xf32>
    %218 = vector.extract_strided_slice %30 {offsets = [0, 0], sizes = [8, 8], strides = [1, 1]} : vector<8x24xf32> to vector<8x8xf32>
    %219 = vector.extract_strided_slice %217 {offsets = [0, 0], sizes = [8, 8], strides = [1, 1]} : vector<8x24xf32> to vector<8x8xf32>
    %220 = arith.addf %218, %219 : vector<8x8xf32>
    %221 = arith.negf %220 : vector<8x8xf32>
    %222 = math.exp %221 : vector<8x8xf32>
    %cst_36 = arith.constant 1.000000e+00 : f32
    %223 = vector.broadcast %cst_36 : f32 to vector<8x8xf32>
    %224 = arith.addf %223, %222 : vector<8x8xf32>
    %225 = arith.divf %223, %224 : vector<8x8xf32>
    %226 = vector.extract_strided_slice %30 {offsets = [0, 8], sizes = [8, 8], strides = [1, 1]} : vector<8x24xf32> to vector<8x8xf32>
    %227 = vector.extract_strided_slice %217 {offsets = [0, 8], sizes = [8, 8], strides = [1, 1]} : vector<8x24xf32> to vector<8x8xf32>
    %228 = arith.addf %226, %227 : vector<8x8xf32>
    %229 = arith.negf %228 : vector<8x8xf32>
    %230 = math.exp %229 : vector<8x8xf32>
    %cst_37 = arith.constant 1.000000e+00 : f32
    %231 = vector.broadcast %cst_37 : f32 to vector<8x8xf32>
    %232 = arith.addf %231, %230 : vector<8x8xf32>
    %233 = arith.divf %231, %232 : vector<8x8xf32>
    %234 = vector.extract_strided_slice %30 {offsets = [0, 16], sizes = [8, 8], strides = [1, 1]} : vector<8x24xf32> to vector<8x8xf32>
    %235 = vector.extract_strided_slice %217 {offsets = [0, 16], sizes = [8, 8], strides = [1, 1]} : vector<8x24xf32> to vector<8x8xf32>
    %236 = arith.mulf %225, %235 : vector<8x8xf32>
    %237 = arith.addf %234, %236 : vector<8x8xf32>
    %238 = math.tanh %237 : vector<8x8xf32>
    %239 = arith.subf %212, %238 : vector<8x8xf32>
    %240 = arith.mulf %233, %239 : vector<8x8xf32>
    %241 = arith.addf %238, %240 : vector<8x8xf32>
    %242 = arith.mulf %241, %39 : vector<8x8xf32>
    %cst_38 = arith.constant dense<0.000000e+00> : vector<8x24xf32>
    %243 = tpu.matmul %242, %2, %cst_38 {dimension_numbers = #tpu.dot_dimension_numbers<[1], [0], [0], [1], [0, 0, 1, 1], [], []>} : vector<8x8xf32>, vector<8x24xf32>, vector<8x24xf32> -> vector<8x24xf32>
    %244 = arith.addf %243, %11 : vector<8x24xf32>
    %cst_39 = arith.constant dense<0.000000e+00> : vector<8x24xf32>
    %245 = tpu.matmul %241, %1, %cst_39 {dimension_numbers = #tpu.dot_dimension_numbers<[1], [0], [0], [1], [0, 0, 1, 1], [], []>} : vector<8x8xf32>, vector<8x24xf32>, vector<8x24xf32> -> vector<8x24xf32>
    %246 = arith.addf %245, %14 : vector<8x24xf32>
    %247 = vector.extract_strided_slice %31 {offsets = [0, 0], sizes = [8, 8], strides = [1, 1]} : vector<8x24xf32> to vector<8x8xf32>
    %248 = vector.extract_strided_slice %246 {offsets = [0, 0], sizes = [8, 8], strides = [1, 1]} : vector<8x24xf32> to vector<8x8xf32>
    %249 = arith.addf %247, %248 : vector<8x8xf32>
    %250 = arith.negf %249 : vector<8x8xf32>
    %251 = math.exp %250 : vector<8x8xf32>
    %cst_40 = arith.constant 1.000000e+00 : f32
    %252 = vector.broadcast %cst_40 : f32 to vector<8x8xf32>
    %253 = arith.addf %252, %251 : vector<8x8xf32>
    %254 = arith.divf %252, %253 : vector<8x8xf32>
    %255 = vector.extract_strided_slice %31 {offsets = [0, 8], sizes = [8, 8], strides = [1, 1]} : vector<8x24xf32> to vector<8x8xf32>
    %256 = vector.extract_strided_slice %246 {offsets = [0, 8], sizes = [8, 8], strides = [1, 1]} : vector<8x24xf32> to vector<8x8xf32>
    %257 = arith.addf %255, %256 : vector<8x8xf32>
    %258 = arith.negf %257 : vector<8x8xf32>
    %259 = math.exp %258 : vector<8x8xf32>
    %cst_41 = arith.constant 1.000000e+00 : f32
    %260 = vector.broadcast %cst_41 : f32 to vector<8x8xf32>
    %261 = arith.addf %260, %259 : vector<8x8xf32>
    %262 = arith.divf %260, %261 : vector<8x8xf32>
    %263 = vector.extract_strided_slice %31 {offsets = [0, 16], sizes = [8, 8], strides = [1, 1]} : vector<8x24xf32> to vector<8x8xf32>
    %264 = vector.extract_strided_slice %246 {offsets = [0, 16], sizes = [8, 8], strides = [1, 1]} : vector<8x24xf32> to vector<8x8xf32>
    %265 = arith.mulf %254, %264 : vector<8x8xf32>
    %266 = arith.addf %263, %265 : vector<8x8xf32>
    %267 = math.tanh %266 : vector<8x8xf32>
    %268 = arith.subf %241, %267 : vector<8x8xf32>
    %269 = arith.mulf %262, %268 : vector<8x8xf32>
    %270 = arith.addf %267, %269 : vector<8x8xf32>
    %271 = arith.mulf %270, %40 : vector<8x8xf32>
    %cst_42 = arith.constant dense<0.000000e+00> : vector<8x24xf32>
    %272 = tpu.matmul %271, %2, %cst_42 {dimension_numbers = #tpu.dot_dimension_numbers<[1], [0], [0], [1], [0, 0, 1, 1], [], []>} : vector<8x8xf32>, vector<8x24xf32>, vector<8x24xf32> -> vector<8x24xf32>
    %273 = arith.addf %272, %11 : vector<8x24xf32>
    %cst_43 = arith.constant dense<0.000000e+00> : vector<8x24xf32>
    %274 = tpu.matmul %270, %3, %cst_43 {dimension_numbers = #tpu.dot_dimension_numbers<[1], [0], [0], [1], [0, 0, 1, 1], [], []>} : vector<8x8xf32>, vector<8x24xf32>, vector<8x24xf32> -> vector<8x24xf32>
    %275 = arith.addf %274, %17 : vector<8x24xf32>
    %276 = vector.extract_strided_slice %70 {offsets = [0, 0], sizes = [8, 8], strides = [1, 1]} : vector<8x24xf32> to vector<8x8xf32>
    %277 = vector.extract_strided_slice %275 {offsets = [0, 0], sizes = [8, 8], strides = [1, 1]} : vector<8x24xf32> to vector<8x8xf32>
    %278 = arith.addf %276, %277 : vector<8x8xf32>
    %279 = arith.negf %278 : vector<8x8xf32>
    %280 = math.exp %279 : vector<8x8xf32>
    %cst_44 = arith.constant 1.000000e+00 : f32
    %281 = vector.broadcast %cst_44 : f32 to vector<8x8xf32>
    %282 = arith.addf %281, %280 : vector<8x8xf32>
    %283 = arith.divf %281, %282 : vector<8x8xf32>
    %284 = vector.extract_strided_slice %70 {offsets = [0, 8], sizes = [8, 8], strides = [1, 1]} : vector<8x24xf32> to vector<8x8xf32>
    %285 = vector.extract_strided_slice %275 {offsets = [0, 8], sizes = [8, 8], strides = [1, 1]} : vector<8x24xf32> to vector<8x8xf32>
    %286 = arith.addf %284, %285 : vector<8x8xf32>
    %287 = arith.negf %286 : vector<8x8xf32>
    %288 = math.exp %287 : vector<8x8xf32>
    %cst_45 = arith.constant 1.000000e+00 : f32
    %289 = vector.broadcast %cst_45 : f32 to vector<8x8xf32>
    %290 = arith.addf %289, %288 : vector<8x8xf32>
    %291 = arith.divf %289, %290 : vector<8x8xf32>
    %292 = vector.extract_strided_slice %70 {offsets = [0, 16], sizes = [8, 8], strides = [1, 1]} : vector<8x24xf32> to vector<8x8xf32>
    %293 = vector.extract_strided_slice %275 {offsets = [0, 16], sizes = [8, 8], strides = [1, 1]} : vector<8x24xf32> to vector<8x8xf32>
    %294 = arith.mulf %283, %293 : vector<8x8xf32>
    %295 = arith.addf %292, %294 : vector<8x8xf32>
    %296 = math.tanh %295 : vector<8x8xf32>
    %297 = arith.subf %270, %296 : vector<8x8xf32>
    %298 = arith.mulf %291, %297 : vector<8x8xf32>
    %299 = arith.addf %296, %298 : vector<8x8xf32>
    %cst_46 = arith.constant dense<0.000000e+00> : vector<8x24xf32>
    %300 = tpu.matmul %299, %3, %cst_46 {dimension_numbers = #tpu.dot_dimension_numbers<[1], [0], [0], [1], [0, 0, 1, 1], [], []>} : vector<8x8xf32>, vector<8x24xf32>, vector<8x24xf32> -> vector<8x24xf32>
    %301 = arith.addf %300, %17 : vector<8x24xf32>
    %302 = vector.extract_strided_slice %99 {offsets = [0, 0], sizes = [8, 8], strides = [1, 1]} : vector<8x24xf32> to vector<8x8xf32>
    %303 = vector.extract_strided_slice %301 {offsets = [0, 0], sizes = [8, 8], strides = [1, 1]} : vector<8x24xf32> to vector<8x8xf32>
    %304 = arith.addf %302, %303 : vector<8x8xf32>
    %305 = arith.negf %304 : vector<8x8xf32>
    %306 = math.exp %305 : vector<8x8xf32>
    %cst_47 = arith.constant 1.000000e+00 : f32
    %307 = vector.broadcast %cst_47 : f32 to vector<8x8xf32>
    %308 = arith.addf %307, %306 : vector<8x8xf32>
    %309 = arith.divf %307, %308 : vector<8x8xf32>
    %310 = vector.extract_strided_slice %99 {offsets = [0, 8], sizes = [8, 8], strides = [1, 1]} : vector<8x24xf32> to vector<8x8xf32>
    %311 = vector.extract_strided_slice %301 {offsets = [0, 8], sizes = [8, 8], strides = [1, 1]} : vector<8x24xf32> to vector<8x8xf32>
    %312 = arith.addf %310, %311 : vector<8x8xf32>
    %313 = arith.negf %312 : vector<8x8xf32>
    %314 = math.exp %313 : vector<8x8xf32>
    %cst_48 = arith.constant 1.000000e+00 : f32
    %315 = vector.broadcast %cst_48 : f32 to vector<8x8xf32>
    %316 = arith.addf %315, %314 : vector<8x8xf32>
    %317 = arith.divf %315, %316 : vector<8x8xf32>
    %318 = vector.extract_strided_slice %99 {offsets = [0, 16], sizes = [8, 8], strides = [1, 1]} : vector<8x24xf32> to vector<8x8xf32>
    %319 = vector.extract_strided_slice %301 {offsets = [0, 16], sizes = [8, 8], strides = [1, 1]} : vector<8x24xf32> to vector<8x8xf32>
    %320 = arith.mulf %309, %319 : vector<8x8xf32>
    %321 = arith.addf %318, %320 : vector<8x8xf32>
    %322 = math.tanh %321 : vector<8x8xf32>
    %323 = arith.subf %299, %322 : vector<8x8xf32>
    %324 = arith.mulf %317, %323 : vector<8x8xf32>
    %325 = arith.addf %322, %324 : vector<8x8xf32>
    %cst_49 = arith.constant dense<0.000000e+00> : vector<8x24xf32>
    %326 = tpu.matmul %325, %3, %cst_49 {dimension_numbers = #tpu.dot_dimension_numbers<[1], [0], [0], [1], [0, 0, 1, 1], [], []>} : vector<8x8xf32>, vector<8x24xf32>, vector<8x24xf32> -> vector<8x24xf32>
    %327 = arith.addf %326, %17 : vector<8x24xf32>
    %328 = vector.extract_strided_slice %128 {offsets = [0, 0], sizes = [8, 8], strides = [1, 1]} : vector<8x24xf32> to vector<8x8xf32>
    %329 = vector.extract_strided_slice %327 {offsets = [0, 0], sizes = [8, 8], strides = [1, 1]} : vector<8x24xf32> to vector<8x8xf32>
    %330 = arith.addf %328, %329 : vector<8x8xf32>
    %331 = arith.negf %330 : vector<8x8xf32>
    %332 = math.exp %331 : vector<8x8xf32>
    %cst_50 = arith.constant 1.000000e+00 : f32
    %333 = vector.broadcast %cst_50 : f32 to vector<8x8xf32>
    %334 = arith.addf %333, %332 : vector<8x8xf32>
    %335 = arith.divf %333, %334 : vector<8x8xf32>
    %336 = vector.extract_strided_slice %128 {offsets = [0, 8], sizes = [8, 8], strides = [1, 1]} : vector<8x24xf32> to vector<8x8xf32>
    %337 = vector.extract_strided_slice %327 {offsets = [0, 8], sizes = [8, 8], strides = [1, 1]} : vector<8x24xf32> to vector<8x8xf32>
    %338 = arith.addf %336, %337 : vector<8x8xf32>
    %339 = arith.negf %338 : vector<8x8xf32>
    %340 = math.exp %339 : vector<8x8xf32>
    %cst_51 = arith.constant 1.000000e+00 : f32
    %341 = vector.broadcast %cst_51 : f32 to vector<8x8xf32>
    %342 = arith.addf %341, %340 : vector<8x8xf32>
    %343 = arith.divf %341, %342 : vector<8x8xf32>
    %344 = vector.extract_strided_slice %128 {offsets = [0, 16], sizes = [8, 8], strides = [1, 1]} : vector<8x24xf32> to vector<8x8xf32>
    %345 = vector.extract_strided_slice %327 {offsets = [0, 16], sizes = [8, 8], strides = [1, 1]} : vector<8x24xf32> to vector<8x8xf32>
    %346 = arith.mulf %335, %345 : vector<8x8xf32>
    %347 = arith.addf %344, %346 : vector<8x8xf32>
    %348 = math.tanh %347 : vector<8x8xf32>
    %349 = arith.subf %325, %348 : vector<8x8xf32>
    %350 = arith.mulf %343, %349 : vector<8x8xf32>
    %351 = arith.addf %348, %350 : vector<8x8xf32>
    %cst_52 = arith.constant dense<0.000000e+00> : vector<8x24xf32>
    %352 = tpu.matmul %351, %3, %cst_52 {dimension_numbers = #tpu.dot_dimension_numbers<[1], [0], [0], [1], [0, 0, 1, 1], [], []>} : vector<8x8xf32>, vector<8x24xf32>, vector<8x24xf32> -> vector<8x24xf32>
    %353 = arith.addf %352, %17 : vector<8x24xf32>
    %354 = vector.extract_strided_slice %157 {offsets = [0, 0], sizes = [8, 8], strides = [1, 1]} : vector<8x24xf32> to vector<8x8xf32>
    %355 = vector.extract_strided_slice %353 {offsets = [0, 0], sizes = [8, 8], strides = [1, 1]} : vector<8x24xf32> to vector<8x8xf32>
    %356 = arith.addf %354, %355 : vector<8x8xf32>
    %357 = arith.negf %356 : vector<8x8xf32>
    %358 = math.exp %357 : vector<8x8xf32>
    %cst_53 = arith.constant 1.000000e+00 : f32
    %359 = vector.broadcast %cst_53 : f32 to vector<8x8xf32>
    %360 = arith.addf %359, %358 : vector<8x8xf32>
    %361 = arith.divf %359, %360 : vector<8x8xf32>
    %362 = vector.extract_strided_slice %157 {offsets = [0, 8], sizes = [8, 8], strides = [1, 1]} : vector<8x24xf32> to vector<8x8xf32>
    %363 = vector.extract_strided_slice %353 {offsets = [0, 8], sizes = [8, 8], strides = [1, 1]} : vector<8x24xf32> to vector<8x8xf32>
    %364 = arith.addf %362, %363 : vector<8x8xf32>
    %365 = arith.negf %364 : vector<8x8xf32>
    %366 = math.exp %365 : vector<8x8xf32>
    %cst_54 = arith.constant 1.000000e+00 : f32
    %367 = vector.broadcast %cst_54 : f32 to vector<8x8xf32>
    %368 = arith.addf %367, %366 : vector<8x8xf32>
    %369 = arith.divf %367, %368 : vector<8x8xf32>
    %370 = vector.extract_strided_slice %157 {offsets = [0, 16], sizes = [8, 8], strides = [1, 1]} : vector<8x24xf32> to vector<8x8xf32>
    %371 = vector.extract_strided_slice %353 {offsets = [0, 16], sizes = [8, 8], strides = [1, 1]} : vector<8x24xf32> to vector<8x8xf32>
    %372 = arith.mulf %361, %371 : vector<8x8xf32>
    %373 = arith.addf %370, %372 : vector<8x8xf32>
    %374 = math.tanh %373 : vector<8x8xf32>
    %375 = arith.subf %351, %374 : vector<8x8xf32>
    %376 = arith.mulf %369, %375 : vector<8x8xf32>
    %377 = arith.addf %374, %376 : vector<8x8xf32>
    %cst_55 = arith.constant dense<0.000000e+00> : vector<8x24xf32>
    %378 = tpu.matmul %377, %3, %cst_55 {dimension_numbers = #tpu.dot_dimension_numbers<[1], [0], [0], [1], [0, 0, 1, 1], [], []>} : vector<8x8xf32>, vector<8x24xf32>, vector<8x24xf32> -> vector<8x24xf32>
    %379 = arith.addf %378, %17 : vector<8x24xf32>
    %380 = vector.extract_strided_slice %186 {offsets = [0, 0], sizes = [8, 8], strides = [1, 1]} : vector<8x24xf32> to vector<8x8xf32>
    %381 = vector.extract_strided_slice %379 {offsets = [0, 0], sizes = [8, 8], strides = [1, 1]} : vector<8x24xf32> to vector<8x8xf32>
    %382 = arith.addf %380, %381 : vector<8x8xf32>
    %383 = arith.negf %382 : vector<8x8xf32>
    %384 = math.exp %383 : vector<8x8xf32>
    %cst_56 = arith.constant 1.000000e+00 : f32
    %385 = vector.broadcast %cst_56 : f32 to vector<8x8xf32>
    %386 = arith.addf %385, %384 : vector<8x8xf32>
    %387 = arith.divf %385, %386 : vector<8x8xf32>
    %388 = vector.extract_strided_slice %186 {offsets = [0, 8], sizes = [8, 8], strides = [1, 1]} : vector<8x24xf32> to vector<8x8xf32>
    %389 = vector.extract_strided_slice %379 {offsets = [0, 8], sizes = [8, 8], strides = [1, 1]} : vector<8x24xf32> to vector<8x8xf32>
    %390 = arith.addf %388, %389 : vector<8x8xf32>
    %391 = arith.negf %390 : vector<8x8xf32>
    %392 = math.exp %391 : vector<8x8xf32>
    %cst_57 = arith.constant 1.000000e+00 : f32
    %393 = vector.broadcast %cst_57 : f32 to vector<8x8xf32>
    %394 = arith.addf %393, %392 : vector<8x8xf32>
    %395 = arith.divf %393, %394 : vector<8x8xf32>
    %396 = vector.extract_strided_slice %186 {offsets = [0, 16], sizes = [8, 8], strides = [1, 1]} : vector<8x24xf32> to vector<8x8xf32>
    %397 = vector.extract_strided_slice %379 {offsets = [0, 16], sizes = [8, 8], strides = [1, 1]} : vector<8x24xf32> to vector<8x8xf32>
    %398 = arith.mulf %387, %397 : vector<8x8xf32>
    %399 = arith.addf %396, %398 : vector<8x8xf32>
    %400 = math.tanh %399 : vector<8x8xf32>
    %401 = arith.subf %377, %400 : vector<8x8xf32>
    %402 = arith.mulf %395, %401 : vector<8x8xf32>
    %403 = arith.addf %400, %402 : vector<8x8xf32>
    %cst_58 = arith.constant dense<0.000000e+00> : vector<8x24xf32>
    %404 = tpu.matmul %403, %3, %cst_58 {dimension_numbers = #tpu.dot_dimension_numbers<[1], [0], [0], [1], [0, 0, 1, 1], [], []>} : vector<8x8xf32>, vector<8x24xf32>, vector<8x24xf32> -> vector<8x24xf32>
    %405 = arith.addf %404, %17 : vector<8x24xf32>
    %406 = vector.extract_strided_slice %215 {offsets = [0, 0], sizes = [8, 8], strides = [1, 1]} : vector<8x24xf32> to vector<8x8xf32>
    %407 = vector.extract_strided_slice %405 {offsets = [0, 0], sizes = [8, 8], strides = [1, 1]} : vector<8x24xf32> to vector<8x8xf32>
    %408 = arith.addf %406, %407 : vector<8x8xf32>
    %409 = arith.negf %408 : vector<8x8xf32>
    %410 = math.exp %409 : vector<8x8xf32>
    %cst_59 = arith.constant 1.000000e+00 : f32
    %411 = vector.broadcast %cst_59 : f32 to vector<8x8xf32>
    %412 = arith.addf %411, %410 : vector<8x8xf32>
    %413 = arith.divf %411, %412 : vector<8x8xf32>
    %414 = vector.extract_strided_slice %215 {offsets = [0, 8], sizes = [8, 8], strides = [1, 1]} : vector<8x24xf32> to vector<8x8xf32>
    %415 = vector.extract_strided_slice %405 {offsets = [0, 8], sizes = [8, 8], strides = [1, 1]} : vector<8x24xf32> to vector<8x8xf32>
    %416 = arith.addf %414, %415 : vector<8x8xf32>
    %417 = arith.negf %416 : vector<8x8xf32>
    %418 = math.exp %417 : vector<8x8xf32>
    %cst_60 = arith.constant 1.000000e+00 : f32
    %419 = vector.broadcast %cst_60 : f32 to vector<8x8xf32>
    %420 = arith.addf %419, %418 : vector<8x8xf32>
    %421 = arith.divf %419, %420 : vector<8x8xf32>
    %422 = vector.extract_strided_slice %215 {offsets = [0, 16], sizes = [8, 8], strides = [1, 1]} : vector<8x24xf32> to vector<8x8xf32>
    %423 = vector.extract_strided_slice %405 {offsets = [0, 16], sizes = [8, 8], strides = [1, 1]} : vector<8x24xf32> to vector<8x8xf32>
    %424 = arith.mulf %413, %423 : vector<8x8xf32>
    %425 = arith.addf %422, %424 : vector<8x8xf32>
    %426 = math.tanh %425 : vector<8x8xf32>
    %427 = arith.subf %403, %426 : vector<8x8xf32>
    %428 = arith.mulf %421, %427 : vector<8x8xf32>
    %429 = arith.addf %426, %428 : vector<8x8xf32>
    %cst_61 = arith.constant dense<0.000000e+00> : vector<8x24xf32>
    %430 = tpu.matmul %429, %3, %cst_61 {dimension_numbers = #tpu.dot_dimension_numbers<[1], [0], [0], [1], [0, 0, 1, 1], [], []>} : vector<8x8xf32>, vector<8x24xf32>, vector<8x24xf32> -> vector<8x24xf32>
    %431 = arith.addf %430, %17 : vector<8x24xf32>
    %432 = vector.extract_strided_slice %244 {offsets = [0, 0], sizes = [8, 8], strides = [1, 1]} : vector<8x24xf32> to vector<8x8xf32>
    %433 = vector.extract_strided_slice %431 {offsets = [0, 0], sizes = [8, 8], strides = [1, 1]} : vector<8x24xf32> to vector<8x8xf32>
    %434 = arith.addf %432, %433 : vector<8x8xf32>
    %435 = arith.negf %434 : vector<8x8xf32>
    %436 = math.exp %435 : vector<8x8xf32>
    %cst_62 = arith.constant 1.000000e+00 : f32
    %437 = vector.broadcast %cst_62 : f32 to vector<8x8xf32>
    %438 = arith.addf %437, %436 : vector<8x8xf32>
    %439 = arith.divf %437, %438 : vector<8x8xf32>
    %440 = vector.extract_strided_slice %244 {offsets = [0, 8], sizes = [8, 8], strides = [1, 1]} : vector<8x24xf32> to vector<8x8xf32>
    %441 = vector.extract_strided_slice %431 {offsets = [0, 8], sizes = [8, 8], strides = [1, 1]} : vector<8x24xf32> to vector<8x8xf32>
    %442 = arith.addf %440, %441 : vector<8x8xf32>
    %443 = arith.negf %442 : vector<8x8xf32>
    %444 = math.exp %443 : vector<8x8xf32>
    %cst_63 = arith.constant 1.000000e+00 : f32
    %445 = vector.broadcast %cst_63 : f32 to vector<8x8xf32>
    %446 = arith.addf %445, %444 : vector<8x8xf32>
    %447 = arith.divf %445, %446 : vector<8x8xf32>
    %448 = vector.extract_strided_slice %244 {offsets = [0, 16], sizes = [8, 8], strides = [1, 1]} : vector<8x24xf32> to vector<8x8xf32>
    %449 = vector.extract_strided_slice %431 {offsets = [0, 16], sizes = [8, 8], strides = [1, 1]} : vector<8x24xf32> to vector<8x8xf32>
    %450 = arith.mulf %439, %449 : vector<8x8xf32>
    %451 = arith.addf %448, %450 : vector<8x8xf32>
    %452 = math.tanh %451 : vector<8x8xf32>
    %453 = arith.subf %429, %452 : vector<8x8xf32>
    %454 = arith.mulf %447, %453 : vector<8x8xf32>
    %455 = arith.addf %452, %454 : vector<8x8xf32>
    %cst_64 = arith.constant dense<0.000000e+00> : vector<8x24xf32>
    %456 = tpu.matmul %455, %3, %cst_64 {dimension_numbers = #tpu.dot_dimension_numbers<[1], [0], [0], [1], [0, 0, 1, 1], [], []>} : vector<8x8xf32>, vector<8x24xf32>, vector<8x24xf32> -> vector<8x24xf32>
    %457 = arith.addf %456, %17 : vector<8x24xf32>
    %458 = vector.extract_strided_slice %273 {offsets = [0, 0], sizes = [8, 8], strides = [1, 1]} : vector<8x24xf32> to vector<8x8xf32>
    %459 = vector.extract_strided_slice %457 {offsets = [0, 0], sizes = [8, 8], strides = [1, 1]} : vector<8x24xf32> to vector<8x8xf32>
    %460 = arith.addf %458, %459 : vector<8x8xf32>
    %461 = arith.negf %460 : vector<8x8xf32>
    %462 = math.exp %461 : vector<8x8xf32>
    %cst_65 = arith.constant 1.000000e+00 : f32
    %463 = vector.broadcast %cst_65 : f32 to vector<8x8xf32>
    %464 = arith.addf %463, %462 : vector<8x8xf32>
    %465 = arith.divf %463, %464 : vector<8x8xf32>
    %466 = vector.extract_strided_slice %273 {offsets = [0, 8], sizes = [8, 8], strides = [1, 1]} : vector<8x24xf32> to vector<8x8xf32>
    %467 = vector.extract_strided_slice %457 {offsets = [0, 8], sizes = [8, 8], strides = [1, 1]} : vector<8x24xf32> to vector<8x8xf32>
    %468 = arith.addf %466, %467 : vector<8x8xf32>
    %469 = arith.negf %468 : vector<8x8xf32>
    %470 = math.exp %469 : vector<8x8xf32>
    %cst_66 = arith.constant 1.000000e+00 : f32
    %471 = vector.broadcast %cst_66 : f32 to vector<8x8xf32>
    %472 = arith.addf %471, %470 : vector<8x8xf32>
    %473 = arith.divf %471, %472 : vector<8x8xf32>
    %474 = vector.extract_strided_slice %273 {offsets = [0, 16], sizes = [8, 8], strides = [1, 1]} : vector<8x24xf32> to vector<8x8xf32>
    %475 = vector.extract_strided_slice %457 {offsets = [0, 16], sizes = [8, 8], strides = [1, 1]} : vector<8x24xf32> to vector<8x8xf32>
    %476 = arith.mulf %465, %475 : vector<8x8xf32>
    %477 = arith.addf %474, %476 : vector<8x8xf32>
    %478 = math.tanh %477 : vector<8x8xf32>
    %479 = arith.subf %455, %478 : vector<8x8xf32>
    %480 = arith.mulf %473, %479 : vector<8x8xf32>
    %481 = arith.addf %478, %480 : vector<8x8xf32>
    %c0_67 = arith.constant 0 : index
    %c0_68 = arith.constant 0 : index
    %482 = vector.load %arg3[%c0_67, %c0_68] : memref<8x8xf32, #tpu.memory_space<vmem>>, vector<8x8xf32>
    %483 = arith.mulf %481, %482 : vector<8x8xf32>
    %cst_69 = arith.constant dense<0.000000e+00> : vector<8x24xf32>
    %484 = tpu.matmul %483, %4, %cst_69 {dimension_numbers = #tpu.dot_dimension_numbers<[1], [0], [0], [1], [0, 0, 1, 1], [], []>} : vector<8x8xf32>, vector<8x24xf32>, vector<8x24xf32> -> vector<8x24xf32>
    %485 = arith.addf %484, %20 : vector<8x24xf32>
    %486 = vector.extract_strided_slice %485 {offsets = [0, 0], sizes = [8, 2], strides = [1, 1]} : vector<8x24xf32> to vector<8x2xf32>
    %c0_70 = arith.constant 0 : index
    %c0_71 = arith.constant 0 : index
    %487 = vector.load %arg4[%c0_70, %c0_71] : memref<8x2xf32, #tpu.memory_space<vmem>>, vector<8x2xf32>
    tpu.vector_store %arg4[%c0_70, %c0_71], %486 {strides = array<i32>} : memref<8x2xf32, #tpu.memory_space<vmem>>, vector<8x2xf32>,
    return
  }
}

</mosaic_0001>

<llo_original>
// kernel: tpu_custom_call.1
$region0: #{tpu_custom_call.1}
  #allocation0 [shape = 'u32[]', space=smem, size = 0x4, offset = 0x4, fixed_abs, tag = 'smem constant byte address 0x4 - core index']
  #allocation1 [shape = 'u32[144,128]{1,0:T(1,128)}', space=vmem, size = 0x12000, scoped, tag = 'internal scratch']
  %s0 = inlined_call_operand.vmem [shape: f32[64,8], index: 0, kind: input, shape index: {}]
  %s1 = inlined_call_operand.vmem [shape: f32[48,24], index: 1, kind: input, shape index: {}]
  %s2 = inlined_call_operand.vmem [shape: f32[64,8], index: 2, kind: input, shape index: {}]
  %s3 = inlined_call_operand.vmem [shape: f32[8,8], index: 3, kind: input, shape index: {}]
  %s4 = inlined_call_operand.vmem [shape: f32[8,2], index: 4, kind: output, shape index: {}]
  %s5 = sld [smem:[#allocation0]]
  $region26: #{tpu_custom_call.1} parent=0
    _
  %s7 = ssub.s32 1, %s5
  %s8 = scalar_select 0, %s7, %s5
  // Predicated region
  $region2: #{tpu_custom_call.1} parent=0 // pred_check
    _
  $region3: #{tpu_custom_call.1} parent=0 // pred_check_branch
    %10 = sbr.rel (0) target = $region5
  $region4: #{tpu_custom_call.1} parent=0 // pred_region
    _
  $region5: #{tpu_custom_call.1} parent=0 // pred_fallthru
    _
  // Predicated region
  $region6: #{tpu_custom_call.1} parent=0 // pred_check
    _
  $region7: #{tpu_custom_call.1} parent=0 // pred_check_branch
    %12 = sbr.rel (0) target = $region9
  $region8: #{tpu_custom_call.1} parent=0 // pred_region
    _
  $region9: #{tpu_custom_call.1} parent=0 // pred_fallthru
    _
  // Predicated region
  $region10: #{tpu_custom_call.1} parent=0 // pred_check
    _
  $region11: #{tpu_custom_call.1} parent=0 // pred_check_branch
    %14 = sbr.rel (0) target = $region13
  $region12: #{tpu_custom_call.1} parent=0 // pred_region
    _
  $region13: #{tpu_custom_call.1} parent=0 // pred_fallthru
    _
  // Predicated region
  $region14: #{tpu_custom_call.1} parent=0 // pred_check
    _
  $region15: #{tpu_custom_call.1} parent=0 // pred_check_branch
    %16 = sbr.rel (0) target = $region17
  $region16: #{tpu_custom_call.1} parent=0 // pred_region
    _
  $region17: #{tpu_custom_call.1} parent=0 // pred_fallthru
    _
  %v17 = vld [vmem:[%s1] sm:$0xff]
  %v18 = vld [vmem:[%s1 + $0x8] sm:$0xff]
  %v19 = vld [vmem:[%s1 + $0x10] sm:$0xff]
  %v20 = vld [vmem:[%s1 + $0x18] sm:$0xff]
  %v21 = vld [vmem:[%s1 + $0x20] sm:$0xff]
  %v22 = vld [vmem:[%s1 + $0x28] sm:$0xff]
  %v23 = vlaneseq
  %v24 = vshrl.u32 %v23, 7
  %v25 = vsub.s32 0, %v24
  %v26 = vrot.slane %v22, %v25
  %v27 = vlaneseq
  %v28 = vshrl.u32 %v27, 7
  %v29 = vsub.s32 1, %v28
  %v30 = vrot.slane %v22, %v29
  %v31 = vlaneseq
  %v32 = vshrl.u32 %v31, 7
  %v33 = vsub.s32 2, %v32
  %v34 = vrot.slane %v22, %v33
  %v35 = vlaneseq
  %v36 = vshrl.u32 %v35, 7
  %v37 = vsub.s32 3, %v36
  %v38 = vrot.slane %v22, %v37
  %v39 = vlaneseq
  %v40 = vshrl.u32 %v39, 7
  %v41 = vsub.s32 4, %v40
  %v42 = vrot.slane %v22, %v41
  %v43 = vld [vmem:[%s0] sm:$0xff]
  %v44 = vld [vmem:[%s0 + $0x8] sm:$0xff]
  %v45 = vld [vmem:[%s0 + $0x10] sm:$0xff]
  %v46 = vld [vmem:[%s0 + $0x18] sm:$0xff]
  %v47 = vld [vmem:[%s0 + $0x20] sm:$0xff]
  %v48 = vld [vmem:[%s0 + $0x28] sm:$0xff]
  %v49 = vld [vmem:[%s0 + $0x30] sm:$0xff]
  %v50 = vld [vmem:[%s0 + $0x38] sm:$0xff]
  %vm51 = vcmask 64512
  %v53 = vsel %vm51, %v43, 0
  %v56 = vsel %vm51, %v44, 0
  %v59 = vsel %vm51, %v45, 0
  %v62 = vsel %vm51, %v46, 0
  %v65 = vsel %vm51, %v47, 0
  %v68 = vsel %vm51, %v48, 0
  %v71 = vsel %vm51, %v49, 0
  %v74 = vsel %vm51, %v50, 0
  %76 = vmatprep.subr.mxu0 0.0
  %77 = vmatpush1.msra.mxu0 0.0
  %78 = vmatprep.subr.mxu0 0.0
  %79 = vmatpush1.msra.mxu0 0.0
  %80 = vmatprep.subr.mxu0 0.0
  %81 = vmatpush1.msra.mxu0 0.0
  %82 = vmatprep.subr.mxu0 0.0
  %83 = vmatpush1.msra.mxu0 0.0
  %84 = vmatprep.subr.mxu0 0.0
  %85 = vmatpush1.msra.mxu0 0.0
  %86 = vmatprep.subr.mxu0 0.0
  %87 = vmatpush1.msra.mxu0 0.0
  %88 = vmatprep.subr.mxu0 0.0
  %89 = vmatpush1.msra.mxu0 0.0
  %90 = vmatprep.subr.mxu0 0.0
  %91 = vmatpush1.msra.mxu0 0.0
  %92 = vmatprep.subr.mxu0 0.0
  %93 = vmatpush1.msra.mxu0 0.0
  %94 = vmatprep.subr.mxu0 0.0
  %95 = vmatpush1.msra.mxu0 0.0
  %96 = vmatprep.subr.mxu0 0.0
  %97 = vmatpush1.msra.mxu0 0.0
  %98 = vmatprep.subr.mxu0 0.0
  %99 = vmatpush1.msra.mxu0 0.0
  %100 = vmatprep.subr.mxu0 0.0
  %101 = vmatpush1.msra.mxu0 0.0
  %102 = vmatprep.subr.mxu0 0.0
  %103 = vmatpush1.msra.mxu0 0.0
  %104 = vmatprep.subr.mxu0 0.0
  %105 = vmatpush1.msra.mxu0 0.0
  %106 = vmatprep.subr.mxu0 0.0
  %107 = vmatpush1.msra.mxu0 %v17
  %108 = vmatprep.subr.mxu0 0.0
  %109 = vmatpush2.msra.mxu0 0.0
  %110 = vmatprep.subr.mxu0 0.0
  %111 = vmatpush2.msra.mxu0 0.0
  %112 = vmatprep.subr.mxu0 0.0
  %113 = vmatpush2.msra.mxu0 0.0
  %114 = vmatprep.subr.mxu0 0.0
  %115 = vmatpush2.msra.mxu0 0.0
  %116 = vmatprep.subr.mxu0 0.0
  %117 = vmatpush2.msra.mxu0 0.0
  %118 = vmatprep.subr.mxu0 0.0
  %119 = vmatpush2.msra.mxu0 0.0
  %120 = vmatprep.subr.mxu0 0.0
  %121 = vmatpush2.msra.mxu0 0.0
  %122 = vmatprep.subr.mxu0 0.0
  %123 = vmatpush2.msra.mxu0 0.0
  %124 = vmatprep.subr.mxu0 0.0
  %125 = vmatpush2.msra.mxu0 0.0
  %126 = vmatprep.subr.mxu0 0.0
  %127 = vmatpush2.msra.mxu0 0.0
  %128 = vmatprep.subr.mxu0 0.0
  %129 = vmatpush2.msra.mxu0 0.0
  %130 = vmatprep.subr.mxu0 0.0
  %131 = vmatpush2.msra.mxu0 0.0
  %132 = vmatprep.subr.mxu0 0.0
  %133 = vmatpush2.msra.mxu0 0.0
  %134 = vmatprep.subr.mxu0 0.0
  %135 = vmatpush2.msra.mxu0 0.0
  %136 = vmatprep.subr.mxu0 0.0
  %137 = vmatpush2.msra.mxu0 0.0
  %138 = vmatprep.subr.mxu0 0.0
  %139 = vmatpush2.msra.mxu0 0.0
  %140 = vmatprep.mubr.f32.mxu0 0.0
  %141 = vmatmul.mubr.f32.gmra.mxu0 %v53
  %v142 = vpop.f32.mrf.mxu0
  %v143 = vadd.f32 %v26, %v142
  %v144 = vpop.f32.mrf.mxu0
  %145 = vmatprep.mubr.f32.mxu0 0.0
  %146 = vmatmul.mubr.f32.gmra.mxu0 %v56
  %v147 = vpop.f32.mrf.mxu0
  %v148 = vadd.f32 %v26, %v147
  %v149 = vpop.f32.mrf.mxu0
  %150 = vmatprep.mubr.f32.mxu0 0.0
  %151 = vmatmul.mubr.f32.gmra.mxu0 %v59
  %v152 = vpop.f32.mrf.mxu0
  %v153 = vadd.f32 %v26, %v152
  %v154 = vpop.f32.mrf.mxu0
  %155 = vmatprep.mubr.f32.mxu0 0.0
  %156 = vmatmul.mubr.f32.gmra.mxu0 %v62
  %v157 = vpop.f32.mrf.mxu0
  %v158 = vadd.f32 %v26, %v157
  %v159 = vpop.f32.mrf.mxu0
  %160 = vmatprep.mubr.f32.mxu0 0.0
  %161 = vmatmul.mubr.f32.gmra.mxu0 %v65
  %v162 = vpop.f32.mrf.mxu0
  %v163 = vadd.f32 %v26, %v162
  %v164 = vpop.f32.mrf.mxu0
  %165 = vmatprep.mubr.f32.mxu0 0.0
  %166 = vmatmul.mubr.f32.gmra.mxu0 %v68
  %v167 = vpop.f32.mrf.mxu0
  %v168 = vadd.f32 %v26, %v167
  %v169 = vpop.f32.mrf.mxu0
  %170 = vmatprep.mubr.f32.mxu0 0.0
  %171 = vmatmul.mubr.f32.gmra.mxu0 %v71
  %v172 = vpop.f32.mrf.mxu0
  %v173 = vadd.f32 %v26, %v172
  %v174 = vpop.f32.mrf.mxu0
  %175 = vmatprep.mubr.f32.mxu0 0.0
  %176 = vmatmul.mubr.f32.gmra.mxu0 %v74
  %v177 = vpop.f32.mrf.mxu0
  %v178 = vadd.f32 %v26, %v177
  %v179 = vpop.f32.mrf.mxu0
  %180 = vdwg.mxu0
  %v181 = vld [vmem:[%s2] sm:$0xff]
  %v182 = vld [vmem:[%s2 + $0x8] sm:$0xff]
  %v183 = vld [vmem:[%s2 + $0x10] sm:$0xff]
  %v184 = vld [vmem:[%s2 + $0x18] sm:$0xff]
  %v185 = vld [vmem:[%s2 + $0x20] sm:$0xff]
  %v186 = vld [vmem:[%s2 + $0x28] sm:$0xff]
  %v187 = vld [vmem:[%s2 + $0x30] sm:$0xff]
  %v188 = vld [vmem:[%s2 + $0x38] sm:$0xff]
  %v190 = vsel %vm51, 0.0, 0
  %192 = vmatprep.subr.mxu0 0.0
  %193 = vmatpush1.msra.mxu0 0.0
  %194 = vmatprep.subr.mxu0 0.0
  %195 = vmatpush1.msra.mxu0 0.0
  %196 = vmatprep.subr.mxu0 0.0
  %197 = vmatpush1.msra.mxu0 0.0
  %198 = vmatprep.subr.mxu0 0.0
  %199 = vmatpush1.msra.mxu0 0.0
  %200 = vmatprep.subr.mxu0 0.0
  %201 = vmatpush1.msra.mxu0 0.0
  %202 = vmatprep.subr.mxu0 0.0
  %203 = vmatpush1.msra.mxu0 0.0
  %204 = vmatprep.subr.mxu0 0.0
  %205 = vmatpush1.msra.mxu0 0.0
  %206 = vmatprep.subr.mxu0 0.0
  %207 = vmatpush1.msra.mxu0 0.0
  %208 = vmatprep.subr.mxu0 0.0
  %209 = vmatpush1.msra.mxu0 0.0
  %210 = vmatprep.subr.mxu0 0.0
  %211 = vmatpush1.msra.mxu0 0.0
  %212 = vmatprep.subr.mxu0 0.0
  %213 = vmatpush1.msra.mxu0 0.0
  %214 = vmatprep.subr.mxu0 0.0
  %215 = vmatpush1.msra.mxu0 0.0
  %216 = vmatprep.subr.mxu0 0.0
  %217 = vmatpush1.msra.mxu0 0.0
  %218 = vmatprep.subr.mxu0 0.0
  %219 = vmatpush1.msra.mxu0 0.0
  %220 = vmatprep.subr.mxu0 0.0
  %221 = vmatpush1.msra.mxu0 0.0
  %222 = vmatprep.subr.mxu0 0.0
  %223 = vmatpush1.msra.mxu0 %v18
  %224 = vmatprep.subr.mxu0 0.0
  %225 = vmatpush2.msra.mxu0 0.0
  %226 = vmatprep.subr.mxu0 0.0
  %227 = vmatpush2.msra.mxu0 0.0
  %228 = vmatprep.subr.mxu0 0.0
  %229 = vmatpush2.msra.mxu0 0.0
  %230 = vmatprep.subr.mxu0 0.0
  %231 = vmatpush2.msra.mxu0 0.0
  %232 = vmatprep.subr.mxu0 0.0
  %233 = vmatpush2.msra.mxu0 0.0
  %234 = vmatprep.subr.mxu0 0.0
  %235 = vmatpush2.msra.mxu0 0.0
  %236 = vmatprep.subr.mxu0 0.0
  %237 = vmatpush2.msra.mxu0 0.0
  %238 = vmatprep.subr.mxu0 0.0
  %239 = vmatpush2.msra.mxu0 0.0
  %240 = vmatprep.subr.mxu0 0.0
  %241 = vmatpush2.msra.mxu0 0.0
  %242 = vmatprep.subr.mxu0 0.0
  %243 = vmatpush2.msra.mxu0 0.0
  %244 = vmatprep.subr.mxu0 0.0
  %245 = vmatpush2.msra.mxu0 0.0
  %246 = vmatprep.subr.mxu0 0.0
  %247 = vmatpush2.msra.mxu0 0.0
  %248 = vmatprep.subr.mxu0 0.0
  %249 = vmatpush2.msra.mxu0 0.0
  %250 = vmatprep.subr.mxu0 0.0
  %251 = vmatpush2.msra.mxu0 0.0
  %252 = vmatprep.subr.mxu0 0.0
  %253 = vmatpush2.msra.mxu0 0.0
  %254 = vmatprep.subr.mxu0 0.0
  %255 = vmatpush2.msra.mxu0 0.0
  %256 = vmatprep.mubr.f32.mxu0 0.0
  %257 = vmatmul.mubr.f32.gmra.mxu0 %v190
  %v258 = vpop.f32.mrf.mxu0
  %v259 = vadd.f32 %v34, %v258
  %v260 = vpop.f32.mrf.mxu0
  %261 = vdwg.mxu0
  %v262 = vadd.f32 %v143, %v259
  %v263 = vxor.u32 %v262, 2147483648
  %v264 = vmul.f32 %v263, 1.442695
  %v265 = vpow.pop %v264
  %v266 = vadd.f32 %v265, 1.0
  %v267 = vrcp.pop %v266
  %v268 = vmul.f32 1.0, %v267
  %270 = vrot.lane.b32.xlu0 %v259, 112
  %v271 = vpop.permute.xlu0 %270
  %v273 = vmul.f32 %v268, %v271
  %275 = vrot.lane.b32.xlu0 %v273, 16
  %v276 = vpop.permute.xlu0 %275
  %v278 = vadd.f32 %v143, %v276
  %v279 = vtanh.pop %v278
  %v280 = vsub.f32 0.0, %v279
  %282 = vrot.lane.b32.xlu0 %v280, 120
  %v283 = vpop.permute.xlu0 %282
  %v285 = vmul.f32 %v268, %v283
  %287 = vrot.lane.b32.xlu0 %v285, 8
  %v288 = vpop.permute.xlu0 %287
  %v290 = vadd.f32 %v279, %v288
  %292 = vrot.lane.b32.xlu0 %v181, 16
  %v293 = vpop.permute.xlu0 %292
  %v295 = vmul.f32 %v290, %v293
  %297 = vrot.lane.b32.xlu0 %v295, 112
  %v298 = vpop.permute.xlu0 %297
  %v299 = vsel %vm51, %v298, 0
  %301 = vmatprep.subr.mxu0 0.0
  %302 = vmatpush1.msra.mxu0 0.0
  %303 = vmatprep.subr.mxu0 0.0
  %304 = vmatpush1.msra.mxu0 0.0
  %305 = vmatprep.subr.mxu0 0.0
  %306 = vmatpush1.msra.mxu0 0.0
  %307 = vmatprep.subr.mxu0 0.0
  %308 = vmatpush1.msra.mxu0 0.0
  %309 = vmatprep.subr.mxu0 0.0
  %310 = vmatpush1.msra.mxu0 0.0
  %311 = vmatprep.subr.mxu0 0.0
  %312 = vmatpush1.msra.mxu0 0.0
  %313 = vmatprep.subr.mxu0 0.0
  %314 = vmatpush1.msra.mxu0 0.0
  %315 = vmatprep.subr.mxu0 0.0
  %316 = vmatpush1.msra.mxu0 0.0
  %317 = vmatprep.subr.mxu0 0.0
  %318 = vmatpush1.msra.mxu0 0.0
  %319 = vmatprep.subr.mxu0 0.0
  %320 = vmatpush1.msra.mxu0 0.0
  %321 = vmatprep.subr.mxu0 0.0
  %322 = vmatpush1.msra.mxu0 0.0
  %323 = vmatprep.subr.mxu0 0.0
  %324 = vmatpush1.msra.mxu0 0.0
  %325 = vmatprep.subr.mxu0 0.0
  %326 = vmatpush1.msra.mxu0 0.0
  %327 = vmatprep.subr.mxu0 0.0
  %328 = vmatpush1.msra.mxu0 0.0
  %329 = vmatprep.subr.mxu0 0.0
  %330 = vmatpush1.msra.mxu0 0.0
  %331 = vmatprep.subr.mxu0 0.0
  %332 = vmatpush1.msra.mxu0 %v19
  %333 = vmatprep.subr.mxu0 0.0
  %334 = vmatpush2.msra.mxu0 0.0
  %335 = vmatprep.subr.mxu0 0.0
  %336 = vmatpush2.msra.mxu0 0.0
  %337 = vmatprep.subr.mxu0 0.0
  %338 = vmatpush2.msra.mxu0 0.0
  %339 = vmatprep.subr.mxu0 0.0
  %340 = vmatpush2.msra.mxu0 0.0
  %341 = vmatprep.subr.mxu0 0.0
  %342 = vmatpush2.msra.mxu0 0.0
  %343 = vmatprep.subr.mxu0 0.0
  %344 = vmatpush2.msra.mxu0 0.0
  %345 = vmatprep.subr.mxu0 0.0
  %346 = vmatpush2.msra.mxu0 0.0
  %347 = vmatprep.subr.mxu0 0.0
  %348 = vmatpush2.msra.mxu0 0.0
  %349 = vmatprep.subr.mxu0 0.0
  %350 = vmatpush2.msra.mxu0 0.0
  %351 = vmatprep.subr.mxu0 0.0
  %352 = vmatpush2.msra.mxu0 0.0
  %353 = vmatprep.subr.mxu0 0.0
  %354 = vmatpush2.msra.mxu0 0.0
  %355 = vmatprep.subr.mxu0 0.0
  %356 = vmatpush2.msra.mxu0 0.0
  %357 = vmatprep.subr.mxu0 0.0
  %358 = vmatpush2.msra.mxu0 0.0
  %359 = vmatprep.subr.mxu0 0.0
  %360 = vmatpush2.msra.mxu0 0.0
  %361 = vmatprep.subr.mxu0 0.0
  %362 = vmatpush2.msra.mxu0 0.0
  %363 = vmatprep.subr.mxu0 0.0
  %364 = vmatpush2.msra.mxu0 0.0
  %365 = vmatprep.mubr.f32.mxu0 0.0
  %366 = vmatmul.mubr.f32.gmra.mxu0 %v299
  %v367 = vpop.f32.mrf.mxu0
  %v368 = vadd.f32 %v30, %v367
  %v369 = vpop.f32.mrf.mxu0
  %370 = vdwg.mxu0
  %372 = vrot.lane.b32.xlu0 %v290, 112
  %v373 = vpop.permute.xlu0 %372
  %v374 = vsel %vm51, %v373, 0
  %376 = vmatprep.subr.mxu0 0.0
  %377 = vmatpush1.msra.mxu0 0.0
  %378 = vmatprep.subr.mxu0 0.0
  %379 = vmatpush1.msra.mxu0 0.0
  %380 = vmatprep.subr.mxu0 0.0
  %381 = vmatpush1.msra.mxu0 0.0
  %382 = vmatprep.subr.mxu0 0.0
  %383 = vmatpush1.msra.mxu0 0.0
  %384 = vmatprep.subr.mxu0 0.0
  %385 = vmatpush1.msra.mxu0 0.0
  %386 = vmatprep.subr.mxu0 0.0
  %387 = vmatpush1.msra.mxu0 0.0
  %388 = vmatprep.subr.mxu0 0.0
  %389 = vmatpush1.msra.mxu0 0.0
  %390 = vmatprep.subr.mxu0 0.0
  %391 = vmatpush1.msra.mxu0 0.0
  %392 = vmatprep.subr.mxu0 0.0
  %393 = vmatpush1.msra.mxu0 0.0
  %394 = vmatprep.subr.mxu0 0.0
  %395 = vmatpush1.msra.mxu0 0.0
  %396 = vmatprep.subr.mxu0 0.0
  %397 = vmatpush1.msra.mxu0 0.0
  %398 = vmatprep.subr.mxu0 0.0
  %399 = vmatpush1.msra.mxu0 0.0
  %400 = vmatprep.subr.mxu0 0.0
  %401 = vmatpush1.msra.mxu0 0.0
  %402 = vmatprep.subr.mxu0 0.0
  %403 = vmatpush1.msra.mxu0 0.0
  %404 = vmatprep.subr.mxu0 0.0
  %405 = vmatpush1.msra.mxu0 0.0
  %406 = vmatprep.subr.mxu0 0.0
  %407 = vmatpush1.msra.mxu0 %v18
  %408 = vmatprep.subr.mxu0 0.0
  %409 = vmatpush2.msra.mxu0 0.0
  %410 = vmatprep.subr.mxu0 0.0
  %411 = vmatpush2.msra.mxu0 0.0
  %412 = vmatprep.subr.mxu0 0.0
  %413 = vmatpush2.msra.mxu0 0.0
  %414 = vmatprep.subr.mxu0 0.0
  %415 = vmatpush2.msra.mxu0 0.0
  %416 = vmatprep.subr.mxu0 0.0
  %417 = vmatpush2.msra.mxu0 0.0
  %418 = vmatprep.subr.mxu0 0.0
  %419 = vmatpush2.msra.mxu0 0.0
  %420 = vmatprep.subr.mxu0 0.0
  %421 = vmatpush2.msra.mxu0 0.0
  %422 = vmatprep.subr.mxu0 0.0
  %423 = vmatpush2.msra.mxu0 0.0
  %424 = vmatprep.subr.mxu0 0.0
  %425 = vmatpush2.msra.mxu0 0.0
  %426 = vmatprep.subr.mxu0 0.0
  %427 = vmatpush2.msra.mxu0 0.0
  %428 = vmatprep.subr.mxu0 0.0
  %429 = vmatpush2.msra.mxu0 0.0
  %430 = vmatprep.subr.mxu0 0.0
  %431 = vmatpush2.msra.mxu0 0.0
  %432 = vmatprep.subr.mxu0 0.0
  %433 = vmatpush2.msra.mxu0 0.0
  %434 = vmatprep.subr.mxu0 0.0
  %435 = vmatpush2.msra.mxu0 0.0
  %436 = vmatprep.subr.mxu0 0.0
  %437 = vmatpush2.msra.mxu0 0.0
  %438 = vmatprep.subr.mxu0 0.0
  %439 = vmatpush2.msra.mxu0 0.0
  %440 = vmatprep.mubr.f32.mxu0 0.0
  %441 = vmatmul.mubr.f32.gmra.mxu0 %v374
  %v442 = vpop.f32.mrf.mxu0
  %v443 = vadd.f32 %v34, %v442
  %v444 = vpop.f32.mrf.mxu0
  %445 = vdwg.mxu0
  %v446 = vadd.f32 %v148, %v443
  %v447 = vxor.u32 %v446, 2147483648
  %v448 = vmul.f32 %v447, 1.442695
  %v449 = vpow.pop %v448
  %v450 = vadd.f32 %v449, 1.0
  %v451 = vrcp.pop %v450
  %v452 = vmul.f32 1.0, %v451
  %454 = vrot.lane.b32.xlu0 %v443, 112
  %v455 = vpop.permute.xlu0 %454
  %v457 = vmul.f32 %v452, %v455
  %459 = vrot.lane.b32.xlu0 %v457, 16
  %v460 = vpop.permute.xlu0 %459
  %v462 = vadd.f32 %v148, %v460
  %v463 = vtanh.pop %v462
  %v464 = vsub.f32 %v290, %v463
  %466 = vrot.lane.b32.xlu0 %v464, 120
  %v467 = vpop.permute.xlu0 %466
  %v469 = vmul.f32 %v452, %v467
  %471 = vrot.lane.b32.xlu0 %v469, 8
  %v472 = vpop.permute.xlu0 %471
  %v474 = vadd.f32 %v463, %v472
  %476 = vrot.lane.b32.xlu0 %v182, 16
  %v477 = vpop.permute.xlu0 %476
  %v479 = vmul.f32 %v474, %v477
  %481 = vrot.lane.b32.xlu0 %v479, 112
  %v482 = vpop.permute.xlu0 %481
  %v483 = vsel %vm51, %v482, 0
  %485 = vmatprep.subr.mxu0 0.0
  %486 = vmatpush1.msra.mxu0 0.0
  %487 = vmatprep.subr.mxu0 0.0
  %488 = vmatpush1.msra.mxu0 0.0
  %489 = vmatprep.subr.mxu0 0.0
  %490 = vmatpush1.msra.mxu0 0.0
  %491 = vmatprep.subr.mxu0 0.0
  %492 = vmatpush1.msra.mxu0 0.0
  %493 = vmatprep.subr.mxu0 0.0
  %494 = vmatpush1.msra.mxu0 0.0
  %495 = vmatprep.subr.mxu0 0.0
  %496 = vmatpush1.msra.mxu0 0.0
  %497 = vmatprep.subr.mxu0 0.0
  %498 = vmatpush1.msra.mxu0 0.0
  %499 = vmatprep.subr.mxu0 0.0
  %500 = vmatpush1.msra.mxu0 0.0
  %501 = vmatprep.subr.mxu0 0.0
  %502 = vmatpush1.msra.mxu0 0.0
  %503 = vmatprep.subr.mxu0 0.0
  %504 = vmatpush1.msra.mxu0 0.0
  %505 = vmatprep.subr.mxu0 0.0
  %506 = vmatpush1.msra.mxu0 0.0
  %507 = vmatprep.subr.mxu0 0.0
  %508 = vmatpush1.msra.mxu0 0.0
  %509 = vmatprep.subr.mxu0 0.0
  %510 = vmatpush1.msra.mxu0 0.0
  %511 = vmatprep.subr.mxu0 0.0
  %512 = vmatpush1.msra.mxu0 0.0
  %513 = vmatprep.subr.mxu0 0.0
  %514 = vmatpush1.msra.mxu0 0.0
  %515 = vmatprep.subr.mxu0 0.0
  %516 = vmatpush1.msra.mxu0 %v19
  %517 = vmatprep.subr.mxu0 0.0
  %518 = vmatpush2.msra.mxu0 0.0
  %519 = vmatprep.subr.mxu0 0.0
  %520 = vmatpush2.msra.mxu0 0.0
  %521 = vmatprep.subr.mxu0 0.0
  %522 = vmatpush2.msra.mxu0 0.0
  %523 = vmatprep.subr.mxu0 0.0
  %524 = vmatpush2.msra.mxu0 0.0
  %525 = vmatprep.subr.mxu0 0.0
  %526 = vmatpush2.msra.mxu0 0.0
  %527 = vmatprep.subr.mxu0 0.0
  %528 = vmatpush2.msra.mxu0 0.0
  %529 = vmatprep.subr.mxu0 0.0
  %530 = vmatpush2.msra.mxu0 0.0
  %531 = vmatprep.subr.mxu0 0.0
  %532 = vmatpush2.msra.mxu0 0.0
  %533 = vmatprep.subr.mxu0 0.0
  %534 = vmatpush2.msra.mxu0 0.0
  %535 = vmatprep.subr.mxu0 0.0
  %536 = vmatpush2.msra.mxu0 0.0
  %537 = vmatprep.subr.mxu0 0.0
  %538 = vmatpush2.msra.mxu0 0.0
  %539 = vmatprep.subr.mxu0 0.0
  %540 = vmatpush2.msra.mxu0 0.0
  %541 = vmatprep.subr.mxu0 0.0
  %542 = vmatpush2.msra.mxu0 0.0
  %543 = vmatprep.subr.mxu0 0.0
  %544 = vmatpush2.msra.mxu0 0.0
  %545 = vmatprep.subr.mxu0 0.0
  %546 = vmatpush2.msra.mxu0 0.0
  %547 = vmatprep.subr.mxu0 0.0
  %548 = vmatpush2.msra.mxu0 0.0
  %549 = vmatprep.mubr.f32.mxu0 0.0
  %550 = vmatmul.mubr.f32.gmra.mxu0 %v483
  %v551 = vpop.f32.mrf.mxu0
  %v552 = vadd.f32 %v30, %v551
  %v553 = vpop.f32.mrf.mxu0
  %554 = vdwg.mxu0
  %556 = vrot.lane.b32.xlu0 %v474, 112
  %v557 = vpop.permute.xlu0 %556
  %v558 = vsel %vm51, %v557, 0
  %560 = vmatprep.subr.mxu0 0.0
  %561 = vmatpush1.msra.mxu0 0.0
  %562 = vmatprep.subr.mxu0 0.0
  %563 = vmatpush1.msra.mxu0 0.0
  %564 = vmatprep.subr.mxu0 0.0
  %565 = vmatpush1.msra.mxu0 0.0
  %566 = vmatprep.subr.mxu0 0.0
  %567 = vmatpush1.msra.mxu0 0.0
  %568 = vmatprep.subr.mxu0 0.0
  %569 = vmatpush1.msra.mxu0 0.0
  %570 = vmatprep.subr.mxu0 0.0
  %571 = vmatpush1.msra.mxu0 0.0
  %572 = vmatprep.subr.mxu0 0.0
  %573 = vmatpush1.msra.mxu0 0.0
  %574 = vmatprep.subr.mxu0 0.0
  %575 = vmatpush1.msra.mxu0 0.0
  %576 = vmatprep.subr.mxu0 0.0
  %577 = vmatpush1.msra.mxu0 0.0
  %578 = vmatprep.subr.mxu0 0.0
  %579 = vmatpush1.msra.mxu0 0.0
  %580 = vmatprep.subr.mxu0 0.0
  %581 = vmatpush1.msra.mxu0 0.0
  %582 = vmatprep.subr.mxu0 0.0
  %583 = vmatpush1.msra.mxu0 0.0
  %584 = vmatprep.subr.mxu0 0.0
  %585 = vmatpush1.msra.mxu0 0.0
  %586 = vmatprep.subr.mxu0 0.0
  %587 = vmatpush1.msra.mxu0 0.0
  %588 = vmatprep.subr.mxu0 0.0
  %589 = vmatpush1.msra.mxu0 0.0
  %590 = vmatprep.subr.mxu0 0.0
  %591 = vmatpush1.msra.mxu0 %v18
  %592 = vmatprep.subr.mxu0 0.0
  %593 = vmatpush2.msra.mxu0 0.0
  %594 = vmatprep.subr.mxu0 0.0
  %595 = vmatpush2.msra.mxu0 0.0
  %596 = vmatprep.subr.mxu0 0.0
  %597 = vmatpush2.msra.mxu0 0.0
  %598 = vmatprep.subr.mxu0 0.0
  %599 = vmatpush2.msra.mxu0 0.0
  %600 = vmatprep.subr.mxu0 0.0
  %601 = vmatpush2.msra.mxu0 0.0
  %602 = vmatprep.subr.mxu0 0.0
  %603 = vmatpush2.msra.mxu0 0.0
  %604 = vmatprep.subr.mxu0 0.0
  %605 = vmatpush2.msra.mxu0 0.0
  %606 = vmatprep.subr.mxu0 0.0
  %607 = vmatpush2.msra.mxu0 0.0
  %608 = vmatprep.subr.mxu0 0.0
  %609 = vmatpush2.msra.mxu0 0.0
  %610 = vmatprep.subr.mxu0 0.0
  %611 = vmatpush2.msra.mxu0 0.0
  %612 = vmatprep.subr.mxu0 0.0
  %613 = vmatpush2.msra.mxu0 0.0
  %614 = vmatprep.subr.mxu0 0.0
  %615 = vmatpush2.msra.mxu0 0.0
  %616 = vmatprep.subr.mxu0 0.0
  %617 = vmatpush2.msra.mxu0 0.0
  %618 = vmatprep.subr.mxu0 0.0
  %619 = vmatpush2.msra.mxu0 0.0
  %620 = vmatprep.subr.mxu0 0.0
  %621 = vmatpush2.msra.mxu0 0.0
  %622 = vmatprep.subr.mxu0 0.0
  %623 = vmatpush2.msra.mxu0 0.0
  %624 = vmatprep.mubr.f32.mxu0 0.0
  %625 = vmatmul.mubr.f32.gmra.mxu0 %v558
  %v626 = vpop.f32.mrf.mxu0
  %v627 = vadd.f32 %v34, %v626
  %v628 = vpop.f32.mrf.mxu0
  %629 = vdwg.mxu0
  %v630 = vadd.f32 %v153, %v627
  %v631 = vxor.u32 %v630, 2147483648
  %v632 = vmul.f32 %v631, 1.442695
  %v633 = vpow.pop %v632
  %v634 = vadd.f32 %v633, 1.0
  %v635 = vrcp.pop %v634
  %v636 = vmul.f32 1.0, %v635
  %638 = vrot.lane.b32.xlu0 %v627, 112
  %v639 = vpop.permute.xlu0 %638
  %v641 = vmul.f32 %v636, %v639
  %643 = vrot.lane.b32.xlu0 %v641, 16
  %v644 = vpop.permute.xlu0 %643
  %v646 = vadd.f32 %v153, %v644
  %v647 = vtanh.pop %v646
  %v648 = vsub.f32 %v474, %v647
  %650 = vrot.lane.b32.xlu0 %v648, 120
  %v651 = vpop.permute.xlu0 %650
  %v653 = vmul.f32 %v636, %v651
  %655 = vrot.lane.b32.xlu0 %v653, 8
  %v656 = vpop.permute.xlu0 %655
  %v658 = vadd.f32 %v647, %v656
  %660 = vrot.lane.b32.xlu0 %v183, 16
  %v661 = vpop.permute.xlu0 %660
  %v663 = vmul.f32 %v658, %v661
  %665 = vrot.lane.b32.xlu0 %v663, 112
  %v666 = vpop.permute.xlu0 %665
  %v667 = vsel %vm51, %v666, 0
  %669 = vmatprep.subr.mxu0 0.0
  %670 = vmatpush1.msra.mxu0 0.0
  %671 = vmatprep.subr.mxu0 0.0
  %672 = vmatpush1.msra.mxu0 0.0
  %673 = vmatprep.subr.mxu0 0.0
  %674 = vmatpush1.msra.mxu0 0.0
  %675 = vmatprep.subr.mxu0 0.0
  %676 = vmatpush1.msra.mxu0 0.0
  %677 = vmatprep.subr.mxu0 0.0
  %678 = vmatpush1.msra.mxu0 0.0
  %679 = vmatprep.subr.mxu0 0.0
  %680 = vmatpush1.msra.mxu0 0.0
  %681 = vmatprep.subr.mxu0 0.0
  %682 = vmatpush1.msra.mxu0 0.0
  %683 = vmatprep.subr.mxu0 0.0
  %684 = vmatpush1.msra.mxu0 0.0
  %685 = vmatprep.subr.mxu0 0.0
  %686 = vmatpush1.msra.mxu0 0.0
  %687 = vmatprep.subr.mxu0 0.0
  %688 = vmatpush1.msra.mxu0 0.0
  %689 = vmatprep.subr.mxu0 0.0
  %690 = vmatpush1.msra.mxu0 0.0
  %691 = vmatprep.subr.mxu0 0.0
  %692 = vmatpush1.msra.mxu0 0.0
  %693 = vmatprep.subr.mxu0 0.0
  %694 = vmatpush1.msra.mxu0 0.0
  %695 = vmatprep.subr.mxu0 0.0
  %696 = vmatpush1.msra.mxu0 0.0
  %697 = vmatprep.subr.mxu0 0.0
  %698 = vmatpush1.msra.mxu0 0.0
  %699 = vmatprep.subr.mxu0 0.0
  %700 = vmatpush1.msra.mxu0 %v19
  %701 = vmatprep.subr.mxu0 0.0
  %702 = vmatpush2.msra.mxu0 0.0
  %703 = vmatprep.subr.mxu0 0.0
  %704 = vmatpush2.msra.mxu0 0.0
  %705 = vmatprep.subr.mxu0 0.0
  %706 = vmatpush2.msra.mxu0 0.0
  %707 = vmatprep.subr.mxu0 0.0
  %708 = vmatpush2.msra.mxu0 0.0
  %709 = vmatprep.subr.mxu0 0.0
  %710 = vmatpush2.msra.mxu0 0.0
  %711 = vmatprep.subr.mxu0 0.0
  %712 = vmatpush2.msra.mxu0 0.0
  %713 = vmatprep.subr.mxu0 0.0
  %714 = vmatpush2.msra.mxu0 0.0
  %715 = vmatprep.subr.mxu0 0.0
  %716 = vmatpush2.msra.mxu0 0.0
  %717 = vmatprep.subr.mxu0 0.0
  %718 = vmatpush2.msra.mxu0 0.0
  %719 = vmatprep.subr.mxu0 0.0
  %720 = vmatpush2.msra.mxu0 0.0
  %721 = vmatprep.subr.mxu0 0.0
  %722 = vmatpush2.msra.mxu0 0.0
  %723 = vmatprep.subr.mxu0 0.0
  %724 = vmatpush2.msra.mxu0 0.0
  %725 = vmatprep.subr.mxu0 0.0
  %726 = vmatpush2.msra.mxu0 0.0
  %727 = vmatprep.subr.mxu0 0.0
  %728 = vmatpush2.msra.mxu0 0.0
  %729 = vmatprep.subr.mxu0 0.0
  %730 = vmatpush2.msra.mxu0 0.0
  %731 = vmatprep.subr.mxu0 0.0
  %732 = vmatpush2.msra.mxu0 0.0
  %733 = vmatprep.mubr.f32.mxu0 0.0
  %734 = vmatmul.mubr.f32.gmra.mxu0 %v667
  %v735 = vpop.f32.mrf.mxu0
  %v736 = vadd.f32 %v30, %v735
  %v737 = vpop.f32.mrf.mxu0
  %738 = vdwg.mxu0
  %740 = vrot.lane.b32.xlu0 %v658, 112
  %v741 = vpop.permute.xlu0 %740
  %v742 = vsel %vm51, %v741, 0
  %744 = vmatprep.subr.mxu0 0.0
  %745 = vmatpush1.msra.mxu0 0.0
  %746 = vmatprep.subr.mxu0 0.0
  %747 = vmatpush1.msra.mxu0 0.0
  %748 = vmatprep.subr.mxu0 0.0
  %749 = vmatpush1.msra.mxu0 0.0
  %750 = vmatprep.subr.mxu0 0.0
  %751 = vmatpush1.msra.mxu0 0.0
  %752 = vmatprep.subr.mxu0 0.0
  %753 = vmatpush1.msra.mxu0 0.0
  %754 = vmatprep.subr.mxu0 0.0
  %755 = vmatpush1.msra.mxu0 0.0
  %756 = vmatprep.subr.mxu0 0.0
  %757 = vmatpush1.msra.mxu0 0.0
  %758 = vmatprep.subr.mxu0 0.0
  %759 = vmatpush1.msra.mxu0 0.0
  %760 = vmatprep.subr.mxu0 0.0
  %761 = vmatpush1.msra.mxu0 0.0
  %762 = vmatprep.subr.mxu0 0.0
  %763 = vmatpush1.msra.mxu0 0.0
  %764 = vmatprep.subr.mxu0 0.0
  %765 = vmatpush1.msra.mxu0 0.0
  %766 = vmatprep.subr.mxu0 0.0
  %767 = vmatpush1.msra.mxu0 0.0
  %768 = vmatprep.subr.mxu0 0.0
  %769 = vmatpush1.msra.mxu0 0.0
  %770 = vmatprep.subr.mxu0 0.0
  %771 = vmatpush1.msra.mxu0 0.0
  %772 = vmatprep.subr.mxu0 0.0
  %773 = vmatpush1.msra.mxu0 0.0
  %774 = vmatprep.subr.mxu0 0.0
  %775 = vmatpush1.msra.mxu0 %v18
  %776 = vmatprep.subr.mxu0 0.0
  %777 = vmatpush2.msra.mxu0 0.0
  %778 = vmatprep.subr.mxu0 0.0
  %779 = vmatpush2.msra.mxu0 0.0
  %780 = vmatprep.subr.mxu0 0.0
  %781 = vmatpush2.msra.mxu0 0.0
  %782 = vmatprep.subr.mxu0 0.0
  %783 = vmatpush2.msra.mxu0 0.0
  %784 = vmatprep.subr.mxu0 0.0
  %785 = vmatpush2.msra.mxu0 0.0
  %786 = vmatprep.subr.mxu0 0.0
  %787 = vmatpush2.msra.mxu0 0.0
  %788 = vmatprep.subr.mxu0 0.0
  %789 = vmatpush2.msra.mxu0 0.0
  %790 = vmatprep.subr.mxu0 0.0
  %791 = vmatpush2.msra.mxu0 0.0
  %792 = vmatprep.subr.mxu0 0.0
  %793 = vmatpush2.msra.mxu0 0.0
  %794 = vmatprep.subr.mxu0 0.0
  %795 = vmatpush2.msra.mxu0 0.0
  %796 = vmatprep.subr.mxu0 0.0
  %797 = vmatpush2.msra.mxu0 0.0
  %798 = vmatprep.subr.mxu0 0.0
  %799 = vmatpush2.msra.mxu0 0.0
  %800 = vmatprep.subr.mxu0 0.0
  %801 = vmatpush2.msra.mxu0 0.0
  %802 = vmatprep.subr.mxu0 0.0
  %803 = vmatpush2.msra.mxu0 0.0
  %804 = vmatprep.subr.mxu0 0.0
  %805 = vmatpush2.msra.mxu0 0.0
  %806 = vmatprep.subr.mxu0 0.0
  %807 = vmatpush2.msra.mxu0 0.0
  %808 = vmatprep.mubr.f32.mxu0 0.0
  %809 = vmatmul.mubr.f32.gmra.mxu0 %v742
  %v810 = vpop.f32.mrf.mxu0
  %v811 = vadd.f32 %v34, %v810
  %v812 = vpop.f32.mrf.mxu0
  %813 = vdwg.mxu0
  %v814 = vadd.f32 %v158, %v811
  %v815 = vxor.u32 %v814, 2147483648
  %v816 = vmul.f32 %v815, 1.442695
  %v817 = vpow.pop %v816
  %v818 = vadd.f32 %v817, 1.0
  %v819 = vrcp.pop %v818
  %v820 = vmul.f32 1.0, %v819
  %822 = vrot.lane.b32.xlu0 %v811, 112
  %v823 = vpop.permute.xlu0 %822
  %v825 = vmul.f32 %v820, %v823
  %827 = vrot.lane.b32.xlu0 %v825, 16
  %v828 = vpop.permute.xlu0 %827
  %v830 = vadd.f32 %v158, %v828
  %v831 = vtanh.pop %v830
  %v832 = vsub.f32 %v658, %v831
  %834 = vrot.lane.b32.xlu0 %v832, 120
  %v835 = vpop.permute.xlu0 %834
  %v837 = vmul.f32 %v820, %v835
  %839 = vrot.lane.b32.xlu0 %v837, 8
  %v840 = vpop.permute.xlu0 %839
  %v842 = vadd.f32 %v831, %v840
  %844 = vrot.lane.b32.xlu0 %v184, 16
  %v845 = vpop.permute.xlu0 %844
  %v847 = vmul.f32 %v842, %v845
  %849 = vrot.lane.b32.xlu0 %v847, 112
  %v850 = vpop.permute.xlu0 %849
  %v851 = vsel %vm51, %v850, 0
  %853 = vmatprep.subr.mxu0 0.0
  %854 = vmatpush1.msra.mxu0 0.0
  %855 = vmatprep.subr.mxu0 0.0
  %856 = vmatpush1.msra.mxu0 0.0
  %857 = vmatprep.subr.mxu0 0.0
  %858 = vmatpush1.msra.mxu0 0.0
  %859 = vmatprep.subr.mxu0 0.0
  %860 = vmatpush1.msra.mxu0 0.0
  %861 = vmatprep.subr.mxu0 0.0
  %862 = vmatpush1.msra.mxu0 0.0
  %863 = vmatprep.subr.mxu0 0.0
  %864 = vmatpush1.msra.mxu0 0.0
  %865 = vmatprep.subr.mxu0 0.0
  %866 = vmatpush1.msra.mxu0 0.0
  %867 = vmatprep.subr.mxu0 0.0
  %868 = vmatpush1.msra.mxu0 0.0
  %869 = vmatprep.subr.mxu0 0.0
  %870 = vmatpush1.msra.mxu0 0.0
  %871 = vmatprep.subr.mxu0 0.0
  %872 = vmatpush1.msra.mxu0 0.0
  %873 = vmatprep.subr.mxu0 0.0
  %874 = vmatpush1.msra.mxu0 0.0
  %875 = vmatprep.subr.mxu0 0.0
  %876 = vmatpush1.msra.mxu0 0.0
  %877 = vmatprep.subr.mxu0 0.0
  %878 = vmatpush1.msra.mxu0 0.0
  %879 = vmatprep.subr.mxu0 0.0
  %880 = vmatpush1.msra.mxu0 0.0
  %881 = vmatprep.subr.mxu0 0.0
  %882 = vmatpush1.msra.mxu0 0.0
  %883 = vmatprep.subr.mxu0 0.0
  %884 = vmatpush1.msra.mxu0 %v19
  %885 = vmatprep.subr.mxu0 0.0
  %886 = vmatpush2.msra.mxu0 0.0
  %887 = vmatprep.subr.mxu0 0.0
  %888 = vmatpush2.msra.mxu0 0.0
  %889 = vmatprep.subr.mxu0 0.0
  %890 = vmatpush2.msra.mxu0 0.0
  %891 = vmatprep.subr.mxu0 0.0
  %892 = vmatpush2.msra.mxu0 0.0
  %893 = vmatprep.subr.mxu0 0.0
  %894 = vmatpush2.msra.mxu0 0.0
  %895 = vmatprep.subr.mxu0 0.0
  %896 = vmatpush2.msra.mxu0 0.0
  %897 = vmatprep.subr.mxu0 0.0
  %898 = vmatpush2.msra.mxu0 0.0
  %899 = vmatprep.subr.mxu0 0.0
  %900 = vmatpush2.msra.mxu0 0.0
  %901 = vmatprep.subr.mxu0 0.0
  %902 = vmatpush2.msra.mxu0 0.0
  %903 = vmatprep.subr.mxu0 0.0
  %904 = vmatpush2.msra.mxu0 0.0
  %905 = vmatprep.subr.mxu0 0.0
  %906 = vmatpush2.msra.mxu0 0.0
  %907 = vmatprep.subr.mxu0 0.0
  %908 = vmatpush2.msra.mxu0 0.0
  %909 = vmatprep.subr.mxu0 0.0
  %910 = vmatpush2.msra.mxu0 0.0
  %911 = vmatprep.subr.mxu0 0.0
  %912 = vmatpush2.msra.mxu0 0.0
  %913 = vmatprep.subr.mxu0 0.0
  %914 = vmatpush2.msra.mxu0 0.0
  %915 = vmatprep.subr.mxu0 0.0
  %916 = vmatpush2.msra.mxu0 0.0
  %917 = vmatprep.mubr.f32.mxu0 0.0
  %918 = vmatmul.mubr.f32.gmra.mxu0 %v851
  %v919 = vpop.f32.mrf.mxu0
  %v920 = vadd.f32 %v30, %v919
  %v921 = vpop.f32.mrf.mxu0
  %922 = vdwg.mxu0
  %924 = vrot.lane.b32.xlu0 %v842, 112
  %v925 = vpop.permute.xlu0 %924
  %v926 = vsel %vm51, %v925, 0
  %928 = vmatprep.subr.mxu0 0.0
  %929 = vmatpush1.msra.mxu0 0.0
  %930 = vmatprep.subr.mxu0 0.0
  %931 = vmatpush1.msra.mxu0 0.0
  %932 = vmatprep.subr.mxu0 0.0
  %933 = vmatpush1.msra.mxu0 0.0
  %934 = vmatprep.subr.mxu0 0.0
  %935 = vmatpush1.msra.mxu0 0.0
  %936 = vmatprep.subr.mxu0 0.0
  %937 = vmatpush1.msra.mxu0 0.0
  %938 = vmatprep.subr.mxu0 0.0
  %939 = vmatpush1.msra.mxu0 0.0
  %940 = vmatprep.subr.mxu0 0.0
  %941 = vmatpush1.msra.mxu0 0.0
  %942 = vmatprep.subr.mxu0 0.0
  %943 = vmatpush1.msra.mxu0 0.0
  %944 = vmatprep.subr.mxu0 0.0
  %945 = vmatpush1.msra.mxu0 0.0
  %946 = vmatprep.subr.mxu0 0.0
  %947 = vmatpush1.msra.mxu0 0.0
  %948 = vmatprep.subr.mxu0 0.0
  %949 = vmatpush1.msra.mxu0 0.0
  %950 = vmatprep.subr.mxu0 0.0
  %951 = vmatpush1.msra.mxu0 0.0
  %952 = vmatprep.subr.mxu0 0.0
  %953 = vmatpush1.msra.mxu0 0.0
  %954 = vmatprep.subr.mxu0 0.0
  %955 = vmatpush1.msra.mxu0 0.0
  %956 = vmatprep.subr.mxu0 0.0
  %957 = vmatpush1.msra.mxu0 0.0
  %958 = vmatprep.subr.mxu0 0.0
  %959 = vmatpush1.msra.mxu0 %v18
  %960 = vmatprep.subr.mxu0 0.0
  %961 = vmatpush2.msra.mxu0 0.0
  %962 = vmatprep.subr.mxu0 0.0
  %963 = vmatpush2.msra.mxu0 0.0
  %964 = vmatprep.subr.mxu0 0.0
  %965 = vmatpush2.msra.mxu0 0.0
  %966 = vmatprep.subr.mxu0 0.0
  %967 = vmatpush2.msra.mxu0 0.0
  %968 = vmatprep.subr.mxu0 0.0
  %969 = vmatpush2.msra.mxu0 0.0
  %970 = vmatprep.subr.mxu0 0.0
  %971 = vmatpush2.msra.mxu0 0.0
  %972 = vmatprep.subr.mxu0 0.0
  %973 = vmatpush2.msra.mxu0 0.0
  %974 = vmatprep.subr.mxu0 0.0
  %975 = vmatpush2.msra.mxu0 0.0
  %976 = vmatprep.subr.mxu0 0.0
  %977 = vmatpush2.msra.mxu0 0.0
  %978 = vmatprep.subr.mxu0 0.0
  %979 = vmatpush2.msra.mxu0 0.0
  %980 = vmatprep.subr.mxu0 0.0
  %981 = vmatpush2.msra.mxu0 0.0
  %982 = vmatprep.subr.mxu0 0.0
  %983 = vmatpush2.msra.mxu0 0.0
  %984 = vmatprep.subr.mxu0 0.0
  %985 = vmatpush2.msra.mxu0 0.0
  %986 = vmatprep.subr.mxu0 0.0
  %987 = vmatpush2.msra.mxu0 0.0
  %988 = vmatprep.subr.mxu0 0.0
  %989 = vmatpush2.msra.mxu0 0.0
  %990 = vmatprep.subr.mxu0 0.0
  %991 = vmatpush2.msra.mxu0 0.0
  %992 = vmatprep.mubr.f32.mxu0 0.0
  %993 = vmatmul.mubr.f32.gmra.mxu0 %v926
  %v994 = vpop.f32.mrf.mxu0
  %v995 = vadd.f32 %v34, %v994
  %v996 = vpop.f32.mrf.mxu0
  %997 = vdwg.mxu0
  %v998 = vadd.f32 %v163, %v995
  %v999 = vxor.u32 %v998, 2147483648
  %v1000 = vmul.f32 %v999, 1.442695
  %v1001 = vpow.pop %v1000
  %v1002 = vadd.f32 %v1001, 1.0
  %v1003 = vrcp.pop %v1002
  %v1004 = vmul.f32 1.0, %v1003
  %1006 = vrot.lane.b32.xlu0 %v995, 112
  %v1007 = vpop.permute.xlu0 %1006
  %v1009 = vmul.f32 %v1004, %v1007
  %1011 = vrot.lane.b32.xlu0 %v1009, 16
  %v1012 = vpop.permute.xlu0 %1011
  %v1014 = vadd.f32 %v163, %v1012
  %v1015 = vtanh.pop %v1014
  %v1016 = vsub.f32 %v842, %v1015
  %1018 = vrot.lane.b32.xlu0 %v1016, 120
  %v1019 = vpop.permute.xlu0 %1018
  %v1021 = vmul.f32 %v1004, %v1019
  %1023 = vrot.lane.b32.xlu0 %v1021, 8
  %v1024 = vpop.permute.xlu0 %1023
  %v1026 = vadd.f32 %v1015, %v1024
  %1028 = vrot.lane.b32.xlu0 %v185, 16
  %v1029 = vpop.permute.xlu0 %1028
  %v1031 = vmul.f32 %v1026, %v1029
  %1033 = vrot.lane.b32.xlu0 %v1031, 112
  %v1034 = vpop.permute.xlu0 %1033
  %v1035 = vsel %vm51, %v1034, 0
  %1037 = vmatprep.subr.mxu0 0.0
  %1038 = vmatpush1.msra.mxu0 0.0
  %1039 = vmatprep.subr.mxu0 0.0
  %1040 = vmatpush1.msra.mxu0 0.0
  %1041 = vmatprep.subr.mxu0 0.0
  %1042 = vmatpush1.msra.mxu0 0.0
  %1043 = vmatprep.subr.mxu0 0.0
  %1044 = vmatpush1.msra.mxu0 0.0
  %1045 = vmatprep.subr.mxu0 0.0
  %1046 = vmatpush1.msra.mxu0 0.0
  %1047 = vmatprep.subr.mxu0 0.0
  %1048 = vmatpush1.msra.mxu0 0.0
  %1049 = vmatprep.subr.mxu0 0.0
  %1050 = vmatpush1.msra.mxu0 0.0
  %1051 = vmatprep.subr.mxu0 0.0
  %1052 = vmatpush1.msra.mxu0 0.0
  %1053 = vmatprep.subr.mxu0 0.0
  %1054 = vmatpush1.msra.mxu0 0.0
  %1055 = vmatprep.subr.mxu0 0.0
  %1056 = vmatpush1.msra.mxu0 0.0
  %1057 = vmatprep.subr.mxu0 0.0
  %1058 = vmatpush1.msra.mxu0 0.0
  %1059 = vmatprep.subr.mxu0 0.0
  %1060 = vmatpush1.msra.mxu0 0.0
  %1061 = vmatprep.subr.mxu0 0.0
  %1062 = vmatpush1.msra.mxu0 0.0
  %1063 = vmatprep.subr.mxu0 0.0
  %1064 = vmatpush1.msra.mxu0 0.0
  %1065 = vmatprep.subr.mxu0 0.0
  %1066 = vmatpush1.msra.mxu0 0.0
  %1067 = vmatprep.subr.mxu0 0.0
  %1068 = vmatpush1.msra.mxu0 %v19
  %1069 = vmatprep.subr.mxu0 0.0
  %1070 = vmatpush2.msra.mxu0 0.0
  %1071 = vmatprep.subr.mxu0 0.0
  %1072 = vmatpush2.msra.mxu0 0.0
  %1073 = vmatprep.subr.mxu0 0.0
  %1074 = vmatpush2.msra.mxu0 0.0
  %1075 = vmatprep.subr.mxu0 0.0
  %1076 = vmatpush2.msra.mxu0 0.0
  %1077 = vmatprep.subr.mxu0 0.0
  %1078 = vmatpush2.msra.mxu0 0.0
  %1079 = vmatprep.subr.mxu0 0.0
  %1080 = vmatpush2.msra.mxu0 0.0
  %1081 = vmatprep.subr.mxu0 0.0
  %1082 = vmatpush2.msra.mxu0 0.0
  %1083 = vmatprep.subr.mxu0 0.0
  %1084 = vmatpush2.msra.mxu0 0.0
  %1085 = vmatprep.subr.mxu0 0.0
  %1086 = vmatpush2.msra.mxu0 0.0
  %1087 = vmatprep.subr.mxu0 0.0
  %1088 = vmatpush2.msra.mxu0 0.0
  %1089 = vmatprep.subr.mxu0 0.0
  %1090 = vmatpush2.msra.mxu0 0.0
  %1091 = vmatprep.subr.mxu0 0.0
  %1092 = vmatpush2.msra.mxu0 0.0
  %1093 = vmatprep.subr.mxu0 0.0
  %1094 = vmatpush2.msra.mxu0 0.0
  %1095 = vmatprep.subr.mxu0 0.0
  %1096 = vmatpush2.msra.mxu0 0.0
  %1097 = vmatprep.subr.mxu0 0.0
  %1098 = vmatpush2.msra.mxu0 0.0
  %1099 = vmatprep.subr.mxu0 0.0
  %1100 = vmatpush2.msra.mxu0 0.0
  %1101 = vmatprep.mubr.f32.mxu0 0.0
  %1102 = vmatmul.mubr.f32.gmra.mxu0 %v1035
  %v1103 = vpop.f32.mrf.mxu0
  %v1104 = vadd.f32 %v30, %v1103
  %v1105 = vpop.f32.mrf.mxu0
  %1106 = vdwg.mxu0
  %1108 = vrot.lane.b32.xlu0 %v1026, 112
  %v1109 = vpop.permute.xlu0 %1108
  %v1110 = vsel %vm51, %v1109, 0
  %1112 = vmatprep.subr.mxu0 0.0
  %1113 = vmatpush1.msra.mxu0 0.0
  %1114 = vmatprep.subr.mxu0 0.0
  %1115 = vmatpush1.msra.mxu0 0.0
  %1116 = vmatprep.subr.mxu0 0.0
  %1117 = vmatpush1.msra.mxu0 0.0
  %1118 = vmatprep.subr.mxu0 0.0
  %1119 = vmatpush1.msra.mxu0 0.0
  %1120 = vmatprep.subr.mxu0 0.0
  %1121 = vmatpush1.msra.mxu0 0.0
  %1122 = vmatprep.subr.mxu0 0.0
  %1123 = vmatpush1.msra.mxu0 0.0
  %1124 = vmatprep.subr.mxu0 0.0
  %1125 = vmatpush1.msra.mxu0 0.0
  %1126 = vmatprep.subr.mxu0 0.0
  %1127 = vmatpush1.msra.mxu0 0.0
  %1128 = vmatprep.subr.mxu0 0.0
  %1129 = vmatpush1.msra.mxu0 0.0
  %1130 = vmatprep.subr.mxu0 0.0
  %1131 = vmatpush1.msra.mxu0 0.0
  %1132 = vmatprep.subr.mxu0 0.0
  %1133 = vmatpush1.msra.mxu0 0.0
  %1134 = vmatprep.subr.mxu0 0.0
  %1135 = vmatpush1.msra.mxu0 0.0
  %1136 = vmatprep.subr.mxu0 0.0
  %1137 = vmatpush1.msra.mxu0 0.0
  %1138 = vmatprep.subr.mxu0 0.0
  %1139 = vmatpush1.msra.mxu0 0.0
  %1140 = vmatprep.subr.mxu0 0.0
  %1141 = vmatpush1.msra.mxu0 0.0
  %1142 = vmatprep.subr.mxu0 0.0
  %1143 = vmatpush1.msra.mxu0 %v18
  %1144 = vmatprep.subr.mxu0 0.0
  %1145 = vmatpush2.msra.mxu0 0.0
  %1146 = vmatprep.subr.mxu0 0.0
  %1147 = vmatpush2.msra.mxu0 0.0
  %1148 = vmatprep.subr.mxu0 0.0
  %1149 = vmatpush2.msra.mxu0 0.0
  %1150 = vmatprep.subr.mxu0 0.0
  %1151 = vmatpush2.msra.mxu0 0.0
  %1152 = vmatprep.subr.mxu0 0.0
  %1153 = vmatpush2.msra.mxu0 0.0
  %1154 = vmatprep.subr.mxu0 0.0
  %1155 = vmatpush2.msra.mxu0 0.0
  %1156 = vmatprep.subr.mxu0 0.0
  %1157 = vmatpush2.msra.mxu0 0.0
  %1158 = vmatprep.subr.mxu0 0.0
  %1159 = vmatpush2.msra.mxu0 0.0
  %1160 = vmatprep.subr.mxu0 0.0
  %1161 = vmatpush2.msra.mxu0 0.0
  %1162 = vmatprep.subr.mxu0 0.0
  %1163 = vmatpush2.msra.mxu0 0.0
  %1164 = vmatprep.subr.mxu0 0.0
  %1165 = vmatpush2.msra.mxu0 0.0
  %1166 = vmatprep.subr.mxu0 0.0
  %1167 = vmatpush2.msra.mxu0 0.0
  %1168 = vmatprep.subr.mxu0 0.0
  %1169 = vmatpush2.msra.mxu0 0.0
  %1170 = vmatprep.subr.mxu0 0.0
  %1171 = vmatpush2.msra.mxu0 0.0
  %1172 = vmatprep.subr.mxu0 0.0
  %1173 = vmatpush2.msra.mxu0 0.0
  %1174 = vmatprep.subr.mxu0 0.0
  %1175 = vmatpush2.msra.mxu0 0.0
  %1176 = vmatprep.mubr.f32.mxu0 0.0
  %1177 = vmatmul.mubr.f32.gmra.mxu0 %v1110
  %v1178 = vpop.f32.mrf.mxu0
  %v1179 = vadd.f32 %v34, %v1178
  %v1180 = vpop.f32.mrf.mxu0
  %1181 = vdwg.mxu0
  %v1182 = vadd.f32 %v168, %v1179
  %v1183 = vxor.u32 %v1182, 2147483648
  %v1184 = vmul.f32 %v1183, 1.442695
  %v1185 = vpow.pop %v1184
  %v1186 = vadd.f32 %v1185, 1.0
  %v1187 = vrcp.pop %v1186
  %v1188 = vmul.f32 1.0, %v1187
  %1190 = vrot.lane.b32.xlu0 %v1179, 112
  %v1191 = vpop.permute.xlu0 %1190
  %v1193 = vmul.f32 %v1188, %v1191
  %1195 = vrot.lane.b32.xlu0 %v1193, 16
  %v1196 = vpop.permute.xlu0 %1195
  %v1198 = vadd.f32 %v168, %v1196
  %v1199 = vtanh.pop %v1198
  %v1200 = vsub.f32 %v1026, %v1199
  %1202 = vrot.lane.b32.xlu0 %v1200, 120
  %v1203 = vpop.permute.xlu0 %1202
  %v1205 = vmul.f32 %v1188, %v1203
  %1207 = vrot.lane.b32.xlu0 %v1205, 8
  %v1208 = vpop.permute.xlu0 %1207
  %v1210 = vadd.f32 %v1199, %v1208
  %1212 = vrot.lane.b32.xlu0 %v186, 16
  %v1213 = vpop.permute.xlu0 %1212
  %v1215 = vmul.f32 %v1210, %v1213
  %1217 = vrot.lane.b32.xlu0 %v1215, 112
  %v1218 = vpop.permute.xlu0 %1217
  %v1219 = vsel %vm51, %v1218, 0
  %1221 = vmatprep.subr.mxu0 0.0
  %1222 = vmatpush1.msra.mxu0 0.0
  %1223 = vmatprep.subr.mxu0 0.0
  %1224 = vmatpush1.msra.mxu0 0.0
  %1225 = vmatprep.subr.mxu0 0.0
  %1226 = vmatpush1.msra.mxu0 0.0
  %1227 = vmatprep.subr.mxu0 0.0
  %1228 = vmatpush1.msra.mxu0 0.0
  %1229 = vmatprep.subr.mxu0 0.0
  %1230 = vmatpush1.msra.mxu0 0.0
  %1231 = vmatprep.subr.mxu0 0.0
  %1232 = vmatpush1.msra.mxu0 0.0
  %1233 = vmatprep.subr.mxu0 0.0
  %1234 = vmatpush1.msra.mxu0 0.0
  %1235 = vmatprep.subr.mxu0 0.0
  %1236 = vmatpush1.msra.mxu0 0.0
  %1237 = vmatprep.subr.mxu0 0.0
  %1238 = vmatpush1.msra.mxu0 0.0
  %1239 = vmatprep.subr.mxu0 0.0
  %1240 = vmatpush1.msra.mxu0 0.0
  %1241 = vmatprep.subr.mxu0 0.0
  %1242 = vmatpush1.msra.mxu0 0.0
  %1243 = vmatprep.subr.mxu0 0.0
  %1244 = vmatpush1.msra.mxu0 0.0
  %1245 = vmatprep.subr.mxu0 0.0
  %1246 = vmatpush1.msra.mxu0 0.0
  %1247 = vmatprep.subr.mxu0 0.0
  %1248 = vmatpush1.msra.mxu0 0.0
  %1249 = vmatprep.subr.mxu0 0.0
  %1250 = vmatpush1.msra.mxu0 0.0
  %1251 = vmatprep.subr.mxu0 0.0
  %1252 = vmatpush1.msra.mxu0 %v19
  %1253 = vmatprep.subr.mxu0 0.0
  %1254 = vmatpush2.msra.mxu0 0.0
  %1255 = vmatprep.subr.mxu0 0.0
  %1256 = vmatpush2.msra.mxu0 0.0
  %1257 = vmatprep.subr.mxu0 0.0
  %1258 = vmatpush2.msra.mxu0 0.0
  %1259 = vmatprep.subr.mxu0 0.0
  %1260 = vmatpush2.msra.mxu0 0.0
  %1261 = vmatprep.subr.mxu0 0.0
  %1262 = vmatpush2.msra.mxu0 0.0
  %1263 = vmatprep.subr.mxu0 0.0
  %1264 = vmatpush2.msra.mxu0 0.0
  %1265 = vmatprep.subr.mxu0 0.0
  %1266 = vmatpush2.msra.mxu0 0.0
  %1267 = vmatprep.subr.mxu0 0.0
  %1268 = vmatpush2.msra.mxu0 0.0
  %1269 = vmatprep.subr.mxu0 0.0
  %1270 = vmatpush2.msra.mxu0 0.0
  %1271 = vmatprep.subr.mxu0 0.0
  %1272 = vmatpush2.msra.mxu0 0.0
  %1273 = vmatprep.subr.mxu0 0.0
  %1274 = vmatpush2.msra.mxu0 0.0
  %1275 = vmatprep.subr.mxu0 0.0
  %1276 = vmatpush2.msra.mxu0 0.0
  %1277 = vmatprep.subr.mxu0 0.0
  %1278 = vmatpush2.msra.mxu0 0.0
  %1279 = vmatprep.subr.mxu0 0.0
  %1280 = vmatpush2.msra.mxu0 0.0
  %1281 = vmatprep.subr.mxu0 0.0
  %1282 = vmatpush2.msra.mxu0 0.0
  %1283 = vmatprep.subr.mxu0 0.0
  %1284 = vmatpush2.msra.mxu0 0.0
  %1285 = vmatprep.mubr.f32.mxu0 0.0
  %1286 = vmatmul.mubr.f32.gmra.mxu0 %v1219
  %v1287 = vpop.f32.mrf.mxu0
  %v1288 = vadd.f32 %v30, %v1287
  %v1289 = vpop.f32.mrf.mxu0
  %1290 = vdwg.mxu0
  %1292 = vrot.lane.b32.xlu0 %v1210, 112
  %v1293 = vpop.permute.xlu0 %1292
  %v1294 = vsel %vm51, %v1293, 0
  %1296 = vmatprep.subr.mxu0 0.0
  %1297 = vmatpush1.msra.mxu0 0.0
  %1298 = vmatprep.subr.mxu0 0.0
  %1299 = vmatpush1.msra.mxu0 0.0
  %1300 = vmatprep.subr.mxu0 0.0
  %1301 = vmatpush1.msra.mxu0 0.0
  %1302 = vmatprep.subr.mxu0 0.0
  %1303 = vmatpush1.msra.mxu0 0.0
  %1304 = vmatprep.subr.mxu0 0.0
  %1305 = vmatpush1.msra.mxu0 0.0
  %1306 = vmatprep.subr.mxu0 0.0
  %1307 = vmatpush1.msra.mxu0 0.0
  %1308 = vmatprep.subr.mxu0 0.0
  %1309 = vmatpush1.msra.mxu0 0.0
  %1310 = vmatprep.subr.mxu0 0.0
  %1311 = vmatpush1.msra.mxu0 0.0
  %1312 = vmatprep.subr.mxu0 0.0
  %1313 = vmatpush1.msra.mxu0 0.0
  %1314 = vmatprep.subr.mxu0 0.0
  %1315 = vmatpush1.msra.mxu0 0.0
  %1316 = vmatprep.subr.mxu0 0.0
  %1317 = vmatpush1.msra.mxu0 0.0
  %1318 = vmatprep.subr.mxu0 0.0
  %1319 = vmatpush1.msra.mxu0 0.0
  %1320 = vmatprep.subr.mxu0 0.0
  %1321 = vmatpush1.msra.mxu0 0.0
  %1322 = vmatprep.subr.mxu0 0.0
  %1323 = vmatpush1.msra.mxu0 0.0
  %1324 = vmatprep.subr.mxu0 0.0
  %1325 = vmatpush1.msra.mxu0 0.0
  %1326 = vmatprep.subr.mxu0 0.0
  %1327 = vmatpush1.msra.mxu0 %v18
  %1328 = vmatprep.subr.mxu0 0.0
  %1329 = vmatpush2.msra.mxu0 0.0
  %1330 = vmatprep.subr.mxu0 0.0
  %1331 = vmatpush2.msra.mxu0 0.0
  %1332 = vmatprep.subr.mxu0 0.0
  %1333 = vmatpush2.msra.mxu0 0.0
  %1334 = vmatprep.subr.mxu0 0.0
  %1335 = vmatpush2.msra.mxu0 0.0
  %1336 = vmatprep.subr.mxu0 0.0
  %1337 = vmatpush2.msra.mxu0 0.0
  %1338 = vmatprep.subr.mxu0 0.0
  %1339 = vmatpush2.msra.mxu0 0.0
  %1340 = vmatprep.subr.mxu0 0.0
  %1341 = vmatpush2.msra.mxu0 0.0
  %1342 = vmatprep.subr.mxu0 0.0
  %1343 = vmatpush2.msra.mxu0 0.0
  %1344 = vmatprep.subr.mxu0 0.0
  %1345 = vmatpush2.msra.mxu0 0.0
  %1346 = vmatprep.subr.mxu0 0.0
  %1347 = vmatpush2.msra.mxu0 0.0
  %1348 = vmatprep.subr.mxu0 0.0
  %1349 = vmatpush2.msra.mxu0 0.0
  %1350 = vmatprep.subr.mxu0 0.0
  %1351 = vmatpush2.msra.mxu0 0.0
  %1352 = vmatprep.subr.mxu0 0.0
  %1353 = vmatpush2.msra.mxu0 0.0
  %1354 = vmatprep.subr.mxu0 0.0
  %1355 = vmatpush2.msra.mxu0 0.0
  %1356 = vmatprep.subr.mxu0 0.0
  %1357 = vmatpush2.msra.mxu0 0.0
  %1358 = vmatprep.subr.mxu0 0.0
  %1359 = vmatpush2.msra.mxu0 0.0
  %1360 = vmatprep.mubr.f32.mxu0 0.0
  %1361 = vmatmul.mubr.f32.gmra.mxu0 %v1294
  %v1362 = vpop.f32.mrf.mxu0
  %v1363 = vadd.f32 %v34, %v1362
  %v1364 = vpop.f32.mrf.mxu0
  %1365 = vdwg.mxu0
  %v1366 = vadd.f32 %v173, %v1363
  %v1367 = vxor.u32 %v1366, 2147483648
  %v1368 = vmul.f32 %v1367, 1.442695
  %v1369 = vpow.pop %v1368
  %v1370 = vadd.f32 %v1369, 1.0
  %v1371 = vrcp.pop %v1370
  %v1372 = vmul.f32 1.0, %v1371
  %1374 = vrot.lane.b32.xlu0 %v1363, 112
  %v1375 = vpop.permute.xlu0 %1374
  %v1377 = vmul.f32 %v1372, %v1375
  %1379 = vrot.lane.b32.xlu0 %v1377, 16
  %v1380 = vpop.permute.xlu0 %1379
  %v1382 = vadd.f32 %v173, %v1380
  %v1383 = vtanh.pop %v1382
  %v1384 = vsub.f32 %v1210, %v1383
  %1386 = vrot.lane.b32.xlu0 %v1384, 120
  %v1387 = vpop.permute.xlu0 %1386
  %v1389 = vmul.f32 %v1372, %v1387
  %1391 = vrot.lane.b32.xlu0 %v1389, 8
  %v1392 = vpop.permute.xlu0 %1391
  %v1394 = vadd.f32 %v1383, %v1392
  %1396 = vrot.lane.b32.xlu0 %v187, 16
  %v1397 = vpop.permute.xlu0 %1396
  %v1399 = vmul.f32 %v1394, %v1397
  %1401 = vrot.lane.b32.xlu0 %v1399, 112
  %v1402 = vpop.permute.xlu0 %1401
  %v1403 = vsel %vm51, %v1402, 0
  %1405 = vmatprep.subr.mxu0 0.0
  %1406 = vmatpush1.msra.mxu0 0.0
  %1407 = vmatprep.subr.mxu0 0.0
  %1408 = vmatpush1.msra.mxu0 0.0
  %1409 = vmatprep.subr.mxu0 0.0
  %1410 = vmatpush1.msra.mxu0 0.0
  %1411 = vmatprep.subr.mxu0 0.0
  %1412 = vmatpush1.msra.mxu0 0.0
  %1413 = vmatprep.subr.mxu0 0.0
  %1414 = vmatpush1.msra.mxu0 0.0
  %1415 = vmatprep.subr.mxu0 0.0
  %1416 = vmatpush1.msra.mxu0 0.0
  %1417 = vmatprep.subr.mxu0 0.0
  %1418 = vmatpush1.msra.mxu0 0.0
  %1419 = vmatprep.subr.mxu0 0.0
  %1420 = vmatpush1.msra.mxu0 0.0
  %1421 = vmatprep.subr.mxu0 0.0
  %1422 = vmatpush1.msra.mxu0 0.0
  %1423 = vmatprep.subr.mxu0 0.0
  %1424 = vmatpush1.msra.mxu0 0.0
  %1425 = vmatprep.subr.mxu0 0.0
  %1426 = vmatpush1.msra.mxu0 0.0
  %1427 = vmatprep.subr.mxu0 0.0
  %1428 = vmatpush1.msra.mxu0 0.0
  %1429 = vmatprep.subr.mxu0 0.0
  %1430 = vmatpush1.msra.mxu0 0.0
  %1431 = vmatprep.subr.mxu0 0.0
  %1432 = vmatpush1.msra.mxu0 0.0
  %1433 = vmatprep.subr.mxu0 0.0
  %1434 = vmatpush1.msra.mxu0 0.0
  %1435 = vmatprep.subr.mxu0 0.0
  %1436 = vmatpush1.msra.mxu0 %v19
  %1437 = vmatprep.subr.mxu0 0.0
  %1438 = vmatpush2.msra.mxu0 0.0
  %1439 = vmatprep.subr.mxu0 0.0
  %1440 = vmatpush2.msra.mxu0 0.0
  %1441 = vmatprep.subr.mxu0 0.0
  %1442 = vmatpush2.msra.mxu0 0.0
  %1443 = vmatprep.subr.mxu0 0.0
  %1444 = vmatpush2.msra.mxu0 0.0
  %1445 = vmatprep.subr.mxu0 0.0
  %1446 = vmatpush2.msra.mxu0 0.0
  %1447 = vmatprep.subr.mxu0 0.0
  %1448 = vmatpush2.msra.mxu0 0.0
  %1449 = vmatprep.subr.mxu0 0.0
  %1450 = vmatpush2.msra.mxu0 0.0
  %1451 = vmatprep.subr.mxu0 0.0
  %1452 = vmatpush2.msra.mxu0 0.0
  %1453 = vmatprep.subr.mxu0 0.0
  %1454 = vmatpush2.msra.mxu0 0.0
  %1455 = vmatprep.subr.mxu0 0.0
  %1456 = vmatpush2.msra.mxu0 0.0
  %1457 = vmatprep.subr.mxu0 0.0
  %1458 = vmatpush2.msra.mxu0 0.0
  %1459 = vmatprep.subr.mxu0 0.0
  %1460 = vmatpush2.msra.mxu0 0.0
  %1461 = vmatprep.subr.mxu0 0.0
  %1462 = vmatpush2.msra.mxu0 0.0
  %1463 = vmatprep.subr.mxu0 0.0
  %1464 = vmatpush2.msra.mxu0 0.0
  %1465 = vmatprep.subr.mxu0 0.0
  %1466 = vmatpush2.msra.mxu0 0.0
  %1467 = vmatprep.subr.mxu0 0.0
  %1468 = vmatpush2.msra.mxu0 0.0
  %1469 = vmatprep.mubr.f32.mxu0 0.0
  %1470 = vmatmul.mubr.f32.gmra.mxu0 %v1403
  %v1471 = vpop.f32.mrf.mxu0
  %v1472 = vadd.f32 %v30, %v1471
  %v1473 = vpop.f32.mrf.mxu0
  %1474 = vdwg.mxu0
  %1476 = vrot.lane.b32.xlu0 %v1394, 112
  %v1477 = vpop.permute.xlu0 %1476
  %v1478 = vsel %vm51, %v1477, 0
  %1480 = vmatprep.subr.mxu0 0.0
  %1481 = vmatpush1.msra.mxu0 0.0
  %1482 = vmatprep.subr.mxu0 0.0
  %1483 = vmatpush1.msra.mxu0 0.0
  %1484 = vmatprep.subr.mxu0 0.0
  %1485 = vmatpush1.msra.mxu0 0.0
  %1486 = vmatprep.subr.mxu0 0.0
  %1487 = vmatpush1.msra.mxu0 0.0
  %1488 = vmatprep.subr.mxu0 0.0
  %1489 = vmatpush1.msra.mxu0 0.0
  %1490 = vmatprep.subr.mxu0 0.0
  %1491 = vmatpush1.msra.mxu0 0.0
  %1492 = vmatprep.subr.mxu0 0.0
  %1493 = vmatpush1.msra.mxu0 0.0
  %1494 = vmatprep.subr.mxu0 0.0
  %1495 = vmatpush1.msra.mxu0 0.0
  %1496 = vmatprep.subr.mxu0 0.0
  %1497 = vmatpush1.msra.mxu0 0.0
  %1498 = vmatprep.subr.mxu0 0.0
  %1499 = vmatpush1.msra.mxu0 0.0
  %1500 = vmatprep.subr.mxu0 0.0
  %1501 = vmatpush1.msra.mxu0 0.0
  %1502 = vmatprep.subr.mxu0 0.0
  %1503 = vmatpush1.msra.mxu0 0.0
  %1504 = vmatprep.subr.mxu0 0.0
  %1505 = vmatpush1.msra.mxu0 0.0
  %1506 = vmatprep.subr.mxu0 0.0
  %1507 = vmatpush1.msra.mxu0 0.0
  %1508 = vmatprep.subr.mxu0 0.0
  %1509 = vmatpush1.msra.mxu0 0.0
  %1510 = vmatprep.subr.mxu0 0.0
  %1511 = vmatpush1.msra.mxu0 %v18
  %1512 = vmatprep.subr.mxu0 0.0
  %1513 = vmatpush2.msra.mxu0 0.0
  %1514 = vmatprep.subr.mxu0 0.0
  %1515 = vmatpush2.msra.mxu0 0.0
  %1516 = vmatprep.subr.mxu0 0.0
  %1517 = vmatpush2.msra.mxu0 0.0
  %1518 = vmatprep.subr.mxu0 0.0
  %1519 = vmatpush2.msra.mxu0 0.0
  %1520 = vmatprep.subr.mxu0 0.0
  %1521 = vmatpush2.msra.mxu0 0.0
  %1522 = vmatprep.subr.mxu0 0.0
  %1523 = vmatpush2.msra.mxu0 0.0
  %1524 = vmatprep.subr.mxu0 0.0
  %1525 = vmatpush2.msra.mxu0 0.0
  %1526 = vmatprep.subr.mxu0 0.0
  %1527 = vmatpush2.msra.mxu0 0.0
  %1528 = vmatprep.subr.mxu0 0.0
  %1529 = vmatpush2.msra.mxu0 0.0
  %1530 = vmatprep.subr.mxu0 0.0
  %1531 = vmatpush2.msra.mxu0 0.0
  %1532 = vmatprep.subr.mxu0 0.0
  %1533 = vmatpush2.msra.mxu0 0.0
  %1534 = vmatprep.subr.mxu0 0.0
  %1535 = vmatpush2.msra.mxu0 0.0
  %1536 = vmatprep.subr.mxu0 0.0
  %1537 = vmatpush2.msra.mxu0 0.0
  %1538 = vmatprep.subr.mxu0 0.0
  %1539 = vmatpush2.msra.mxu0 0.0
  %1540 = vmatprep.subr.mxu0 0.0
  %1541 = vmatpush2.msra.mxu0 0.0
  %1542 = vmatprep.subr.mxu0 0.0
  %1543 = vmatpush2.msra.mxu0 0.0
  %1544 = vmatprep.mubr.f32.mxu0 0.0
  %1545 = vmatmul.mubr.f32.gmra.mxu0 %v1478
  %v1546 = vpop.f32.mrf.mxu0
  %v1547 = vadd.f32 %v34, %v1546
  %v1548 = vpop.f32.mrf.mxu0
  %1549 = vdwg.mxu0
  %v1550 = vadd.f32 %v178, %v1547
  %v1551 = vxor.u32 %v1550, 2147483648
  %v1552 = vmul.f32 %v1551, 1.442695
  %v1553 = vpow.pop %v1552
  %v1554 = vadd.f32 %v1553, 1.0
  %v1555 = vrcp.pop %v1554
  %v1556 = vmul.f32 1.0, %v1555
  %1558 = vrot.lane.b32.xlu0 %v1547, 112
  %v1559 = vpop.permute.xlu0 %1558
  %v1561 = vmul.f32 %v1556, %v1559
  %1563 = vrot.lane.b32.xlu0 %v1561, 16
  %v1564 = vpop.permute.xlu0 %1563
  %v1566 = vadd.f32 %v178, %v1564
  %v1567 = vtanh.pop %v1566
  %v1568 = vsub.f32 %v1394, %v1567
  %1570 = vrot.lane.b32.xlu0 %v1568, 120
  %v1571 = vpop.permute.xlu0 %1570
  %v1573 = vmul.f32 %v1556, %v1571
  %1575 = vrot.lane.b32.xlu0 %v1573, 8
  %v1576 = vpop.permute.xlu0 %1575
  %v1578 = vadd.f32 %v1567, %v1576
  %1580 = vrot.lane.b32.xlu0 %v188, 16
  %v1581 = vpop.permute.xlu0 %1580
  %v1583 = vmul.f32 %v1578, %v1581
  %1585 = vrot.lane.b32.xlu0 %v1583, 112
  %v1586 = vpop.permute.xlu0 %1585
  %v1587 = vsel %vm51, %v1586, 0
  %1589 = vmatprep.subr.mxu0 0.0
  %1590 = vmatpush1.msra.mxu0 0.0
  %1591 = vmatprep.subr.mxu0 0.0
  %1592 = vmatpush1.msra.mxu0 0.0
  %1593 = vmatprep.subr.mxu0 0.0
  %1594 = vmatpush1.msra.mxu0 0.0
  %1595 = vmatprep.subr.mxu0 0.0
  %1596 = vmatpush1.msra.mxu0 0.0
  %1597 = vmatprep.subr.mxu0 0.0
  %1598 = vmatpush1.msra.mxu0 0.0
  %1599 = vmatprep.subr.mxu0 0.0
  %1600 = vmatpush1.msra.mxu0 0.0
  %1601 = vmatprep.subr.mxu0 0.0
  %1602 = vmatpush1.msra.mxu0 0.0
  %1603 = vmatprep.subr.mxu0 0.0
  %1604 = vmatpush1.msra.mxu0 0.0
  %1605 = vmatprep.subr.mxu0 0.0
  %1606 = vmatpush1.msra.mxu0 0.0
  %1607 = vmatprep.subr.mxu0 0.0
  %1608 = vmatpush1.msra.mxu0 0.0
  %1609 = vmatprep.subr.mxu0 0.0
  %1610 = vmatpush1.msra.mxu0 0.0
  %1611 = vmatprep.subr.mxu0 0.0
  %1612 = vmatpush1.msra.mxu0 0.0
  %1613 = vmatprep.subr.mxu0 0.0
  %1614 = vmatpush1.msra.mxu0 0.0
  %1615 = vmatprep.subr.mxu0 0.0
  %1616 = vmatpush1.msra.mxu0 0.0
  %1617 = vmatprep.subr.mxu0 0.0
  %1618 = vmatpush1.msra.mxu0 0.0
  %1619 = vmatprep.subr.mxu0 0.0
  %1620 = vmatpush1.msra.mxu0 %v19
  %1621 = vmatprep.subr.mxu0 0.0
  %1622 = vmatpush2.msra.mxu0 0.0
  %1623 = vmatprep.subr.mxu0 0.0
  %1624 = vmatpush2.msra.mxu0 0.0
  %1625 = vmatprep.subr.mxu0 0.0
  %1626 = vmatpush2.msra.mxu0 0.0
  %1627 = vmatprep.subr.mxu0 0.0
  %1628 = vmatpush2.msra.mxu0 0.0
  %1629 = vmatprep.subr.mxu0 0.0
  %1630 = vmatpush2.msra.mxu0 0.0
  %1631 = vmatprep.subr.mxu0 0.0
  %1632 = vmatpush2.msra.mxu0 0.0
  %1633 = vmatprep.subr.mxu0 0.0
  %1634 = vmatpush2.msra.mxu0 0.0
  %1635 = vmatprep.subr.mxu0 0.0
  %1636 = vmatpush2.msra.mxu0 0.0
  %1637 = vmatprep.subr.mxu0 0.0
  %1638 = vmatpush2.msra.mxu0 0.0
  %1639 = vmatprep.subr.mxu0 0.0
  %1640 = vmatpush2.msra.mxu0 0.0
  %1641 = vmatprep.subr.mxu0 0.0
  %1642 = vmatpush2.msra.mxu0 0.0
  %1643 = vmatprep.subr.mxu0 0.0
  %1644 = vmatpush2.msra.mxu0 0.0
  %1645 = vmatprep.subr.mxu0 0.0
  %1646 = vmatpush2.msra.mxu0 0.0
  %1647 = vmatprep.subr.mxu0 0.0
  %1648 = vmatpush2.msra.mxu0 0.0
  %1649 = vmatprep.subr.mxu0 0.0
  %1650 = vmatpush2.msra.mxu0 0.0
  %1651 = vmatprep.subr.mxu0 0.0
  %1652 = vmatpush2.msra.mxu0 0.0
  %1653 = vmatprep.mubr.f32.mxu0 0.0
  %1654 = vmatmul.mubr.f32.gmra.mxu0 %v1587
  %v1655 = vpop.f32.mrf.mxu0
  %v1656 = vadd.f32 %v30, %v1655
  %v1657 = vpop.f32.mrf.mxu0
  %1658 = vdwg.mxu0
  %1660 = vrot.lane.b32.xlu0 %v1578, 112
  %v1661 = vpop.permute.xlu0 %1660
  %v1662 = vsel %vm51, %v1661, 0
  %1664 = vmatprep.subr.mxu0 0.0
  %1665 = vmatpush1.msra.mxu0 0.0
  %1666 = vmatprep.subr.mxu0 0.0
  %1667 = vmatpush1.msra.mxu0 0.0
  %1668 = vmatprep.subr.mxu0 0.0
  %1669 = vmatpush1.msra.mxu0 0.0
  %1670 = vmatprep.subr.mxu0 0.0
  %1671 = vmatpush1.msra.mxu0 0.0
  %1672 = vmatprep.subr.mxu0 0.0
  %1673 = vmatpush1.msra.mxu0 0.0
  %1674 = vmatprep.subr.mxu0 0.0
  %1675 = vmatpush1.msra.mxu0 0.0
  %1676 = vmatprep.subr.mxu0 0.0
  %1677 = vmatpush1.msra.mxu0 0.0
  %1678 = vmatprep.subr.mxu0 0.0
  %1679 = vmatpush1.msra.mxu0 0.0
  %1680 = vmatprep.subr.mxu0 0.0
  %1681 = vmatpush1.msra.mxu0 0.0
  %1682 = vmatprep.subr.mxu0 0.0
  %1683 = vmatpush1.msra.mxu0 0.0
  %1684 = vmatprep.subr.mxu0 0.0
  %1685 = vmatpush1.msra.mxu0 0.0
  %1686 = vmatprep.subr.mxu0 0.0
  %1687 = vmatpush1.msra.mxu0 0.0
  %1688 = vmatprep.subr.mxu0 0.0
  %1689 = vmatpush1.msra.mxu0 0.0
  %1690 = vmatprep.subr.mxu0 0.0
  %1691 = vmatpush1.msra.mxu0 0.0
  %1692 = vmatprep.subr.mxu0 0.0
  %1693 = vmatpush1.msra.mxu0 0.0
  %1694 = vmatprep.subr.mxu0 0.0
  %1695 = vmatpush1.msra.mxu0 %v20
  %1696 = vmatprep.subr.mxu0 0.0
  %1697 = vmatpush2.msra.mxu0 0.0
  %1698 = vmatprep.subr.mxu0 0.0
  %1699 = vmatpush2.msra.mxu0 0.0
  %1700 = vmatprep.subr.mxu0 0.0
  %1701 = vmatpush2.msra.mxu0 0.0
  %1702 = vmatprep.subr.mxu0 0.0
  %1703 = vmatpush2.msra.mxu0 0.0
  %1704 = vmatprep.subr.mxu0 0.0
  %1705 = vmatpush2.msra.mxu0 0.0
  %1706 = vmatprep.subr.mxu0 0.0
  %1707 = vmatpush2.msra.mxu0 0.0
  %1708 = vmatprep.subr.mxu0 0.0
  %1709 = vmatpush2.msra.mxu0 0.0
  %1710 = vmatprep.subr.mxu0 0.0
  %1711 = vmatpush2.msra.mxu0 0.0
  %1712 = vmatprep.subr.mxu0 0.0
  %1713 = vmatpush2.msra.mxu0 0.0
  %1714 = vmatprep.subr.mxu0 0.0
  %1715 = vmatpush2.msra.mxu0 0.0
  %1716 = vmatprep.subr.mxu0 0.0
  %1717 = vmatpush2.msra.mxu0 0.0
  %1718 = vmatprep.subr.mxu0 0.0
  %1719 = vmatpush2.msra.mxu0 0.0
  %1720 = vmatprep.subr.mxu0 0.0
  %1721 = vmatpush2.msra.mxu0 0.0
  %1722 = vmatprep.subr.mxu0 0.0
  %1723 = vmatpush2.msra.mxu0 0.0
  %1724 = vmatprep.subr.mxu0 0.0
  %1725 = vmatpush2.msra.mxu0 0.0
  %1726 = vmatprep.subr.mxu0 0.0
  %1727 = vmatpush2.msra.mxu0 0.0
  %1728 = vmatprep.mubr.f32.mxu0 0.0
  %1729 = vmatmul.mubr.f32.gmra.mxu0 %v1662
  %v1730 = vpop.f32.mrf.mxu0
  %v1731 = vadd.f32 %v38, %v1730
  %v1732 = vpop.f32.mrf.mxu0
  %1733 = vdwg.mxu0
  %v1734 = vadd.f32 %v368, %v1731
  %v1735 = vxor.u32 %v1734, 2147483648
  %v1736 = vmul.f32 %v1735, 1.442695
  %v1737 = vpow.pop %v1736
  %v1738 = vadd.f32 %v1737, 1.0
  %v1739 = vrcp.pop %v1738
  %v1740 = vmul.f32 1.0, %v1739
  %1742 = vrot.lane.b32.xlu0 %v1731, 112
  %v1743 = vpop.permute.xlu0 %1742
  %v1745 = vmul.f32 %v1740, %v1743
  %1747 = vrot.lane.b32.xlu0 %v1745, 16
  %v1748 = vpop.permute.xlu0 %1747
  %v1750 = vadd.f32 %v368, %v1748
  %v1751 = vtanh.pop %v1750
  %v1752 = vsub.f32 %v1578, %v1751
  %1754 = vrot.lane.b32.xlu0 %v1752, 120
  %v1755 = vpop.permute.xlu0 %1754
  %v1757 = vmul.f32 %v1740, %v1755
  %1759 = vrot.lane.b32.xlu0 %v1757, 8
  %v1760 = vpop.permute.xlu0 %1759
  %v1762 = vadd.f32 %v1751, %v1760
  %1764 = vrot.lane.b32.xlu0 %v1762, 112
  %v1765 = vpop.permute.xlu0 %1764
  %v1766 = vsel %vm51, %v1765, 0
  %1768 = vmatprep.subr.mxu0 0.0
  %1769 = vmatpush1.msra.mxu0 0.0
  %1770 = vmatprep.subr.mxu0 0.0
  %1771 = vmatpush1.msra.mxu0 0.0
  %1772 = vmatprep.subr.mxu0 0.0
  %1773 = vmatpush1.msra.mxu0 0.0
  %1774 = vmatprep.subr.mxu0 0.0
  %1775 = vmatpush1.msra.mxu0 0.0
  %1776 = vmatprep.subr.mxu0 0.0
  %1777 = vmatpush1.msra.mxu0 0.0
  %1778 = vmatprep.subr.mxu0 0.0
  %1779 = vmatpush1.msra.mxu0 0.0
  %1780 = vmatprep.subr.mxu0 0.0
  %1781 = vmatpush1.msra.mxu0 0.0
  %1782 = vmatprep.subr.mxu0 0.0
  %1783 = vmatpush1.msra.mxu0 0.0
  %1784 = vmatprep.subr.mxu0 0.0
  %1785 = vmatpush1.msra.mxu0 0.0
  %1786 = vmatprep.subr.mxu0 0.0
  %1787 = vmatpush1.msra.mxu0 0.0
  %1788 = vmatprep.subr.mxu0 0.0
  %1789 = vmatpush1.msra.mxu0 0.0
  %1790 = vmatprep.subr.mxu0 0.0
  %1791 = vmatpush1.msra.mxu0 0.0
  %1792 = vmatprep.subr.mxu0 0.0
  %1793 = vmatpush1.msra.mxu0 0.0
  %1794 = vmatprep.subr.mxu0 0.0
  %1795 = vmatpush1.msra.mxu0 0.0
  %1796 = vmatprep.subr.mxu0 0.0
  %1797 = vmatpush1.msra.mxu0 0.0
  %1798 = vmatprep.subr.mxu0 0.0
  %1799 = vmatpush1.msra.mxu0 %v20
  %1800 = vmatprep.subr.mxu0 0.0
  %1801 = vmatpush2.msra.mxu0 0.0
  %1802 = vmatprep.subr.mxu0 0.0
  %1803 = vmatpush2.msra.mxu0 0.0
  %1804 = vmatprep.subr.mxu0 0.0
  %1805 = vmatpush2.msra.mxu0 0.0
  %1806 = vmatprep.subr.mxu0 0.0
  %1807 = vmatpush2.msra.mxu0 0.0
  %1808 = vmatprep.subr.mxu0 0.0
  %1809 = vmatpush2.msra.mxu0 0.0
  %1810 = vmatprep.subr.mxu0 0.0
  %1811 = vmatpush2.msra.mxu0 0.0
  %1812 = vmatprep.subr.mxu0 0.0
  %1813 = vmatpush2.msra.mxu0 0.0
  %1814 = vmatprep.subr.mxu0 0.0
  %1815 = vmatpush2.msra.mxu0 0.0
  %1816 = vmatprep.subr.mxu0 0.0
  %1817 = vmatpush2.msra.mxu0 0.0
  %1818 = vmatprep.subr.mxu0 0.0
  %1819 = vmatpush2.msra.mxu0 0.0
  %1820 = vmatprep.subr.mxu0 0.0
  %1821 = vmatpush2.msra.mxu0 0.0
  %1822 = vmatprep.subr.mxu0 0.0
  %1823 = vmatpush2.msra.mxu0 0.0
  %1824 = vmatprep.subr.mxu0 0.0
  %1825 = vmatpush2.msra.mxu0 0.0
  %1826 = vmatprep.subr.mxu0 0.0
  %1827 = vmatpush2.msra.mxu0 0.0
  %1828 = vmatprep.subr.mxu0 0.0
  %1829 = vmatpush2.msra.mxu0 0.0
  %1830 = vmatprep.subr.mxu0 0.0
  %1831 = vmatpush2.msra.mxu0 0.0
  %1832 = vmatprep.mubr.f32.mxu0 0.0
  %1833 = vmatmul.mubr.f32.gmra.mxu0 %v1766
  %v1834 = vpop.f32.mrf.mxu0
  %v1835 = vadd.f32 %v38, %v1834
  %v1836 = vpop.f32.mrf.mxu0
  %1837 = vdwg.mxu0
  %v1838 = vadd.f32 %v552, %v1835
  %v1839 = vxor.u32 %v1838, 2147483648
  %v1840 = vmul.f32 %v1839, 1.442695
  %v1841 = vpow.pop %v1840
  %v1842 = vadd.f32 %v1841, 1.0
  %v1843 = vrcp.pop %v1842
  %v1844 = vmul.f32 1.0, %v1843
  %1846 = vrot.lane.b32.xlu0 %v1835, 112
  %v1847 = vpop.permute.xlu0 %1846
  %v1849 = vmul.f32 %v1844, %v1847
  %1851 = vrot.lane.b32.xlu0 %v1849, 16
  %v1852 = vpop.permute.xlu0 %1851
  %v1854 = vadd.f32 %v552, %v1852
  %v1855 = vtanh.pop %v1854
  %v1856 = vsub.f32 %v1762, %v1855
  %1858 = vrot.lane.b32.xlu0 %v1856, 120
  %v1859 = vpop.permute.xlu0 %1858
  %v1861 = vmul.f32 %v1844, %v1859
  %1863 = vrot.lane.b32.xlu0 %v1861, 8
  %v1864 = vpop.permute.xlu0 %1863
  %v1866 = vadd.f32 %v1855, %v1864
  %1868 = vrot.lane.b32.xlu0 %v1866, 112
  %v1869 = vpop.permute.xlu0 %1868
  %v1870 = vsel %vm51, %v1869, 0
  %1872 = vmatprep.subr.mxu0 0.0
  %1873 = vmatpush1.msra.mxu0 0.0
  %1874 = vmatprep.subr.mxu0 0.0
  %1875 = vmatpush1.msra.mxu0 0.0
  %1876 = vmatprep.subr.mxu0 0.0
  %1877 = vmatpush1.msra.mxu0 0.0
  %1878 = vmatprep.subr.mxu0 0.0
  %1879 = vmatpush1.msra.mxu0 0.0
  %1880 = vmatprep.subr.mxu0 0.0
  %1881 = vmatpush1.msra.mxu0 0.0
  %1882 = vmatprep.subr.mxu0 0.0
  %1883 = vmatpush1.msra.mxu0 0.0
  %1884 = vmatprep.subr.mxu0 0.0
  %1885 = vmatpush1.msra.mxu0 0.0
  %1886 = vmatprep.subr.mxu0 0.0
  %1887 = vmatpush1.msra.mxu0 0.0
  %1888 = vmatprep.subr.mxu0 0.0
  %1889 = vmatpush1.msra.mxu0 0.0
  %1890 = vmatprep.subr.mxu0 0.0
  %1891 = vmatpush1.msra.mxu0 0.0
  %1892 = vmatprep.subr.mxu0 0.0
  %1893 = vmatpush1.msra.mxu0 0.0
  %1894 = vmatprep.subr.mxu0 0.0
  %1895 = vmatpush1.msra.mxu0 0.0
  %1896 = vmatprep.subr.mxu0 0.0
  %1897 = vmatpush1.msra.mxu0 0.0
  %1898 = vmatprep.subr.mxu0 0.0
  %1899 = vmatpush1.msra.mxu0 0.0
  %1900 = vmatprep.subr.mxu0 0.0
  %1901 = vmatpush1.msra.mxu0 0.0
  %1902 = vmatprep.subr.mxu0 0.0
  %1903 = vmatpush1.msra.mxu0 %v20
  %1904 = vmatprep.subr.mxu0 0.0
  %1905 = vmatpush2.msra.mxu0 0.0
  %1906 = vmatprep.subr.mxu0 0.0
  %1907 = vmatpush2.msra.mxu0 0.0
  %1908 = vmatprep.subr.mxu0 0.0
  %1909 = vmatpush2.msra.mxu0 0.0
  %1910 = vmatprep.subr.mxu0 0.0
  %1911 = vmatpush2.msra.mxu0 0.0
  %1912 = vmatprep.subr.mxu0 0.0
  %1913 = vmatpush2.msra.mxu0 0.0
  %1914 = vmatprep.subr.mxu0 0.0
  %1915 = vmatpush2.msra.mxu0 0.0
  %1916 = vmatprep.subr.mxu0 0.0
  %1917 = vmatpush2.msra.mxu0 0.0
  %1918 = vmatprep.subr.mxu0 0.0
  %1919 = vmatpush2.msra.mxu0 0.0
  %1920 = vmatprep.subr.mxu0 0.0
  %1921 = vmatpush2.msra.mxu0 0.0
  %1922 = vmatprep.subr.mxu0 0.0
  %1923 = vmatpush2.msra.mxu0 0.0
  %1924 = vmatprep.subr.mxu0 0.0
  %1925 = vmatpush2.msra.mxu0 0.0
  %1926 = vmatprep.subr.mxu0 0.0
  %1927 = vmatpush2.msra.mxu0 0.0
  %1928 = vmatprep.subr.mxu0 0.0
  %1929 = vmatpush2.msra.mxu0 0.0
  %1930 = vmatprep.subr.mxu0 0.0
  %1931 = vmatpush2.msra.mxu0 0.0
  %1932 = vmatprep.subr.mxu0 0.0
  %1933 = vmatpush2.msra.mxu0 0.0
  %1934 = vmatprep.subr.mxu0 0.0
  %1935 = vmatpush2.msra.mxu0 0.0
  %1936 = vmatprep.mubr.f32.mxu0 0.0
  %1937 = vmatmul.mubr.f32.gmra.mxu0 %v1870
  %v1938 = vpop.f32.mrf.mxu0
  %v1939 = vadd.f32 %v38, %v1938
  %v1940 = vpop.f32.mrf.mxu0
  %1941 = vdwg.mxu0
  %v1942 = vadd.f32 %v736, %v1939
  %v1943 = vxor.u32 %v1942, 2147483648
  %v1944 = vmul.f32 %v1943, 1.442695
  %v1945 = vpow.pop %v1944
  %v1946 = vadd.f32 %v1945, 1.0
  %v1947 = vrcp.pop %v1946
  %v1948 = vmul.f32 1.0, %v1947
  %1950 = vrot.lane.b32.xlu0 %v1939, 112
  %v1951 = vpop.permute.xlu0 %1950
  %v1953 = vmul.f32 %v1948, %v1951
  %1955 = vrot.lane.b32.xlu0 %v1953, 16
  %v1956 = vpop.permute.xlu0 %1955
  %v1958 = vadd.f32 %v736, %v1956
  %v1959 = vtanh.pop %v1958
  %v1960 = vsub.f32 %v1866, %v1959
  %1962 = vrot.lane.b32.xlu0 %v1960, 120
  %v1963 = vpop.permute.xlu0 %1962
  %v1965 = vmul.f32 %v1948, %v1963
  %1967 = vrot.lane.b32.xlu0 %v1965, 8
  %v1968 = vpop.permute.xlu0 %1967
  %v1970 = vadd.f32 %v1959, %v1968
  %1972 = vrot.lane.b32.xlu0 %v1970, 112
  %v1973 = vpop.permute.xlu0 %1972
  %v1974 = vsel %vm51, %v1973, 0
  %1976 = vmatprep.subr.mxu0 0.0
  %1977 = vmatpush1.msra.mxu0 0.0
  %1978 = vmatprep.subr.mxu0 0.0
  %1979 = vmatpush1.msra.mxu0 0.0
  %1980 = vmatprep.subr.mxu0 0.0
  %1981 = vmatpush1.msra.mxu0 0.0
  %1982 = vmatprep.subr.mxu0 0.0
  %1983 = vmatpush1.msra.mxu0 0.0
  %1984 = vmatprep.subr.mxu0 0.0
  %1985 = vmatpush1.msra.mxu0 0.0
  %1986 = vmatprep.subr.mxu0 0.0
  %1987 = vmatpush1.msra.mxu0 0.0
  %1988 = vmatprep.subr.mxu0 0.0
  %1989 = vmatpush1.msra.mxu0 0.0
  %1990 = vmatprep.subr.mxu0 0.0
  %1991 = vmatpush1.msra.mxu0 0.0
  %1992 = vmatprep.subr.mxu0 0.0
  %1993 = vmatpush1.msra.mxu0 0.0
  %1994 = vmatprep.subr.mxu0 0.0
  %1995 = vmatpush1.msra.mxu0 0.0
  %1996 = vmatprep.subr.mxu0 0.0
  %1997 = vmatpush1.msra.mxu0 0.0
  %1998 = vmatprep.subr.mxu0 0.0
  %1999 = vmatpush1.msra.mxu0 0.0
  %2000 = vmatprep.subr.mxu0 0.0
  %2001 = vmatpush1.msra.mxu0 0.0
  %2002 = vmatprep.subr.mxu0 0.0
  %2003 = vmatpush1.msra.mxu0 0.0
  %2004 = vmatprep.subr.mxu0 0.0
  %2005 = vmatpush1.msra.mxu0 0.0
  %2006 = vmatprep.subr.mxu0 0.0
  %2007 = vmatpush1.msra.mxu0 %v20
  %2008 = vmatprep.subr.mxu0 0.0
  %2009 = vmatpush2.msra.mxu0 0.0
  %2010 = vmatprep.subr.mxu0 0.0
  %2011 = vmatpush2.msra.mxu0 0.0
  %2012 = vmatprep.subr.mxu0 0.0
  %2013 = vmatpush2.msra.mxu0 0.0
  %2014 = vmatprep.subr.mxu0 0.0
  %2015 = vmatpush2.msra.mxu0 0.0
  %2016 = vmatprep.subr.mxu0 0.0
  %2017 = vmatpush2.msra.mxu0 0.0
  %2018 = vmatprep.subr.mxu0 0.0
  %2019 = vmatpush2.msra.mxu0 0.0
  %2020 = vmatprep.subr.mxu0 0.0
  %2021 = vmatpush2.msra.mxu0 0.0
  %2022 = vmatprep.subr.mxu0 0.0
  %2023 = vmatpush2.msra.mxu0 0.0
  %2024 = vmatprep.subr.mxu0 0.0
  %2025 = vmatpush2.msra.mxu0 0.0
  %2026 = vmatprep.subr.mxu0 0.0
  %2027 = vmatpush2.msra.mxu0 0.0
  %2028 = vmatprep.subr.mxu0 0.0
  %2029 = vmatpush2.msra.mxu0 0.0
  %2030 = vmatprep.subr.mxu0 0.0
  %2031 = vmatpush2.msra.mxu0 0.0
  %2032 = vmatprep.subr.mxu0 0.0
  %2033 = vmatpush2.msra.mxu0 0.0
  %2034 = vmatprep.subr.mxu0 0.0
  %2035 = vmatpush2.msra.mxu0 0.0
  %2036 = vmatprep.subr.mxu0 0.0
  %2037 = vmatpush2.msra.mxu0 0.0
  %2038 = vmatprep.subr.mxu0 0.0
  %2039 = vmatpush2.msra.mxu0 0.0
  %2040 = vmatprep.mubr.f32.mxu0 0.0
  %2041 = vmatmul.mubr.f32.gmra.mxu0 %v1974
  %v2042 = vpop.f32.mrf.mxu0
  %v2043 = vadd.f32 %v38, %v2042
  %v2044 = vpop.f32.mrf.mxu0
  %2045 = vdwg.mxu0
  %v2046 = vadd.f32 %v920, %v2043
  %v2047 = vxor.u32 %v2046, 2147483648
  %v2048 = vmul.f32 %v2047, 1.442695
  %v2049 = vpow.pop %v2048
  %v2050 = vadd.f32 %v2049, 1.0
  %v2051 = vrcp.pop %v2050
  %v2052 = vmul.f32 1.0, %v2051
  %2054 = vrot.lane.b32.xlu0 %v2043, 112
  %v2055 = vpop.permute.xlu0 %2054
  %v2057 = vmul.f32 %v2052, %v2055
  %2059 = vrot.lane.b32.xlu0 %v2057, 16
  %v2060 = vpop.permute.xlu0 %2059
  %v2062 = vadd.f32 %v920, %v2060
  %v2063 = vtanh.pop %v2062
  %v2064 = vsub.f32 %v1970, %v2063
  %2066 = vrot.lane.b32.xlu0 %v2064, 120
  %v2067 = vpop.permute.xlu0 %2066
  %v2069 = vmul.f32 %v2052, %v2067
  %2071 = vrot.lane.b32.xlu0 %v2069, 8
  %v2072 = vpop.permute.xlu0 %2071
  %v2074 = vadd.f32 %v2063, %v2072
  %2076 = vrot.lane.b32.xlu0 %v2074, 112
  %v2077 = vpop.permute.xlu0 %2076
  %v2078 = vsel %vm51, %v2077, 0
  %2080 = vmatprep.subr.mxu0 0.0
  %2081 = vmatpush1.msra.mxu0 0.0
  %2082 = vmatprep.subr.mxu0 0.0
  %2083 = vmatpush1.msra.mxu0 0.0
  %2084 = vmatprep.subr.mxu0 0.0
  %2085 = vmatpush1.msra.mxu0 0.0
  %2086 = vmatprep.subr.mxu0 0.0
  %2087 = vmatpush1.msra.mxu0 0.0
  %2088 = vmatprep.subr.mxu0 0.0
  %2089 = vmatpush1.msra.mxu0 0.0
  %2090 = vmatprep.subr.mxu0 0.0
  %2091 = vmatpush1.msra.mxu0 0.0
  %2092 = vmatprep.subr.mxu0 0.0
  %2093 = vmatpush1.msra.mxu0 0.0
  %2094 = vmatprep.subr.mxu0 0.0
  %2095 = vmatpush1.msra.mxu0 0.0
  %2096 = vmatprep.subr.mxu0 0.0
  %2097 = vmatpush1.msra.mxu0 0.0
  %2098 = vmatprep.subr.mxu0 0.0
  %2099 = vmatpush1.msra.mxu0 0.0
  %2100 = vmatprep.subr.mxu0 0.0
  %2101 = vmatpush1.msra.mxu0 0.0
  %2102 = vmatprep.subr.mxu0 0.0
  %2103 = vmatpush1.msra.mxu0 0.0
  %2104 = vmatprep.subr.mxu0 0.0
  %2105 = vmatpush1.msra.mxu0 0.0
  %2106 = vmatprep.subr.mxu0 0.0
  %2107 = vmatpush1.msra.mxu0 0.0
  %2108 = vmatprep.subr.mxu0 0.0
  %2109 = vmatpush1.msra.mxu0 0.0
  %2110 = vmatprep.subr.mxu0 0.0
  %2111 = vmatpush1.msra.mxu0 %v20
  %2112 = vmatprep.subr.mxu0 0.0
  %2113 = vmatpush2.msra.mxu0 0.0
  %2114 = vmatprep.subr.mxu0 0.0
  %2115 = vmatpush2.msra.mxu0 0.0
  %2116 = vmatprep.subr.mxu0 0.0
  %2117 = vmatpush2.msra.mxu0 0.0
  %2118 = vmatprep.subr.mxu0 0.0
  %2119 = vmatpush2.msra.mxu0 0.0
  %2120 = vmatprep.subr.mxu0 0.0
  %2121 = vmatpush2.msra.mxu0 0.0
  %2122 = vmatprep.subr.mxu0 0.0
  %2123 = vmatpush2.msra.mxu0 0.0
  %2124 = vmatprep.subr.mxu0 0.0
  %2125 = vmatpush2.msra.mxu0 0.0
  %2126 = vmatprep.subr.mxu0 0.0
  %2127 = vmatpush2.msra.mxu0 0.0
  %2128 = vmatprep.subr.mxu0 0.0
  %2129 = vmatpush2.msra.mxu0 0.0
  %2130 = vmatprep.subr.mxu0 0.0
  %2131 = vmatpush2.msra.mxu0 0.0
  %2132 = vmatprep.subr.mxu0 0.0
  %2133 = vmatpush2.msra.mxu0 0.0
  %2134 = vmatprep.subr.mxu0 0.0
  %2135 = vmatpush2.msra.mxu0 0.0
  %2136 = vmatprep.subr.mxu0 0.0
  %2137 = vmatpush2.msra.mxu0 0.0
  %2138 = vmatprep.subr.mxu0 0.0
  %2139 = vmatpush2.msra.mxu0 0.0
  %2140 = vmatprep.subr.mxu0 0.0
  %2141 = vmatpush2.msra.mxu0 0.0
  %2142 = vmatprep.subr.mxu0 0.0
  %2143 = vmatpush2.msra.mxu0 0.0
  %2144 = vmatprep.mubr.f32.mxu0 0.0
  %2145 = vmatmul.mubr.f32.gmra.mxu0 %v2078
  %v2146 = vpop.f32.mrf.mxu0
  %v2147 = vadd.f32 %v38, %v2146
  %v2148 = vpop.f32.mrf.mxu0
  %2149 = vdwg.mxu0
  %v2150 = vadd.f32 %v1104, %v2147
  %v2151 = vxor.u32 %v2150, 2147483648
  %v2152 = vmul.f32 %v2151, 1.442695
  %v2153 = vpow.pop %v2152
  %v2154 = vadd.f32 %v2153, 1.0
  %v2155 = vrcp.pop %v2154
  %v2156 = vmul.f32 1.0, %v2155
  %2158 = vrot.lane.b32.xlu0 %v2147, 112
  %v2159 = vpop.permute.xlu0 %2158
  %v2161 = vmul.f32 %v2156, %v2159
  %2163 = vrot.lane.b32.xlu0 %v2161, 16
  %v2164 = vpop.permute.xlu0 %2163
  %v2166 = vadd.f32 %v1104, %v2164
  %v2167 = vtanh.pop %v2166
  %v2168 = vsub.f32 %v2074, %v2167
  %2170 = vrot.lane.b32.xlu0 %v2168, 120
  %v2171 = vpop.permute.xlu0 %2170
  %v2173 = vmul.f32 %v2156, %v2171
  %2175 = vrot.lane.b32.xlu0 %v2173, 8
  %v2176 = vpop.permute.xlu0 %2175
  %v2178 = vadd.f32 %v2167, %v2176
  %2180 = vrot.lane.b32.xlu0 %v2178, 112
  %v2181 = vpop.permute.xlu0 %2180
  %v2182 = vsel %vm51, %v2181, 0
  %2184 = vmatprep.subr.mxu0 0.0
  %2185 = vmatpush1.msra.mxu0 0.0
  %2186 = vmatprep.subr.mxu0 0.0
  %2187 = vmatpush1.msra.mxu0 0.0
  %2188 = vmatprep.subr.mxu0 0.0
  %2189 = vmatpush1.msra.mxu0 0.0
  %2190 = vmatprep.subr.mxu0 0.0
  %2191 = vmatpush1.msra.mxu0 0.0
  %2192 = vmatprep.subr.mxu0 0.0
  %2193 = vmatpush1.msra.mxu0 0.0
  %2194 = vmatprep.subr.mxu0 0.0
  %2195 = vmatpush1.msra.mxu0 0.0
  %2196 = vmatprep.subr.mxu0 0.0
  %2197 = vmatpush1.msra.mxu0 0.0
  %2198 = vmatprep.subr.mxu0 0.0
  %2199 = vmatpush1.msra.mxu0 0.0
  %2200 = vmatprep.subr.mxu0 0.0
  %2201 = vmatpush1.msra.mxu0 0.0
  %2202 = vmatprep.subr.mxu0 0.0
  %2203 = vmatpush1.msra.mxu0 0.0
  %2204 = vmatprep.subr.mxu0 0.0
  %2205 = vmatpush1.msra.mxu0 0.0
  %2206 = vmatprep.subr.mxu0 0.0
  %2207 = vmatpush1.msra.mxu0 0.0
  %2208 = vmatprep.subr.mxu0 0.0
  %2209 = vmatpush1.msra.mxu0 0.0
  %2210 = vmatprep.subr.mxu0 0.0
  %2211 = vmatpush1.msra.mxu0 0.0
  %2212 = vmatprep.subr.mxu0 0.0
  %2213 = vmatpush1.msra.mxu0 0.0
  %2214 = vmatprep.subr.mxu0 0.0
  %2215 = vmatpush1.msra.mxu0 %v20
  %2216 = vmatprep.subr.mxu0 0.0
  %2217 = vmatpush2.msra.mxu0 0.0
  %2218 = vmatprep.subr.mxu0 0.0
  %2219 = vmatpush2.msra.mxu0 0.0
  %2220 = vmatprep.subr.mxu0 0.0
  %2221 = vmatpush2.msra.mxu0 0.0
  %2222 = vmatprep.subr.mxu0 0.0
  %2223 = vmatpush2.msra.mxu0 0.0
  %2224 = vmatprep.subr.mxu0 0.0
  %2225 = vmatpush2.msra.mxu0 0.0
  %2226 = vmatprep.subr.mxu0 0.0
  %2227 = vmatpush2.msra.mxu0 0.0
  %2228 = vmatprep.subr.mxu0 0.0
  %2229 = vmatpush2.msra.mxu0 0.0
  %2230 = vmatprep.subr.mxu0 0.0
  %2231 = vmatpush2.msra.mxu0 0.0
  %2232 = vmatprep.subr.mxu0 0.0
  %2233 = vmatpush2.msra.mxu0 0.0
  %2234 = vmatprep.subr.mxu0 0.0
  %2235 = vmatpush2.msra.mxu0 0.0
  %2236 = vmatprep.subr.mxu0 0.0
  %2237 = vmatpush2.msra.mxu0 0.0
  %2238 = vmatprep.subr.mxu0 0.0
  %2239 = vmatpush2.msra.mxu0 0.0
  %2240 = vmatprep.subr.mxu0 0.0
  %2241 = vmatpush2.msra.mxu0 0.0
  %2242 = vmatprep.subr.mxu0 0.0
  %2243 = vmatpush2.msra.mxu0 0.0
  %2244 = vmatprep.subr.mxu0 0.0
  %2245 = vmatpush2.msra.mxu0 0.0
  %2246 = vmatprep.subr.mxu0 0.0
  %2247 = vmatpush2.msra.mxu0 0.0
  %2248 = vmatprep.mubr.f32.mxu0 0.0
  %2249 = vmatmul.mubr.f32.gmra.mxu0 %v2182
  %v2250 = vpop.f32.mrf.mxu0
  %v2251 = vadd.f32 %v38, %v2250
  %v2252 = vpop.f32.mrf.mxu0
  %2253 = vdwg.mxu0
  %v2254 = vadd.f32 %v1288, %v2251
  %v2255 = vxor.u32 %v2254, 2147483648
  %v2256 = vmul.f32 %v2255, 1.442695
  %v2257 = vpow.pop %v2256
  %v2258 = vadd.f32 %v2257, 1.0
  %v2259 = vrcp.pop %v2258
  %v2260 = vmul.f32 1.0, %v2259
  %2262 = vrot.lane.b32.xlu0 %v2251, 112
  %v2263 = vpop.permute.xlu0 %2262
  %v2265 = vmul.f32 %v2260, %v2263
  %2267 = vrot.lane.b32.xlu0 %v2265, 16
  %v2268 = vpop.permute.xlu0 %2267
  %v2270 = vadd.f32 %v1288, %v2268
  %v2271 = vtanh.pop %v2270
  %v2272 = vsub.f32 %v2178, %v2271
  %2274 = vrot.lane.b32.xlu0 %v2272, 120
  %v2275 = vpop.permute.xlu0 %2274
  %v2277 = vmul.f32 %v2260, %v2275
  %2279 = vrot.lane.b32.xlu0 %v2277, 8
  %v2280 = vpop.permute.xlu0 %2279
  %v2282 = vadd.f32 %v2271, %v2280
  %2284 = vrot.lane.b32.xlu0 %v2282, 112
  %v2285 = vpop.permute.xlu0 %2284
  %v2286 = vsel %vm51, %v2285, 0
  %2288 = vmatprep.subr.mxu0 0.0
  %2289 = vmatpush1.msra.mxu0 0.0
  %2290 = vmatprep.subr.mxu0 0.0
  %2291 = vmatpush1.msra.mxu0 0.0
  %2292 = vmatprep.subr.mxu0 0.0
  %2293 = vmatpush1.msra.mxu0 0.0
  %2294 = vmatprep.subr.mxu0 0.0
  %2295 = vmatpush1.msra.mxu0 0.0
  %2296 = vmatprep.subr.mxu0 0.0
  %2297 = vmatpush1.msra.mxu0 0.0
  %2298 = vmatprep.subr.mxu0 0.0
  %2299 = vmatpush1.msra.mxu0 0.0
  %2300 = vmatprep.subr.mxu0 0.0
  %2301 = vmatpush1.msra.mxu0 0.0
  %2302 = vmatprep.subr.mxu0 0.0
  %2303 = vmatpush1.msra.mxu0 0.0
  %2304 = vmatprep.subr.mxu0 0.0
  %2305 = vmatpush1.msra.mxu0 0.0
  %2306 = vmatprep.subr.mxu0 0.0
  %2307 = vmatpush1.msra.mxu0 0.0
  %2308 = vmatprep.subr.mxu0 0.0
  %2309 = vmatpush1.msra.mxu0 0.0
  %2310 = vmatprep.subr.mxu0 0.0
  %2311 = vmatpush1.msra.mxu0 0.0
  %2312 = vmatprep.subr.mxu0 0.0
  %2313 = vmatpush1.msra.mxu0 0.0
  %2314 = vmatprep.subr.mxu0 0.0
  %2315 = vmatpush1.msra.mxu0 0.0
  %2316 = vmatprep.subr.mxu0 0.0
  %2317 = vmatpush1.msra.mxu0 0.0
  %2318 = vmatprep.subr.mxu0 0.0
  %2319 = vmatpush1.msra.mxu0 %v20
  %2320 = vmatprep.subr.mxu0 0.0
  %2321 = vmatpush2.msra.mxu0 0.0
  %2322 = vmatprep.subr.mxu0 0.0
  %2323 = vmatpush2.msra.mxu0 0.0
  %2324 = vmatprep.subr.mxu0 0.0
  %2325 = vmatpush2.msra.mxu0 0.0
  %2326 = vmatprep.subr.mxu0 0.0
  %2327 = vmatpush2.msra.mxu0 0.0
  %2328 = vmatprep.subr.mxu0 0.0
  %2329 = vmatpush2.msra.mxu0 0.0
  %2330 = vmatprep.subr.mxu0 0.0
  %2331 = vmatpush2.msra.mxu0 0.0
  %2332 = vmatprep.subr.mxu0 0.0
  %2333 = vmatpush2.msra.mxu0 0.0
  %2334 = vmatprep.subr.mxu0 0.0
  %2335 = vmatpush2.msra.mxu0 0.0
  %2336 = vmatprep.subr.mxu0 0.0
  %2337 = vmatpush2.msra.mxu0 0.0
  %2338 = vmatprep.subr.mxu0 0.0
  %2339 = vmatpush2.msra.mxu0 0.0
  %2340 = vmatprep.subr.mxu0 0.0
  %2341 = vmatpush2.msra.mxu0 0.0
  %2342 = vmatprep.subr.mxu0 0.0
  %2343 = vmatpush2.msra.mxu0 0.0
  %2344 = vmatprep.subr.mxu0 0.0
  %2345 = vmatpush2.msra.mxu0 0.0
  %2346 = vmatprep.subr.mxu0 0.0
  %2347 = vmatpush2.msra.mxu0 0.0
  %2348 = vmatprep.subr.mxu0 0.0
  %2349 = vmatpush2.msra.mxu0 0.0
  %2350 = vmatprep.subr.mxu0 0.0
  %2351 = vmatpush2.msra.mxu0 0.0
  %2352 = vmatprep.mubr.f32.mxu0 0.0
  %2353 = vmatmul.mubr.f32.gmra.mxu0 %v2286
  %v2354 = vpop.f32.mrf.mxu0
  %v2355 = vadd.f32 %v38, %v2354
  %v2356 = vpop.f32.mrf.mxu0
  %2357 = vdwg.mxu0
  %v2358 = vadd.f32 %v1472, %v2355
  %v2359 = vxor.u32 %v2358, 2147483648
  %v2360 = vmul.f32 %v2359, 1.442695
  %v2361 = vpow.pop %v2360
  %v2362 = vadd.f32 %v2361, 1.0
  %v2363 = vrcp.pop %v2362
  %v2364 = vmul.f32 1.0, %v2363
  %2366 = vrot.lane.b32.xlu0 %v2355, 112
  %v2367 = vpop.permute.xlu0 %2366
  %v2369 = vmul.f32 %v2364, %v2367
  %2371 = vrot.lane.b32.xlu0 %v2369, 16
  %v2372 = vpop.permute.xlu0 %2371
  %v2374 = vadd.f32 %v1472, %v2372
  %v2375 = vtanh.pop %v2374
  %v2376 = vsub.f32 %v2282, %v2375
  %2378 = vrot.lane.b32.xlu0 %v2376, 120
  %v2379 = vpop.permute.xlu0 %2378
  %v2381 = vmul.f32 %v2364, %v2379
  %2383 = vrot.lane.b32.xlu0 %v2381, 8
  %v2384 = vpop.permute.xlu0 %2383
  %v2386 = vadd.f32 %v2375, %v2384
  %2388 = vrot.lane.b32.xlu0 %v2386, 112
  %v2389 = vpop.permute.xlu0 %2388
  %v2390 = vsel %vm51, %v2389, 0
  %2392 = vmatprep.subr.mxu0 0.0
  %2393 = vmatpush1.msra.mxu0 0.0
  %2394 = vmatprep.subr.mxu0 0.0
  %2395 = vmatpush1.msra.mxu0 0.0
  %2396 = vmatprep.subr.mxu0 0.0
  %2397 = vmatpush1.msra.mxu0 0.0
  %2398 = vmatprep.subr.mxu0 0.0
  %2399 = vmatpush1.msra.mxu0 0.0
  %2400 = vmatprep.subr.mxu0 0.0
  %2401 = vmatpush1.msra.mxu0 0.0
  %2402 = vmatprep.subr.mxu0 0.0
  %2403 = vmatpush1.msra.mxu0 0.0
  %2404 = vmatprep.subr.mxu0 0.0
  %2405 = vmatpush1.msra.mxu0 0.0
  %2406 = vmatprep.subr.mxu0 0.0
  %2407 = vmatpush1.msra.mxu0 0.0
  %2408 = vmatprep.subr.mxu0 0.0
  %2409 = vmatpush1.msra.mxu0 0.0
  %2410 = vmatprep.subr.mxu0 0.0
  %2411 = vmatpush1.msra.mxu0 0.0
  %2412 = vmatprep.subr.mxu0 0.0
  %2413 = vmatpush1.msra.mxu0 0.0
  %2414 = vmatprep.subr.mxu0 0.0
  %2415 = vmatpush1.msra.mxu0 0.0
  %2416 = vmatprep.subr.mxu0 0.0
  %2417 = vmatpush1.msra.mxu0 0.0
  %2418 = vmatprep.subr.mxu0 0.0
  %2419 = vmatpush1.msra.mxu0 0.0
  %2420 = vmatprep.subr.mxu0 0.0
  %2421 = vmatpush1.msra.mxu0 0.0
  %2422 = vmatprep.subr.mxu0 0.0
  %2423 = vmatpush1.msra.mxu0 %v20
  %2424 = vmatprep.subr.mxu0 0.0
  %2425 = vmatpush2.msra.mxu0 0.0
  %2426 = vmatprep.subr.mxu0 0.0
  %2427 = vmatpush2.msra.mxu0 0.0
  %2428 = vmatprep.subr.mxu0 0.0
  %2429 = vmatpush2.msra.mxu0 0.0
  %2430 = vmatprep.subr.mxu0 0.0
  %2431 = vmatpush2.msra.mxu0 0.0
  %2432 = vmatprep.subr.mxu0 0.0
  %2433 = vmatpush2.msra.mxu0 0.0
  %2434 = vmatprep.subr.mxu0 0.0
  %2435 = vmatpush2.msra.mxu0 0.0
  %2436 = vmatprep.subr.mxu0 0.0
  %2437 = vmatpush2.msra.mxu0 0.0
  %2438 = vmatprep.subr.mxu0 0.0
  %2439 = vmatpush2.msra.mxu0 0.0
  %2440 = vmatprep.subr.mxu0 0.0
  %2441 = vmatpush2.msra.mxu0 0.0
  %2442 = vmatprep.subr.mxu0 0.0
  %2443 = vmatpush2.msra.mxu0 0.0
  %2444 = vmatprep.subr.mxu0 0.0
  %2445 = vmatpush2.msra.mxu0 0.0
  %2446 = vmatprep.subr.mxu0 0.0
  %2447 = vmatpush2.msra.mxu0 0.0
  %2448 = vmatprep.subr.mxu0 0.0
  %2449 = vmatpush2.msra.mxu0 0.0
  %2450 = vmatprep.subr.mxu0 0.0
  %2451 = vmatpush2.msra.mxu0 0.0
  %2452 = vmatprep.subr.mxu0 0.0
  %2453 = vmatpush2.msra.mxu0 0.0
  %2454 = vmatprep.subr.mxu0 0.0
  %2455 = vmatpush2.msra.mxu0 0.0
  %2456 = vmatprep.mubr.f32.mxu0 0.0
  %2457 = vmatmul.mubr.f32.gmra.mxu0 %v2390
  %v2458 = vpop.f32.mrf.mxu0
  %v2459 = vadd.f32 %v38, %v2458
  %v2460 = vpop.f32.mrf.mxu0
  %2461 = vdwg.mxu0
  %v2462 = vadd.f32 %v1656, %v2459
  %v2463 = vxor.u32 %v2462, 2147483648
  %v2464 = vmul.f32 %v2463, 1.442695
  %v2465 = vpow.pop %v2464
  %v2466 = vadd.f32 %v2465, 1.0
  %v2467 = vrcp.pop %v2466
  %v2468 = vmul.f32 1.0, %v2467
  %2470 = vrot.lane.b32.xlu0 %v2459, 112
  %v2471 = vpop.permute.xlu0 %2470
  %v2473 = vmul.f32 %v2468, %v2471
  %2475 = vrot.lane.b32.xlu0 %v2473, 16
  %v2476 = vpop.permute.xlu0 %2475
  %v2478 = vadd.f32 %v1656, %v2476
  %v2479 = vtanh.pop %v2478
  %v2480 = vsub.f32 %v2386, %v2479
  %2482 = vrot.lane.b32.xlu0 %v2480, 120
  %v2483 = vpop.permute.xlu0 %2482
  %v2485 = vmul.f32 %v2468, %v2483
  %2487 = vrot.lane.b32.xlu0 %v2485, 8
  %v2488 = vpop.permute.xlu0 %2487
  %v2490 = vadd.f32 %v2479, %v2488
  %v2491 = vld [vmem:[%s3] sm:$0xff]
  %2493 = vrot.lane.b32.xlu0 %v2491, 16
  %v2494 = vpop.permute.xlu0 %2493
  %v2496 = vmul.f32 %v2490, %v2494
  %2498 = vrot.lane.b32.xlu0 %v2496, 112
  %v2499 = vpop.permute.xlu0 %2498
  %v2500 = vsel %vm51, %v2499, 0
  %2502 = vmatprep.subr.mxu0 0.0
  %2503 = vmatpush1.msra.mxu0 0.0
  %2504 = vmatprep.subr.mxu0 0.0
  %2505 = vmatpush1.msra.mxu0 0.0
  %2506 = vmatprep.subr.mxu0 0.0
  %2507 = vmatpush1.msra.mxu0 0.0
  %2508 = vmatprep.subr.mxu0 0.0
  %2509 = vmatpush1.msra.mxu0 0.0
  %2510 = vmatprep.subr.mxu0 0.0
  %2511 = vmatpush1.msra.mxu0 0.0
  %2512 = vmatprep.subr.mxu0 0.0
  %2513 = vmatpush1.msra.mxu0 0.0
  %2514 = vmatprep.subr.mxu0 0.0
  %2515 = vmatpush1.msra.mxu0 0.0
  %2516 = vmatprep.subr.mxu0 0.0
  %2517 = vmatpush1.msra.mxu0 0.0
  %2518 = vmatprep.subr.mxu0 0.0
  %2519 = vmatpush1.msra.mxu0 0.0
  %2520 = vmatprep.subr.mxu0 0.0
  %2521 = vmatpush1.msra.mxu0 0.0
  %2522 = vmatprep.subr.mxu0 0.0
  %2523 = vmatpush1.msra.mxu0 0.0
  %2524 = vmatprep.subr.mxu0 0.0
  %2525 = vmatpush1.msra.mxu0 0.0
  %2526 = vmatprep.subr.mxu0 0.0
  %2527 = vmatpush1.msra.mxu0 0.0
  %2528 = vmatprep.subr.mxu0 0.0
  %2529 = vmatpush1.msra.mxu0 0.0
  %2530 = vmatprep.subr.mxu0 0.0
  %2531 = vmatpush1.msra.mxu0 0.0
  %2532 = vmatprep.subr.mxu0 0.0
  %2533 = vmatpush1.msra.mxu0 %v21
  %2534 = vmatprep.subr.mxu0 0.0
  %2535 = vmatpush2.msra.mxu0 0.0
  %2536 = vmatprep.subr.mxu0 0.0
  %2537 = vmatpush2.msra.mxu0 0.0
  %2538 = vmatprep.subr.mxu0 0.0
  %2539 = vmatpush2.msra.mxu0 0.0
  %2540 = vmatprep.subr.mxu0 0.0
  %2541 = vmatpush2.msra.mxu0 0.0
  %2542 = vmatprep.subr.mxu0 0.0
  %2543 = vmatpush2.msra.mxu0 0.0
  %2544 = vmatprep.subr.mxu0 0.0
  %2545 = vmatpush2.msra.mxu0 0.0
  %2546 = vmatprep.subr.mxu0 0.0
  %2547 = vmatpush2.msra.mxu0 0.0
  %2548 = vmatprep.subr.mxu0 0.0
  %2549 = vmatpush2.msra.mxu0 0.0
  %2550 = vmatprep.subr.mxu0 0.0
  %2551 = vmatpush2.msra.mxu0 0.0
  %2552 = vmatprep.subr.mxu0 0.0
  %2553 = vmatpush2.msra.mxu0 0.0
  %2554 = vmatprep.subr.mxu0 0.0
  %2555 = vmatpush2.msra.mxu0 0.0
  %2556 = vmatprep.subr.mxu0 0.0
  %2557 = vmatpush2.msra.mxu0 0.0
  %2558 = vmatprep.subr.mxu0 0.0
  %2559 = vmatpush2.msra.mxu0 0.0
  %2560 = vmatprep.subr.mxu0 0.0
  %2561 = vmatpush2.msra.mxu0 0.0
  %2562 = vmatprep.subr.mxu0 0.0
  %2563 = vmatpush2.msra.mxu0 0.0
  %2564 = vmatprep.subr.mxu0 0.0
  %2565 = vmatpush2.msra.mxu0 0.0
  %2566 = vmatprep.mubr.f32.mxu0 0.0
  %2567 = vmatmul.mubr.f32.gmra.mxu0 %v2500
  %v2568 = vpop.f32.mrf.mxu0
  %v2569 = vadd.f32 %v42, %v2568
  %v2570 = vpop.f32.mrf.mxu0
  %2571 = vdwg.mxu0
  %vm2572 = vcmask 15360
  %2573 = vst.msk [vmem:[%s4] sm:$0xff] %vm2572, %v2569
  // Predicated region
  $region18: #{tpu_custom_call.1} parent=0 // pred_check
    _
  $region19: #{tpu_custom_call.1} parent=0 // pred_check_branch
    %2575 = sbr.rel (0) target = $region21
  $region20: #{tpu_custom_call.1} parent=0 // pred_region
    _
  $region21: #{tpu_custom_call.1} parent=0 // pred_fallthru
    _
  // Predicated region
  $region22: #{tpu_custom_call.1} parent=0 // pred_check
    _
  $region23: #{tpu_custom_call.1} parent=0 // pred_check_branch
    %2577 = sbr.rel (0) target = $region25
  $region24: #{tpu_custom_call.1} parent=0 // pred_region
    _
  $region25: #{tpu_custom_call.1} parent=0 // pred_fallthru
    _

</llo_original>
